<compile_context>
chip_gen: v7x
topology: tpu7x:2x2x1
jax: 0.10.0
libtpu: 0.0.40
codegen_flags: <defaults>
</compile_context>

<pallas_src>
import functools

import jax
import jax.numpy as jnp
from jax import lax
from jax.experimental import pallas as pl
from jax.experimental.pallas import tpu as pltpu

VMEM_SPEC = pl.BlockSpec(memory_space=pltpu.MemorySpace.VMEM)

# ---------------------------------------------------------------------------
# Padded layout constants (all column boundaries are multiples of 128 lanes).
# ---------------------------------------------------------------------------
HP = 128                 # padded hidden width (also padded latent/input lanes)
LANES = 128

COL_WIH_E = 0 * HP       # encoder W_ih  : width 3*HP, gates [r|z|n] at 0/128/256
COL_WHH_E = 3 * HP       # encoder W_hh  : width 3*HP
COL_WIH_D = 6 * HP       # decoder W_ih  : width 3*HP
COL_WHH_D = 9 * HP       # decoder W_hh  : width 3*HP
COL_MULV  = 12 * HP      # fused mu|logvar head : width 2*HP (mu block, lv block)
COL_FC    = 14 * HP      # decoder_fc    : width HP
COL_GRAPH = 15 * HP      # fused graph head (w_now|w_lag) : width HP
W1_COLS   = 16 * HP      # 2048


# ---------------------------------------------------------------------------
# Fused forward kernel (whole CausalGraphVAE.forward in one pallas_call).
# ---------------------------------------------------------------------------
def _vae_fwd_kernel(x_ref, w_ref, b_ref, eps_ref, out_ref, ix_sc, dec_sc, *,
                    B, Bp, T_enc, T_dec, latent_dim, n2):
    f32 = jnp.float32
    bf16 = jnp.bfloat16

    def gru_step(i_gates, h, whh, bhh_b):
        # fused recurrent matmul: (Bp, HP) @ (HP, 3*HP); gates lane-aligned.
        g = jnp.dot(h.astype(bf16), whh, preferred_element_type=f32) + bhh_b
        r = jax.nn.sigmoid(i_gates[:, 0:HP] + g[:, 0:HP])
        z = jax.nn.sigmoid(i_gates[:, HP:2 * HP] + g[:, HP:2 * HP])
        n = jnp.tanh(i_gates[:, 2 * HP:3 * HP] + r * g[:, 2 * HP:3 * HP])
        return (1.0 - z) * n + z * h

    # ----------------- encoder GRU -----------------
    # Hoisted input projection for all timesteps -> VMEM scratch (bounds
    # liveness; per-step slices are sublane-tile aligned since Bp % 8 == 0).
    ix_sc[...] = (
        jnp.dot(x_ref[...].astype(bf16), w_ref[:, COL_WIH_E:COL_WIH_E + 3 * HP],
                preferred_element_type=f32)
        + b_ref[:, COL_WIH_E:COL_WIH_E + 3 * HP])

    whh_e = w_ref[:, COL_WHH_E:COL_WHH_E + 3 * HP]
    bhh_e = jnp.broadcast_to(b_ref[:, COL_WHH_E:COL_WHH_E + 3 * HP], (Bp, 3 * HP))
    h = jnp.zeros((Bp, HP), f32)
    for t in range(T_enc):                                    # static unroll
        h = gru_step(ix_sc[t * Bp:(t + 1) * Bp, :], h, whh_e, bhh_e)

    # ----------------- fused mu / logvar head -----------------
    mulv = (jnp.dot(h.astype(bf16), w_ref[:, COL_MULV:COL_MULV + 2 * HP],
                    preferred_element_type=f32)
            + b_ref[:, COL_MULV:COL_MULV + 2 * HP])           # (Bp, 256)
    mu_blk = mulv[:, 0:HP]                                    # real lanes 0:L
    lv_blk = mulv[:, HP:2 * HP]
    std = jnp.exp(0.5 * lv_blk)

    eps1 = eps_ref[0:Bp, :]                                   # encode() draw
    eps2 = eps_ref[Bp:2 * Bp, :]                              # forward() draw
    z1 = mu_blk + eps1 * std
    z2 = mu_blk + eps2 * std

    # ----------------- causal-graph head -----------------
    # TODO(synk): TemporalCausalGraph's source is not provided in the
    # reference; this is a deterministic stand-in (sigmoid of a linear map of
    # the batch-mean latent, likelihood = -0.5*mean(z^2)).
    row_mask = (lax.broadcasted_iota(jnp.int32, (Bp, HP), 0) < B).astype(f32)
    z1m = z1 * row_mask
    z_mean = jnp.sum(z1m, axis=0, keepdims=True) * (1.0 / B)  # (1, HP)
    graph_row = jax.nn.sigmoid(
        b_ref[:, COL_GRAPH:COL_GRAPH + HP]
        + jnp.dot(z_mean.astype(bf16), w_ref[:, COL_GRAPH:COL_GRAPH + HP],
                  preferred_element_type=f32))                # (1, HP)
    lik = -0.5 * jnp.sum(z1m * z1m, keepdims=True) / (B * latent_dim)  # (1,1)
    lane = lax.broadcasted_iota(jnp.int32, (1, HP), 1)
    tail_row = jnp.where(lane == 2 * n2, lik, graph_row)      # adj_now|adj_lag|lik

    # Lane-dense, sublane-aligned stores into the single output slab (done
    # before the decoder loop to release these values).
    Rr = T_dec * Bp
    out_ref[Rr:Rr + Bp, :] = mu_blk
    out_ref[Rr + Bp:Rr + 2 * Bp, :] = lv_blk
    out_ref[Rr + 2 * Bp:Rr + 3 * Bp, :] = jnp.broadcast_to(tail_row, (Bp, HP))

    # ----------------- decoder GRU -----------------
    # Input is the SAME Z at every timestep -> project once, reuse each step.
    i_dec = (jnp.dot(z2.astype(bf16), w_ref[:, COL_WIH_D:COL_WIH_D + 3 * HP],
                     preferred_element_type=f32)
             + b_ref[:, COL_WIH_D:COL_WIH_D + 3 * HP])        # (Bp, 3*HP)
    whh_d = w_ref[:, COL_WHH_D:COL_WHH_D + 3 * HP]
    bhh_d = jnp.broadcast_to(b_ref[:, COL_WHH_D:COL_WHH_D + 3 * HP], (Bp, 3 * HP))
    hd = jnp.zeros((Bp, HP), f32)
    for t in range(T_dec):                                    # static unroll
        hd = gru_step(i_dec, hd, whh_d, bhh_d)
        dec_sc[t * Bp:(t + 1) * Bp, :] = hd                   # bounded liveness

    # ----------------- decoder_fc: one matmul, one full-width store --------
    recon = (jnp.dot(dec_sc[...].astype(bf16), w_ref[:, COL_FC:COL_FC + HP],
                     preferred_element_type=f32)
             + b_ref[:, COL_FC:COL_FC + HP])                  # (T_dec*Bp, HP)
    out_ref[0:Rr, :] = recon


# ---------------------------------------------------------------------------
# Parameter init (deterministic, synthetic — not a checkpoint load).
# Natural shapes: GRU weights fused (in, 3H), gate order [r|z|n].
# ---------------------------------------------------------------------------
def init_params(key, input_dim, hidden_dim, latent_dim, num_nodes):
    def nrm(k, shape, scale=0.1):
        return scale * jax.random.normal(k, shape, dtype=jnp.float32)

    ks = jax.random.split(key, 18)
    H3 = 3 * hidden_dim
    nn2 = num_nodes * num_nodes
    p = {}
    p["enc_gru"] = (nrm(ks[0], (input_dim, H3)), nrm(ks[1], (hidden_dim, H3)),
                    nrm(ks[2], (1, H3)), nrm(ks[3], (1, H3)))
    p["mu_w"] = nrm(ks[4], (hidden_dim, latent_dim))
    p["mu_b"] = nrm(ks[5], (1, latent_dim))
    p["lv_w"] = nrm(ks[6], (hidden_dim, latent_dim))
    p["lv_b"] = nrm(ks[7], (1, latent_dim))
    p["dec_gru"] = (nrm(ks[8], (latent_dim, H3)), nrm(ks[9], (hidden_dim, H3)),
                    nrm(ks[10], (1, H3)), nrm(ks[11], (1, H3)))
    p["fc_w"] = nrm(ks[12], (hidden_dim, input_dim))
    p["fc_b"] = nrm(ks[13], (1, input_dim))
    p["a_now"] = nrm(ks[14], (1, nn2))
    p["a_lag"] = nrm(ks[15], (1, nn2))
    p["w_now"] = nrm(ks[16], (latent_dim, nn2))
    p["w_lag"] = nrm(ks[17], (latent_dim, nn2))
    return p


# ---------------------------------------------------------------------------
# Pack all weights/biases into one (128, 2048) bf16 slab + one (1, 2048) f32
# bias slab with 128-lane-aligned column boundaries and gate offsets 0/128/256.
# ---------------------------------------------------------------------------
def pack_params(p, input_dim, hidden_dim, latent_dim, num_nodes):
    H, L, Din = hidden_dim, latent_dim, input_dim
    n2 = num_nodes * num_nodes
    assert H <= HP and L <= HP and Din <= LANES and 2 * n2 + 1 <= LANES

    W = jnp.zeros((HP, W1_COLS), jnp.float32)
    Bv = jnp.zeros((1, W1_COLS), jnp.float32)

    def put_gate_mat(W, col0, w_fused, in_dim):
        for g in range(3):
            W = W.at[:in_dim, col0 + g * HP:col0 + g * HP + H].set(
                w_fused[:, g * H:(g + 1) * H])
        return W

    def put_gate_vec(Bv, col0, b_fused):
        for g in range(3):
            Bv = Bv.at[:, col0 + g * HP:col0 + g * HP + H].set(
                b_fused[:, g * H:(g + 1) * H])
        return Bv

    wih_e, whh_e, bih_e, bhh_e = p["enc_gru"]
    wih_d, whh_d, bih_d, bhh_d = p["dec_gru"]
    W = put_gate_mat(W, COL_WIH_E, wih_e, Din)
    W = put_gate_mat(W, COL_WHH_E, whh_e, H)
    W = put_gate_mat(W, COL_WIH_D, wih_d, L)
    W = put_gate_mat(W, COL_WHH_D, whh_d, H)
    Bv = put_gate_vec(Bv, COL_WIH_E, bih_e)
    Bv = put_gate_vec(Bv, COL_WHH_E, bhh_e)
    Bv = put_gate_vec(Bv, COL_WIH_D, bih_d)
    Bv = put_gate_vec(Bv, COL_WHH_D, bhh_d)
    # fused mu | logvar head (mu block at +0, logvar block at +128)
    W = W.at[:H, COL_MULV:COL_MULV + L].set(p["mu_w"])
    W = W.at[:H, COL_MULV + HP:COL_MULV + HP + L].set(p["lv_w"])
    Bv = Bv.at[:, COL_MULV:COL_MULV + L].set(p["mu_b"])
    Bv = Bv.at[:, COL_MULV + HP:COL_MULV + HP + L].set(p["lv_b"])
    # decoder_fc
    W = W.at[:H, COL_FC:COL_FC + Din].set(p["fc_w"])
    Bv = Bv.at[:, COL_FC:COL_FC + Din].set(p["fc_b"])
    # fused causal-graph head (adj_now cols 0:n2, adj_lag cols n2:2*n2)
    W = W.at[:L, COL_GRAPH:COL_GRAPH + n2].set(p["w_now"])
    W = W.at[:L, COL_GRAPH + n2:COL_GRAPH + 2 * n2].set(p["w_lag"])
    Bv = Bv.at[:, COL_GRAPH:COL_GRAPH + n2].set(p["a_now"])
    Bv = Bv.at[:, COL_GRAPH + n2:COL_GRAPH + 2 * n2].set(p["a_lag"])
    return W.astype(jnp.bfloat16), Bv


# ---------------------------------------------------------------------------
# Forward pass (mirrors CausalGraphVAE.forward) — one fused pallas_call.
# ---------------------------------------------------------------------------
def causal_graph_vae_forward(w_slab, b_slab, X, time_context, key, *,
                             input_dim, hidden_dim, latent_dim, num_nodes,
                             time_steps):
    del time_context  # TODO(synk): unused by the stand-in causal-graph head.
    X = X.astype(jnp.float32)
    B, T, Din = X.shape
    assert Din == input_dim
    Bp = ((B + 7) // 8) * 8
    L = latent_dim
    n2 = num_nodes * num_nodes
    T_dec = time_steps

    # Time-major, batch- and lane-padded input slab (single host-side copy).
    xp = jnp.zeros((T, Bp, LANES), jnp.float32)
    xp = xp.at[:, :B, :Din].set(jnp.transpose(X, (1, 0, 2)))
    x_flat = xp.reshape(T * Bp, LANES)

    # Both reparameterization draws (encode() + forward()) in one slab.
    k1, k2 = jax.random.split(key)
    eps = jnp.zeros((2 * Bp, LANES), jnp.float32)
    eps = eps.at[0:B, :L].set(jax.random.normal(k1, (B, L), jnp.float32))
    eps = eps.at[Bp:Bp + B, :L].set(jax.random.normal(k2, (B, L), jnp.float32))

    out_rows = T_dec * Bp + 3 * Bp
    kernel = functools.partial(
        _vae_fwd_kernel, B=B, Bp=Bp, T_enc=T, T_dec=T_dec,
        latent_dim=L, n2=n2)

    slab = pl.pallas_call(
        kernel,
        out_shape=jax.ShapeDtypeStruct((out_rows, LANES), jnp.float32),
        in_specs=[VMEM_SPEC] * 4,
        out_specs=VMEM_SPEC,
        scratch_shapes=[
            pltpu.VMEM((T * Bp, 3 * HP), jnp.float32),     # hoisted enc proj
            pltpu.VMEM((T_dec * Bp, HP), jnp.float32),     # decoder hiddens
        ],
    )(x_flat, w_slab, b_slab, eps)

    # Unpack the lane-dense output slab on the host.
    Rr = T_dec * Bp
    recon_X = (slab[0:Rr, 0:Din].reshape(T_dec, Bp, Din)[:, :B]
               .transpose(1, 0, 2))                               # (B, T, D)
    mu = slab[Rr:Rr + Bp, 0:L][:B]
    logvar = slab[Rr + Bp:Rr + 2 * Bp, 0:L][:B]
    tail = slab[Rr + 2 * Bp]
    adj_now = tail[0:n2].reshape(num_nodes, num_nodes)
    adj_lag = tail[n2:2 * n2].reshape(num_nodes, num_nodes)
    likelihood = tail[2 * n2]
    return recon_X, mu, logvar, adj_now, adj_lag, likelihood


# ---------------------------------------------------------------------------
if __name__ == "__main__":
    # Small shapes consistent with the module.
    B, T = 2, 8
    input_dim = num_nodes = 4
    hidden_dim = 32
    latent_dim = 8
    time_steps = T

    key = jax.random.PRNGKey(0)
    k_params, k_x, k_t, k_fwd = jax.random.split(key, 4)

    params = init_params(k_params, input_dim, hidden_dim, latent_dim, num_nodes)
    w_slab, b_slab = pack_params(params, input_dim, hidden_dim, latent_dim,
                                 num_nodes)

    X = jax.random.normal(k_x, (B, T, input_dim), dtype=jnp.float32)
    time_context = jax.random.normal(k_t, (B, T, 1), dtype=jnp.float32)

    outs = causal_graph_vae_forward(
        w_slab, b_slab, X, time_context, k_fwd,
        input_dim=input_dim, hidden_dim=hidden_dim, latent_dim=latent_dim,
        num_nodes=num_nodes, time_steps=time_steps)

    outs = jax.block_until_ready(outs)
    recon_X, mu, logvar, adj_now, adj_lag, likelihood = outs
    assert recon_X.shape == (B, T, input_dim)
    assert mu.shape == (B, latent_dim) and logvar.shape == (B, latent_dim)
    assert adj_now.shape == (num_nodes, num_nodes)
    assert adj_lag.shape == (num_nodes, num_nodes)
    assert likelihood.shape == ()
    assert all(bool(jnp.all(jnp.isfinite(o))) for o in
               (recon_X, mu, logvar, adj_now, adj_lag, likelihood))
    print("KERNEL_OK")
</pallas_src>

<mosaic_0001>
module attributes {stable_mosaic.version = 11 : i64} {
  func.func @_vae_fwd_kernel(%arg0: memref<64x128xf32, #tpu.memory_space<vmem>>, %arg1: memref<128x2048xbf16, #tpu.memory_space<vmem>>, %arg2: memref<1x2048xf32, #tpu.memory_space<vmem>>, %arg3: memref<16x128xf32, #tpu.memory_space<vmem>>, %arg4: memref<88x128xf32, #tpu.memory_space<vmem>>, %arg5: memref<64x384xf32, #tpu.memory_space<vmem>>, %arg6: memref<64x128xf32, #tpu.memory_space<vmem>>) attributes {dimension_semantics = [], scalar_prefetch = 0 : i64, scratch_operands = 2 : i64, tpu.core_type = #tpu.core_type<tc>} {
    %c0 = arith.constant 0 : index
    %c0_0 = arith.constant 0 : index
    %0 = vector.load %arg0[%c0, %c0_0] : memref<64x128xf32, #tpu.memory_space<vmem>>, vector<64x128xf32>
    %1 = arith.truncf %0 : vector<64x128xf32> to vector<64x128xbf16>
    %c0_1 = arith.constant 0 : index
    %c0_2 = arith.constant 0 : index
    %2 = vector.load %arg1[%c0_1, %c0_2] : memref<128x2048xbf16, #tpu.memory_space<vmem>>, vector<128x384xbf16>
    %cst = arith.constant dense<0.000000e+00> : vector<64x384xf32>
    %3 = tpu.matmul %1, %2, %cst {dimension_numbers = #tpu.dot_dimension_numbers<[1], [0], [0], [1], [0, 0, 1, 1], [], []>} : vector<64x128xbf16>, vector<128x384xbf16>, vector<64x384xf32> -> vector<64x384xf32>
    %c0_3 = arith.constant 0 : index
    %c0_4 = arith.constant 0 : index
    %4 = vector.load %arg2[%c0_3, %c0_4] : memref<1x2048xf32, #tpu.memory_space<vmem>>, vector<1x384xf32>
    %5 = vector.broadcast %4 : vector<1x384xf32> to vector<64x384xf32>
    %6 = arith.addf %3, %5 : vector<64x384xf32>
    %c0_5 = arith.constant 0 : index
    %c0_6 = arith.constant 0 : index
    %7 = vector.load %arg5[%c0_5, %c0_6] : memref<64x384xf32, #tpu.memory_space<vmem>>, vector<64x384xf32>
    tpu.vector_store %arg5[%c0_5, %c0_6], %6 {strides = array<i32>} : memref<64x384xf32, #tpu.memory_space<vmem>>, vector<64x384xf32>,
    %c0_7 = arith.constant 0 : index
    %c384 = arith.constant 384 : index
    %8 = vector.load %arg1[%c0_7, %c384] : memref<128x2048xbf16, #tpu.memory_space<vmem>>, vector<128x384xbf16>
    %c0_8 = arith.constant 0 : index
    %c384_9 = arith.constant 384 : index
    %9 = vector.load %arg2[%c0_8, %c384_9] : memref<1x2048xf32, #tpu.memory_space<vmem>>, vector<1x384xf32>
    %10 = vector.shape_cast %9 : vector<1x384xf32> to vector<1x384xf32>
    %11 = vector.broadcast %10 : vector<1x384xf32> to vector<8x384xf32>
    %cst_10 = arith.constant 0.000000e+00 : f32
    %12 = vector.broadcast %cst_10 : f32 to vector<8x128xf32>
    %c0_11 = arith.constant 0 : index
    %c0_12 = arith.constant 0 : index
    %13 = vector.load %arg5[%c0_11, %c0_12] : memref<64x384xf32, #tpu.memory_space<vmem>>, vector<8x384xf32>
    %14 = arith.truncf %12 : vector<8x128xf32> to vector<8x128xbf16>
    %cst_13 = arith.constant dense<0.000000e+00> : vector<8x384xf32>
    %15 = tpu.matmul %14, %8, %cst_13 {dimension_numbers = #tpu.dot_dimension_numbers<[1], [0], [0], [1], [0, 0, 1, 1], [], []>} : vector<8x128xbf16>, vector<128x384xbf16>, vector<8x384xf32> -> vector<8x384xf32>
    %16 = arith.addf %15, %11 : vector<8x384xf32>
    %17 = vector.extract_strided_slice %13 {offsets = [0, 0], sizes = [8, 128], strides = [1, 1]} : vector<8x384xf32> to vector<8x128xf32>
    %18 = vector.extract_strided_slice %16 {offsets = [0, 0], sizes = [8, 128], strides = [1, 1]} : vector<8x384xf32> to vector<8x128xf32>
    %19 = arith.addf %17, %18 : vector<8x128xf32>
    %20 = arith.negf %19 : vector<8x128xf32>
    %21 = math.exp %20 : vector<8x128xf32>
    %cst_14 = arith.constant 1.000000e+00 : f32
    %22 = vector.broadcast %cst_14 : f32 to vector<8x128xf32>
    %23 = arith.addf %22, %21 : vector<8x128xf32>
    %24 = arith.divf %22, %23 : vector<8x128xf32>
    %25 = vector.extract_strided_slice %13 {offsets = [0, 128], sizes = [8, 128], strides = [1, 1]} : vector<8x384xf32> to vector<8x128xf32>
    %26 = vector.extract_strided_slice %16 {offsets = [0, 128], sizes = [8, 128], strides = [1, 1]} : vector<8x384xf32> to vector<8x128xf32>
    %27 = arith.addf %25, %26 : vector<8x128xf32>
    %28 = arith.negf %27 : vector<8x128xf32>
    %29 = math.exp %28 : vector<8x128xf32>
    %cst_15 = arith.constant 1.000000e+00 : f32
    %30 = vector.broadcast %cst_15 : f32 to vector<8x128xf32>
    %31 = arith.addf %30, %29 : vector<8x128xf32>
    %32 = arith.divf %30, %31 : vector<8x128xf32>
    %33 = vector.extract_strided_slice %13 {offsets = [0, 256], sizes = [8, 128], strides = [1, 1]} : vector<8x384xf32> to vector<8x128xf32>
    %34 = vector.extract_strided_slice %16 {offsets = [0, 256], sizes = [8, 128], strides = [1, 1]} : vector<8x384xf32> to vector<8x128xf32>
    %35 = arith.mulf %24, %34 : vector<8x128xf32>
    %36 = arith.addf %33, %35 : vector<8x128xf32>
    %37 = math.tanh %36 : vector<8x128xf32>
    %cst_16 = arith.constant 1.000000e+00 : f32
    %38 = vector.broadcast %cst_16 : f32 to vector<8x128xf32>
    %39 = arith.subf %38, %32 : vector<8x128xf32>
    %40 = arith.mulf %39, %37 : vector<8x128xf32>
    %41 = arith.mulf %32, %12 : vector<8x128xf32>
    %42 = arith.addf %40, %41 : vector<8x128xf32>
    %c8 = arith.constant 8 : index
    %c0_17 = arith.constant 0 : index
    %43 = vector.load %arg5[%c8, %c0_17] : memref<64x384xf32, #tpu.memory_space<vmem>>, vector<8x384xf32>
    %44 = arith.truncf %42 : vector<8x128xf32> to vector<8x128xbf16>
    %cst_18 = arith.constant dense<0.000000e+00> : vector<8x384xf32>
    %45 = tpu.matmul %44, %8, %cst_18 {dimension_numbers = #tpu.dot_dimension_numbers<[1], [0], [0], [1], [0, 0, 1, 1], [], []>} : vector<8x128xbf16>, vector<128x384xbf16>, vector<8x384xf32> -> vector<8x384xf32>
    %46 = arith.addf %45, %11 : vector<8x384xf32>
    %47 = vector.extract_strided_slice %43 {offsets = [0, 0], sizes = [8, 128], strides = [1, 1]} : vector<8x384xf32> to vector<8x128xf32>
    %48 = vector.extract_strided_slice %46 {offsets = [0, 0], sizes = [8, 128], strides = [1, 1]} : vector<8x384xf32> to vector<8x128xf32>
    %49 = arith.addf %47, %48 : vector<8x128xf32>
    %50 = arith.negf %49 : vector<8x128xf32>
    %51 = math.exp %50 : vector<8x128xf32>
    %cst_19 = arith.constant 1.000000e+00 : f32
    %52 = vector.broadcast %cst_19 : f32 to vector<8x128xf32>
    %53 = arith.addf %52, %51 : vector<8x128xf32>
    %54 = arith.divf %52, %53 : vector<8x128xf32>
    %55 = vector.extract_strided_slice %43 {offsets = [0, 128], sizes = [8, 128], strides = [1, 1]} : vector<8x384xf32> to vector<8x128xf32>
    %56 = vector.extract_strided_slice %46 {offsets = [0, 128], sizes = [8, 128], strides = [1, 1]} : vector<8x384xf32> to vector<8x128xf32>
    %57 = arith.addf %55, %56 : vector<8x128xf32>
    %58 = arith.negf %57 : vector<8x128xf32>
    %59 = math.exp %58 : vector<8x128xf32>
    %cst_20 = arith.constant 1.000000e+00 : f32
    %60 = vector.broadcast %cst_20 : f32 to vector<8x128xf32>
    %61 = arith.addf %60, %59 : vector<8x128xf32>
    %62 = arith.divf %60, %61 : vector<8x128xf32>
    %63 = vector.extract_strided_slice %43 {offsets = [0, 256], sizes = [8, 128], strides = [1, 1]} : vector<8x384xf32> to vector<8x128xf32>
    %64 = vector.extract_strided_slice %46 {offsets = [0, 256], sizes = [8, 128], strides = [1, 1]} : vector<8x384xf32> to vector<8x128xf32>
    %65 = arith.mulf %54, %64 : vector<8x128xf32>
    %66 = arith.addf %63, %65 : vector<8x128xf32>
    %67 = math.tanh %66 : vector<8x128xf32>
    %cst_21 = arith.constant 1.000000e+00 : f32
    %68 = vector.broadcast %cst_21 : f32 to vector<8x128xf32>
    %69 = arith.subf %68, %62 : vector<8x128xf32>
    %70 = arith.mulf %69, %67 : vector<8x128xf32>
    %71 = arith.mulf %62, %42 : vector<8x128xf32>
    %72 = arith.addf %70, %71 : vector<8x128xf32>
    %c16 = arith.constant 16 : index
    %c0_22 = arith.constant 0 : index
    %73 = vector.load %arg5[%c16, %c0_22] : memref<64x384xf32, #tpu.memory_space<vmem>>, vector<8x384xf32>
    %74 = arith.truncf %72 : vector<8x128xf32> to vector<8x128xbf16>
    %cst_23 = arith.constant dense<0.000000e+00> : vector<8x384xf32>
    %75 = tpu.matmul %74, %8, %cst_23 {dimension_numbers = #tpu.dot_dimension_numbers<[1], [0], [0], [1], [0, 0, 1, 1], [], []>} : vector<8x128xbf16>, vector<128x384xbf16>, vector<8x384xf32> -> vector<8x384xf32>
    %76 = arith.addf %75, %11 : vector<8x384xf32>
    %77 = vector.extract_strided_slice %73 {offsets = [0, 0], sizes = [8, 128], strides = [1, 1]} : vector<8x384xf32> to vector<8x128xf32>
    %78 = vector.extract_strided_slice %76 {offsets = [0, 0], sizes = [8, 128], strides = [1, 1]} : vector<8x384xf32> to vector<8x128xf32>
    %79 = arith.addf %77, %78 : vector<8x128xf32>
    %80 = arith.negf %79 : vector<8x128xf32>
    %81 = math.exp %80 : vector<8x128xf32>
    %cst_24 = arith.constant 1.000000e+00 : f32
    %82 = vector.broadcast %cst_24 : f32 to vector<8x128xf32>
    %83 = arith.addf %82, %81 : vector<8x128xf32>
    %84 = arith.divf %82, %83 : vector<8x128xf32>
    %85 = vector.extract_strided_slice %73 {offsets = [0, 128], sizes = [8, 128], strides = [1, 1]} : vector<8x384xf32> to vector<8x128xf32>
    %86 = vector.extract_strided_slice %76 {offsets = [0, 128], sizes = [8, 128], strides = [1, 1]} : vector<8x384xf32> to vector<8x128xf32>
    %87 = arith.addf %85, %86 : vector<8x128xf32>
    %88 = arith.negf %87 : vector<8x128xf32>
    %89 = math.exp %88 : vector<8x128xf32>
    %cst_25 = arith.constant 1.000000e+00 : f32
    %90 = vector.broadcast %cst_25 : f32 to vector<8x128xf32>
    %91 = arith.addf %90, %89 : vector<8x128xf32>
    %92 = arith.divf %90, %91 : vector<8x128xf32>
    %93 = vector.extract_strided_slice %73 {offsets = [0, 256], sizes = [8, 128], strides = [1, 1]} : vector<8x384xf32> to vector<8x128xf32>
    %94 = vector.extract_strided_slice %76 {offsets = [0, 256], sizes = [8, 128], strides = [1, 1]} : vector<8x384xf32> to vector<8x128xf32>
    %95 = arith.mulf %84, %94 : vector<8x128xf32>
    %96 = arith.addf %93, %95 : vector<8x128xf32>
    %97 = math.tanh %96 : vector<8x128xf32>
    %cst_26 = arith.constant 1.000000e+00 : f32
    %98 = vector.broadcast %cst_26 : f32 to vector<8x128xf32>
    %99 = arith.subf %98, %92 : vector<8x128xf32>
    %100 = arith.mulf %99, %97 : vector<8x128xf32>
    %101 = arith.mulf %92, %72 : vector<8x128xf32>
    %102 = arith.addf %100, %101 : vector<8x128xf32>
    %c24 = arith.constant 24 : index
    %c0_27 = arith.constant 0 : index
    %103 = vector.load %arg5[%c24, %c0_27] : memref<64x384xf32, #tpu.memory_space<vmem>>, vector<8x384xf32>
    %104 = arith.truncf %102 : vector<8x128xf32> to vector<8x128xbf16>
    %cst_28 = arith.constant dense<0.000000e+00> : vector<8x384xf32>
    %105 = tpu.matmul %104, %8, %cst_28 {dimension_numbers = #tpu.dot_dimension_numbers<[1], [0], [0], [1], [0, 0, 1, 1], [], []>} : vector<8x128xbf16>, vector<128x384xbf16>, vector<8x384xf32> -> vector<8x384xf32>
    %106 = arith.addf %105, %11 : vector<8x384xf32>
    %107 = vector.extract_strided_slice %103 {offsets = [0, 0], sizes = [8, 128], strides = [1, 1]} : vector<8x384xf32> to vector<8x128xf32>
    %108 = vector.extract_strided_slice %106 {offsets = [0, 0], sizes = [8, 128], strides = [1, 1]} : vector<8x384xf32> to vector<8x128xf32>
    %109 = arith.addf %107, %108 : vector<8x128xf32>
    %110 = arith.negf %109 : vector<8x128xf32>
    %111 = math.exp %110 : vector<8x128xf32>
    %cst_29 = arith.constant 1.000000e+00 : f32
    %112 = vector.broadcast %cst_29 : f32 to vector<8x128xf32>
    %113 = arith.addf %112, %111 : vector<8x128xf32>
    %114 = arith.divf %112, %113 : vector<8x128xf32>
    %115 = vector.extract_strided_slice %103 {offsets = [0, 128], sizes = [8, 128], strides = [1, 1]} : vector<8x384xf32> to vector<8x128xf32>
    %116 = vector.extract_strided_slice %106 {offsets = [0, 128], sizes = [8, 128], strides = [1, 1]} : vector<8x384xf32> to vector<8x128xf32>
    %117 = arith.addf %115, %116 : vector<8x128xf32>
    %118 = arith.negf %117 : vector<8x128xf32>
    %119 = math.exp %118 : vector<8x128xf32>
    %cst_30 = arith.constant 1.000000e+00 : f32
    %120 = vector.broadcast %cst_30 : f32 to vector<8x128xf32>
    %121 = arith.addf %120, %119 : vector<8x128xf32>
    %122 = arith.divf %120, %121 : vector<8x128xf32>
    %123 = vector.extract_strided_slice %103 {offsets = [0, 256], sizes = [8, 128], strides = [1, 1]} : vector<8x384xf32> to vector<8x128xf32>
    %124 = vector.extract_strided_slice %106 {offsets = [0, 256], sizes = [8, 128], strides = [1, 1]} : vector<8x384xf32> to vector<8x128xf32>
    %125 = arith.mulf %114, %124 : vector<8x128xf32>
    %126 = arith.addf %123, %125 : vector<8x128xf32>
    %127 = math.tanh %126 : vector<8x128xf32>
    %cst_31 = arith.constant 1.000000e+00 : f32
    %128 = vector.broadcast %cst_31 : f32 to vector<8x128xf32>
    %129 = arith.subf %128, %122 : vector<8x128xf32>
    %130 = arith.mulf %129, %127 : vector<8x128xf32>
    %131 = arith.mulf %122, %102 : vector<8x128xf32>
    %132 = arith.addf %130, %131 : vector<8x128xf32>
    %c32 = arith.constant 32 : index
    %c0_32 = arith.constant 0 : index
    %133 = vector.load %arg5[%c32, %c0_32] : memref<64x384xf32, #tpu.memory_space<vmem>>, vector<8x384xf32>
    %134 = arith.truncf %132 : vector<8x128xf32> to vector<8x128xbf16>
    %cst_33 = arith.constant dense<0.000000e+00> : vector<8x384xf32>
    %135 = tpu.matmul %134, %8, %cst_33 {dimension_numbers = #tpu.dot_dimension_numbers<[1], [0], [0], [1], [0, 0, 1, 1], [], []>} : vector<8x128xbf16>, vector<128x384xbf16>, vector<8x384xf32> -> vector<8x384xf32>
    %136 = arith.addf %135, %11 : vector<8x384xf32>
    %137 = vector.extract_strided_slice %133 {offsets = [0, 0], sizes = [8, 128], strides = [1, 1]} : vector<8x384xf32> to vector<8x128xf32>
    %138 = vector.extract_strided_slice %136 {offsets = [0, 0], sizes = [8, 128], strides = [1, 1]} : vector<8x384xf32> to vector<8x128xf32>
    %139 = arith.addf %137, %138 : vector<8x128xf32>
    %140 = arith.negf %139 : vector<8x128xf32>
    %141 = math.exp %140 : vector<8x128xf32>
    %cst_34 = arith.constant 1.000000e+00 : f32
    %142 = vector.broadcast %cst_34 : f32 to vector<8x128xf32>
    %143 = arith.addf %142, %141 : vector<8x128xf32>
    %144 = arith.divf %142, %143 : vector<8x128xf32>
    %145 = vector.extract_strided_slice %133 {offsets = [0, 128], sizes = [8, 128], strides = [1, 1]} : vector<8x384xf32> to vector<8x128xf32>
    %146 = vector.extract_strided_slice %136 {offsets = [0, 128], sizes = [8, 128], strides = [1, 1]} : vector<8x384xf32> to vector<8x128xf32>
    %147 = arith.addf %145, %146 : vector<8x128xf32>
    %148 = arith.negf %147 : vector<8x128xf32>
    %149 = math.exp %148 : vector<8x128xf32>
    %cst_35 = arith.constant 1.000000e+00 : f32
    %150 = vector.broadcast %cst_35 : f32 to vector<8x128xf32>
    %151 = arith.addf %150, %149 : vector<8x128xf32>
    %152 = arith.divf %150, %151 : vector<8x128xf32>
    %153 = vector.extract_strided_slice %133 {offsets = [0, 256], sizes = [8, 128], strides = [1, 1]} : vector<8x384xf32> to vector<8x128xf32>
    %154 = vector.extract_strided_slice %136 {offsets = [0, 256], sizes = [8, 128], strides = [1, 1]} : vector<8x384xf32> to vector<8x128xf32>
    %155 = arith.mulf %144, %154 : vector<8x128xf32>
    %156 = arith.addf %153, %155 : vector<8x128xf32>
    %157 = math.tanh %156 : vector<8x128xf32>
    %cst_36 = arith.constant 1.000000e+00 : f32
    %158 = vector.broadcast %cst_36 : f32 to vector<8x128xf32>
    %159 = arith.subf %158, %152 : vector<8x128xf32>
    %160 = arith.mulf %159, %157 : vector<8x128xf32>
    %161 = arith.mulf %152, %132 : vector<8x128xf32>
    %162 = arith.addf %160, %161 : vector<8x128xf32>
    %c40 = arith.constant 40 : index
    %c0_37 = arith.constant 0 : index
    %163 = vector.load %arg5[%c40, %c0_37] : memref<64x384xf32, #tpu.memory_space<vmem>>, vector<8x384xf32>
    %164 = arith.truncf %162 : vector<8x128xf32> to vector<8x128xbf16>
    %cst_38 = arith.constant dense<0.000000e+00> : vector<8x384xf32>
    %165 = tpu.matmul %164, %8, %cst_38 {dimension_numbers = #tpu.dot_dimension_numbers<[1], [0], [0], [1], [0, 0, 1, 1], [], []>} : vector<8x128xbf16>, vector<128x384xbf16>, vector<8x384xf32> -> vector<8x384xf32>
    %166 = arith.addf %165, %11 : vector<8x384xf32>
    %167 = vector.extract_strided_slice %163 {offsets = [0, 0], sizes = [8, 128], strides = [1, 1]} : vector<8x384xf32> to vector<8x128xf32>
    %168 = vector.extract_strided_slice %166 {offsets = [0, 0], sizes = [8, 128], strides = [1, 1]} : vector<8x384xf32> to vector<8x128xf32>
    %169 = arith.addf %167, %168 : vector<8x128xf32>
    %170 = arith.negf %169 : vector<8x128xf32>
    %171 = math.exp %170 : vector<8x128xf32>
    %cst_39 = arith.constant 1.000000e+00 : f32
    %172 = vector.broadcast %cst_39 : f32 to vector<8x128xf32>
    %173 = arith.addf %172, %171 : vector<8x128xf32>
    %174 = arith.divf %172, %173 : vector<8x128xf32>
    %175 = vector.extract_strided_slice %163 {offsets = [0, 128], sizes = [8, 128], strides = [1, 1]} : vector<8x384xf32> to vector<8x128xf32>
    %176 = vector.extract_strided_slice %166 {offsets = [0, 128], sizes = [8, 128], strides = [1, 1]} : vector<8x384xf32> to vector<8x128xf32>
    %177 = arith.addf %175, %176 : vector<8x128xf32>
    %178 = arith.negf %177 : vector<8x128xf32>
    %179 = math.exp %178 : vector<8x128xf32>
    %cst_40 = arith.constant 1.000000e+00 : f32
    %180 = vector.broadcast %cst_40 : f32 to vector<8x128xf32>
    %181 = arith.addf %180, %179 : vector<8x128xf32>
    %182 = arith.divf %180, %181 : vector<8x128xf32>
    %183 = vector.extract_strided_slice %163 {offsets = [0, 256], sizes = [8, 128], strides = [1, 1]} : vector<8x384xf32> to vector<8x128xf32>
    %184 = vector.extract_strided_slice %166 {offsets = [0, 256], sizes = [8, 128], strides = [1, 1]} : vector<8x384xf32> to vector<8x128xf32>
    %185 = arith.mulf %174, %184 : vector<8x128xf32>
    %186 = arith.addf %183, %185 : vector<8x128xf32>
    %187 = math.tanh %186 : vector<8x128xf32>
    %cst_41 = arith.constant 1.000000e+00 : f32
    %188 = vector.broadcast %cst_41 : f32 to vector<8x128xf32>
    %189 = arith.subf %188, %182 : vector<8x128xf32>
    %190 = arith.mulf %189, %187 : vector<8x128xf32>
    %191 = arith.mulf %182, %162 : vector<8x128xf32>
    %192 = arith.addf %190, %191 : vector<8x128xf32>
    %c48 = arith.constant 48 : index
    %c0_42 = arith.constant 0 : index
    %193 = vector.load %arg5[%c48, %c0_42] : memref<64x384xf32, #tpu.memory_space<vmem>>, vector<8x384xf32>
    %194 = arith.truncf %192 : vector<8x128xf32> to vector<8x128xbf16>
    %cst_43 = arith.constant dense<0.000000e+00> : vector<8x384xf32>
    %195 = tpu.matmul %194, %8, %cst_43 {dimension_numbers = #tpu.dot_dimension_numbers<[1], [0], [0], [1], [0, 0, 1, 1], [], []>} : vector<8x128xbf16>, vector<128x384xbf16>, vector<8x384xf32> -> vector<8x384xf32>
    %196 = arith.addf %195, %11 : vector<8x384xf32>
    %197 = vector.extract_strided_slice %193 {offsets = [0, 0], sizes = [8, 128], strides = [1, 1]} : vector<8x384xf32> to vector<8x128xf32>
    %198 = vector.extract_strided_slice %196 {offsets = [0, 0], sizes = [8, 128], strides = [1, 1]} : vector<8x384xf32> to vector<8x128xf32>
    %199 = arith.addf %197, %198 : vector<8x128xf32>
    %200 = arith.negf %199 : vector<8x128xf32>
    %201 = math.exp %200 : vector<8x128xf32>
    %cst_44 = arith.constant 1.000000e+00 : f32
    %202 = vector.broadcast %cst_44 : f32 to vector<8x128xf32>
    %203 = arith.addf %202, %201 : vector<8x128xf32>
    %204 = arith.divf %202, %203 : vector<8x128xf32>
    %205 = vector.extract_strided_slice %193 {offsets = [0, 128], sizes = [8, 128], strides = [1, 1]} : vector<8x384xf32> to vector<8x128xf32>
    %206 = vector.extract_strided_slice %196 {offsets = [0, 128], sizes = [8, 128], strides = [1, 1]} : vector<8x384xf32> to vector<8x128xf32>
    %207 = arith.addf %205, %206 : vector<8x128xf32>
    %208 = arith.negf %207 : vector<8x128xf32>
    %209 = math.exp %208 : vector<8x128xf32>
    %cst_45 = arith.constant 1.000000e+00 : f32
    %210 = vector.broadcast %cst_45 : f32 to vector<8x128xf32>
    %211 = arith.addf %210, %209 : vector<8x128xf32>
    %212 = arith.divf %210, %211 : vector<8x128xf32>
    %213 = vector.extract_strided_slice %193 {offsets = [0, 256], sizes = [8, 128], strides = [1, 1]} : vector<8x384xf32> to vector<8x128xf32>
    %214 = vector.extract_strided_slice %196 {offsets = [0, 256], sizes = [8, 128], strides = [1, 1]} : vector<8x384xf32> to vector<8x128xf32>
    %215 = arith.mulf %204, %214 : vector<8x128xf32>
    %216 = arith.addf %213, %215 : vector<8x128xf32>
    %217 = math.tanh %216 : vector<8x128xf32>
    %cst_46 = arith.constant 1.000000e+00 : f32
    %218 = vector.broadcast %cst_46 : f32 to vector<8x128xf32>
    %219 = arith.subf %218, %212 : vector<8x128xf32>
    %220 = arith.mulf %219, %217 : vector<8x128xf32>
    %221 = arith.mulf %212, %192 : vector<8x128xf32>
    %222 = arith.addf %220, %221 : vector<8x128xf32>
    %c56 = arith.constant 56 : index
    %c0_47 = arith.constant 0 : index
    %223 = vector.load %arg5[%c56, %c0_47] : memref<64x384xf32, #tpu.memory_space<vmem>>, vector<8x384xf32>
    %224 = arith.truncf %222 : vector<8x128xf32> to vector<8x128xbf16>
    %cst_48 = arith.constant dense<0.000000e+00> : vector<8x384xf32>
    %225 = tpu.matmul %224, %8, %cst_48 {dimension_numbers = #tpu.dot_dimension_numbers<[1], [0], [0], [1], [0, 0, 1, 1], [], []>} : vector<8x128xbf16>, vector<128x384xbf16>, vector<8x384xf32> -> vector<8x384xf32>
    %226 = arith.addf %225, %11 : vector<8x384xf32>
    %227 = vector.extract_strided_slice %223 {offsets = [0, 0], sizes = [8, 128], strides = [1, 1]} : vector<8x384xf32> to vector<8x128xf32>
    %228 = vector.extract_strided_slice %226 {offsets = [0, 0], sizes = [8, 128], strides = [1, 1]} : vector<8x384xf32> to vector<8x128xf32>
    %229 = arith.addf %227, %228 : vector<8x128xf32>
    %230 = arith.negf %229 : vector<8x128xf32>
    %231 = math.exp %230 : vector<8x128xf32>
    %cst_49 = arith.constant 1.000000e+00 : f32
    %232 = vector.broadcast %cst_49 : f32 to vector<8x128xf32>
    %233 = arith.addf %232, %231 : vector<8x128xf32>
    %234 = arith.divf %232, %233 : vector<8x128xf32>
    %235 = vector.extract_strided_slice %223 {offsets = [0, 128], sizes = [8, 128], strides = [1, 1]} : vector<8x384xf32> to vector<8x128xf32>
    %236 = vector.extract_strided_slice %226 {offsets = [0, 128], sizes = [8, 128], strides = [1, 1]} : vector<8x384xf32> to vector<8x128xf32>
    %237 = arith.addf %235, %236 : vector<8x128xf32>
    %238 = arith.negf %237 : vector<8x128xf32>
    %239 = math.exp %238 : vector<8x128xf32>
    %cst_50 = arith.constant 1.000000e+00 : f32
    %240 = vector.broadcast %cst_50 : f32 to vector<8x128xf32>
    %241 = arith.addf %240, %239 : vector<8x128xf32>
    %242 = arith.divf %240, %241 : vector<8x128xf32>
    %243 = vector.extract_strided_slice %223 {offsets = [0, 256], sizes = [8, 128], strides = [1, 1]} : vector<8x384xf32> to vector<8x128xf32>
    %244 = vector.extract_strided_slice %226 {offsets = [0, 256], sizes = [8, 128], strides = [1, 1]} : vector<8x384xf32> to vector<8x128xf32>
    %245 = arith.mulf %234, %244 : vector<8x128xf32>
    %246 = arith.addf %243, %245 : vector<8x128xf32>
    %247 = math.tanh %246 : vector<8x128xf32>
    %cst_51 = arith.constant 1.000000e+00 : f32
    %248 = vector.broadcast %cst_51 : f32 to vector<8x128xf32>
    %249 = arith.subf %248, %242 : vector<8x128xf32>
    %250 = arith.mulf %249, %247 : vector<8x128xf32>
    %251 = arith.mulf %242, %222 : vector<8x128xf32>
    %252 = arith.addf %250, %251 : vector<8x128xf32>
    %253 = arith.truncf %252 : vector<8x128xf32> to vector<8x128xbf16>
    %c0_52 = arith.constant 0 : index
    %c1536 = arith.constant 1536 : index
    %254 = vector.load %arg1[%c0_52, %c1536] : memref<128x2048xbf16, #tpu.memory_space<vmem>>, vector<128x256xbf16>
    %cst_53 = arith.constant dense<0.000000e+00> : vector<8x256xf32>
    %255 = tpu.matmul %253, %254, %cst_53 {dimension_numbers = #tpu.dot_dimension_numbers<[1], [0], [0], [1], [0, 0, 1, 1], [], []>} : vector<8x128xbf16>, vector<128x256xbf16>, vector<8x256xf32> -> vector<8x256xf32>
    %c0_54 = arith.constant 0 : index
    %c1536_55 = arith.constant 1536 : index
    %256 = vector.load %arg2[%c0_54, %c1536_55] : memref<1x2048xf32, #tpu.memory_space<vmem>>, vector<1x256xf32>
    %257 = vector.broadcast %256 : vector<1x256xf32> to vector<8x256xf32>
    %258 = arith.addf %255, %257 : vector<8x256xf32>
    %259 = vector.extract_strided_slice %258 {offsets = [0, 0], sizes = [8, 128], strides = [1, 1]} : vector<8x256xf32> to vector<8x128xf32>
    %260 = vector.extract_strided_slice %258 {offsets = [0, 128], sizes = [8, 128], strides = [1, 1]} : vector<8x256xf32> to vector<8x128xf32>
    %cst_56 = arith.constant 5.000000e-01 : f32
    %261 = vector.broadcast %cst_56 : f32 to vector<8x128xf32>
    %262 = arith.mulf %261, %260 : vector<8x128xf32>
    %263 = math.exp %262 : vector<8x128xf32>
    %c0_57 = arith.constant 0 : index
    %c0_58 = arith.constant 0 : index
    %264 = vector.load %arg3[%c0_57, %c0_58] : memref<16x128xf32, #tpu.memory_space<vmem>>, vector<8x128xf32>
    %c8_59 = arith.constant 8 : index
    %c0_60 = arith.constant 0 : index
    %265 = vector.load %arg3[%c8_59, %c0_60] : memref<16x128xf32, #tpu.memory_space<vmem>>, vector<8x128xf32>
    %266 = arith.mulf %264, %263 : vector<8x128xf32>
    %267 = arith.addf %259, %266 : vector<8x128xf32>
    %268 = arith.mulf %265, %263 : vector<8x128xf32>
    %269 = arith.addf %259, %268 : vector<8x128xf32>
    %270 = tpu.iota {dimensions = array<i32: 0>} : vector<8x128xi32>
    %c2_i32 = arith.constant 2 : i32
    %271 = vector.broadcast %c2_i32 : i32 to vector<8x128xi32>
    %272 = arith.cmpi slt, %270, %271 : vector<8x128xi32>
    %273 = arith.extui %272 : vector<8x128xi1> to vector<8x128xi32>
    %274 = arith.sitofp %273 : vector<8x128xi32> to vector<8x128xf32>
    %275 = arith.mulf %267, %274 : vector<8x128xf32>
    %cst_61 = arith.constant dense<0.000000e+00> : vector<128xf32>
    %276 = vector.multi_reduction <add>, %275, %cst_61 [0] : vector<8x128xf32> to vector<128xf32>
    %277 = vector.shape_cast %276 : vector<128xf32> to vector<1x128xf32>
    %cst_62 = arith.constant 5.000000e-01 : f32
    %278 = vector.broadcast %cst_62 : f32 to vector<1x128xf32>
    %279 = arith.mulf %277, %278 : vector<1x128xf32>
    %c0_63 = arith.constant 0 : index
    %c1920 = arith.constant 1920 : index
    %280 = vector.load %arg2[%c0_63, %c1920] : memref<1x2048xf32, #tpu.memory_space<vmem>>, vector<1x128xf32>
    %281 = arith.truncf %279 : vector<1x128xf32> to vector<1x128xbf16>
    %c0_64 = arith.constant 0 : index
    %c1920_65 = arith.constant 1920 : index
    %282 = vector.load %arg1[%c0_64, %c1920_65] : memref<128x2048xbf16, #tpu.memory_space<vmem>>, vector<128x128xbf16>
    %cst_66 = arith.constant dense<0.000000e+00> : vector<1x128xf32>
    %283 = tpu.matmul %281, %282, %cst_66 {dimension_numbers = #tpu.dot_dimension_numbers<[1], [0], [0], [1], [0, 0, 1, 1], [], []>} : vector<1x128xbf16>, vector<128x128xbf16>, vector<1x128xf32> -> vector<1x128xf32>
    %284 = arith.addf %280, %283 : vector<1x128xf32>
    %285 = arith.negf %284 : vector<1x128xf32>
    %286 = math.exp %285 : vector<1x128xf32>
    %cst_67 = arith.constant 1.000000e+00 : f32
    %287 = vector.broadcast %cst_67 : f32 to vector<1x128xf32>
    %288 = arith.addf %287, %286 : vector<1x128xf32>
    %289 = arith.divf %287, %288 : vector<1x128xf32>
    %290 = arith.mulf %275, %275 : vector<8x128xf32>
    %291 = vector.shape_cast %290 : vector<8x128xf32> to vector<1x8x128xf32>
    %cst_68 = arith.constant dense<0.000000e+00> : vector<1xf32>
    %292 = vector.multi_reduction <add>, %291, %cst_68 [1, 2] : vector<1x8x128xf32> to vector<1xf32>
    %293 = vector.shape_cast %292 : vector<1xf32> to vector<1x1x1xf32>
    %294 = vector.extract %293[0, 0, 0] : f32 from vector<1x1x1xf32>
    %295 = vector.broadcast %294 : f32 to vector<1x1xf32>
    %cst_69 = arith.constant -5.000000e-01 : f32
    %296 = vector.broadcast %cst_69 : f32 to vector<1x1xf32>
    %297 = arith.mulf %296, %295 : vector<1x1xf32>
    %cst_70 = arith.constant 1.600000e+01 : f32
    %298 = vector.broadcast %cst_70 : f32 to vector<1x1xf32>
    %299 = arith.divf %297, %298 : vector<1x1xf32>
    %300 = tpu.iota {dimensions = array<i32: 1>} : vector<1x128xi32>
    %c32_i32 = arith.constant 32 : i32
    %301 = vector.broadcast %c32_i32 : i32 to vector<1x128xi32>
    %302 = arith.cmpi eq, %300, %301 : vector<1x128xi32>
    %303 = vector.shape_cast %299 : vector<1x1xf32> to vector<1x1xf32>
    %304 = vector.broadcast %303 : vector<1x1xf32> to vector<1x128xf32>
    %305 = arith.select %302, %304, %289 : vector<1x128xi1>, vector<1x128xf32>
    %c64 = arith.constant 64 : index
    %c0_71 = arith.constant 0 : index
    %306 = vector.load %arg4[%c64, %c0_71] : memref<88x128xf32, #tpu.memory_space<vmem>>, vector<8x128xf32>
    tpu.vector_store %arg4[%c64, %c0_71], %259 {strides = array<i32>} : memref<88x128xf32, #tpu.memory_space<vmem>>, vector<8x128xf32>,
    %c72 = arith.constant 72 : index
    %c0_72 = arith.constant 0 : index
    %307 = vector.load %arg4[%c72, %c0_72] : memref<88x128xf32, #tpu.memory_space<vmem>>, vector<8x128xf32>
    tpu.vector_store %arg4[%c72, %c0_72], %260 {strides = array<i32>} : memref<88x128xf32, #tpu.memory_space<vmem>>, vector<8x128xf32>,
    %308 = vector.shape_cast %305 : vector<1x128xf32> to vector<1x128xf32>
    %309 = vector.broadcast %308 : vector<1x128xf32> to vector<8x128xf32>
    %c80 = arith.constant 80 : index
    %c0_73 = arith.constant 0 : index
    %310 = vector.load %arg4[%c80, %c0_73] : memref<88x128xf32, #tpu.memory_space<vmem>>, vector<8x128xf32>
    tpu.vector_store %arg4[%c80, %c0_73], %309 {strides = array<i32>} : memref<88x128xf32, #tpu.memory_space<vmem>>, vector<8x128xf32>,
    %311 = arith.truncf %269 : vector<8x128xf32> to vector<8x128xbf16>
    %c0_74 = arith.constant 0 : index
    %c768 = arith.constant 768 : index
    %312 = vector.load %arg1[%c0_74, %c768] : memref<128x2048xbf16, #tpu.memory_space<vmem>>, vector<128x384xbf16>
    %cst_75 = arith.constant dense<0.000000e+00> : vector<8x384xf32>
    %313 = tpu.matmul %311, %312, %cst_75 {dimension_numbers = #tpu.dot_dimension_numbers<[1], [0], [0], [1], [0, 0, 1, 1], [], []>} : vector<8x128xbf16>, vector<128x384xbf16>, vector<8x384xf32> -> vector<8x384xf32>
    %c0_76 = arith.constant 0 : index
    %c768_77 = arith.constant 768 : index
    %314 = vector.load %arg2[%c0_76, %c768_77] : memref<1x2048xf32, #tpu.memory_space<vmem>>, vector<1x384xf32>
    %315 = vector.broadcast %314 : vector<1x384xf32> to vector<8x384xf32>
    %316 = arith.addf %313, %315 : vector<8x384xf32>
    %c0_78 = arith.constant 0 : index
    %c1152 = arith.constant 1152 : index
    %317 = vector.load %arg1[%c0_78, %c1152] : memref<128x2048xbf16, #tpu.memory_space<vmem>>, vector<128x384xbf16>
    %c0_79 = arith.constant 0 : index
    %c1152_80 = arith.constant 1152 : index
    %318 = vector.load %arg2[%c0_79, %c1152_80] : memref<1x2048xf32, #tpu.memory_space<vmem>>, vector<1x384xf32>
    %319 = vector.shape_cast %318 : vector<1x384xf32> to vector<1x384xf32>
    %320 = vector.broadcast %319 : vector<1x384xf32> to vector<8x384xf32>
    %cst_81 = arith.constant 0.000000e+00 : f32
    %321 = vector.broadcast %cst_81 : f32 to vector<8x128xf32>
    %322 = arith.truncf %321 : vector<8x128xf32> to vector<8x128xbf16>
    %cst_82 = arith.constant dense<0.000000e+00> : vector<8x384xf32>
    %323 = tpu.matmul %322, %317, %cst_82 {dimension_numbers = #tpu.dot_dimension_numbers<[1], [0], [0], [1], [0, 0, 1, 1], [], []>} : vector<8x128xbf16>, vector<128x384xbf16>, vector<8x384xf32> -> vector<8x384xf32>
    %324 = arith.addf %323, %320 : vector<8x384xf32>
    %325 = vector.extract_strided_slice %316 {offsets = [0, 0], sizes = [8, 128], strides = [1, 1]} : vector<8x384xf32> to vector<8x128xf32>
    %326 = vector.extract_strided_slice %324 {offsets = [0, 0], sizes = [8, 128], strides = [1, 1]} : vector<8x384xf32> to vector<8x128xf32>
    %327 = arith.addf %325, %326 : vector<8x128xf32>
    %328 = arith.negf %327 : vector<8x128xf32>
    %329 = math.exp %328 : vector<8x128xf32>
    %cst_83 = arith.constant 1.000000e+00 : f32
    %330 = vector.broadcast %cst_83 : f32 to vector<8x128xf32>
    %331 = arith.addf %330, %329 : vector<8x128xf32>
    %332 = arith.divf %330, %331 : vector<8x128xf32>
    %333 = vector.extract_strided_slice %316 {offsets = [0, 128], sizes = [8, 128], strides = [1, 1]} : vector<8x384xf32> to vector<8x128xf32>
    %334 = vector.extract_strided_slice %324 {offsets = [0, 128], sizes = [8, 128], strides = [1, 1]} : vector<8x384xf32> to vector<8x128xf32>
    %335 = arith.addf %333, %334 : vector<8x128xf32>
    %336 = arith.negf %335 : vector<8x128xf32>
    %337 = math.exp %336 : vector<8x128xf32>
    %cst_84 = arith.constant 1.000000e+00 : f32
    %338 = vector.broadcast %cst_84 : f32 to vector<8x128xf32>
    %339 = arith.addf %338, %337 : vector<8x128xf32>
    %340 = arith.divf %338, %339 : vector<8x128xf32>
    %341 = vector.extract_strided_slice %316 {offsets = [0, 256], sizes = [8, 128], strides = [1, 1]} : vector<8x384xf32> to vector<8x128xf32>
    %342 = vector.extract_strided_slice %324 {offsets = [0, 256], sizes = [8, 128], strides = [1, 1]} : vector<8x384xf32> to vector<8x128xf32>
    %343 = arith.mulf %332, %342 : vector<8x128xf32>
    %344 = arith.addf %341, %343 : vector<8x128xf32>
    %345 = math.tanh %344 : vector<8x128xf32>
    %cst_85 = arith.constant 1.000000e+00 : f32
    %346 = vector.broadcast %cst_85 : f32 to vector<8x128xf32>
    %347 = arith.subf %346, %340 : vector<8x128xf32>
    %348 = arith.mulf %347, %345 : vector<8x128xf32>
    %349 = arith.mulf %340, %321 : vector<8x128xf32>
    %350 = arith.addf %348, %349 : vector<8x128xf32>
    %c0_86 = arith.constant 0 : index
    %c0_87 = arith.constant 0 : index
    %351 = vector.load %arg6[%c0_86, %c0_87] : memref<64x128xf32, #tpu.memory_space<vmem>>, vector<8x128xf32>
    tpu.vector_store %arg6[%c0_86, %c0_87], %350 {strides = array<i32>} : memref<64x128xf32, #tpu.memory_space<vmem>>, vector<8x128xf32>,
    %352 = arith.truncf %350 : vector<8x128xf32> to vector<8x128xbf16>
    %cst_88 = arith.constant dense<0.000000e+00> : vector<8x384xf32>
    %353 = tpu.matmul %352, %317, %cst_88 {dimension_numbers = #tpu.dot_dimension_numbers<[1], [0], [0], [1], [0, 0, 1, 1], [], []>} : vector<8x128xbf16>, vector<128x384xbf16>, vector<8x384xf32> -> vector<8x384xf32>
    %354 = arith.addf %353, %320 : vector<8x384xf32>
    %355 = vector.extract_strided_slice %316 {offsets = [0, 0], sizes = [8, 128], strides = [1, 1]} : vector<8x384xf32> to vector<8x128xf32>
    %356 = vector.extract_strided_slice %354 {offsets = [0, 0], sizes = [8, 128], strides = [1, 1]} : vector<8x384xf32> to vector<8x128xf32>
    %357 = arith.addf %355, %356 : vector<8x128xf32>
    %358 = arith.negf %357 : vector<8x128xf32>
    %359 = math.exp %358 : vector<8x128xf32>
    %cst_89 = arith.constant 1.000000e+00 : f32
    %360 = vector.broadcast %cst_89 : f32 to vector<8x128xf32>
    %361 = arith.addf %360, %359 : vector<8x128xf32>
    %362 = arith.divf %360, %361 : vector<8x128xf32>
    %363 = vector.extract_strided_slice %316 {offsets = [0, 128], sizes = [8, 128], strides = [1, 1]} : vector<8x384xf32> to vector<8x128xf32>
    %364 = vector.extract_strided_slice %354 {offsets = [0, 128], sizes = [8, 128], strides = [1, 1]} : vector<8x384xf32> to vector<8x128xf32>
    %365 = arith.addf %363, %364 : vector<8x128xf32>
    %366 = arith.negf %365 : vector<8x128xf32>
    %367 = math.exp %366 : vector<8x128xf32>
    %cst_90 = arith.constant 1.000000e+00 : f32
    %368 = vector.broadcast %cst_90 : f32 to vector<8x128xf32>
    %369 = arith.addf %368, %367 : vector<8x128xf32>
    %370 = arith.divf %368, %369 : vector<8x128xf32>
    %371 = vector.extract_strided_slice %316 {offsets = [0, 256], sizes = [8, 128], strides = [1, 1]} : vector<8x384xf32> to vector<8x128xf32>
    %372 = vector.extract_strided_slice %354 {offsets = [0, 256], sizes = [8, 128], strides = [1, 1]} : vector<8x384xf32> to vector<8x128xf32>
    %373 = arith.mulf %362, %372 : vector<8x128xf32>
    %374 = arith.addf %371, %373 : vector<8x128xf32>
    %375 = math.tanh %374 : vector<8x128xf32>
    %cst_91 = arith.constant 1.000000e+00 : f32
    %376 = vector.broadcast %cst_91 : f32 to vector<8x128xf32>
    %377 = arith.subf %376, %370 : vector<8x128xf32>
    %378 = arith.mulf %377, %375 : vector<8x128xf32>
    %379 = arith.mulf %370, %350 : vector<8x128xf32>
    %380 = arith.addf %378, %379 : vector<8x128xf32>
    %c8_92 = arith.constant 8 : index
    %c0_93 = arith.constant 0 : index
    %381 = vector.load %arg6[%c8_92, %c0_93] : memref<64x128xf32, #tpu.memory_space<vmem>>, vector<8x128xf32>
    tpu.vector_store %arg6[%c8_92, %c0_93], %380 {strides = array<i32>} : memref<64x128xf32, #tpu.memory_space<vmem>>, vector<8x128xf32>,
    %382 = arith.truncf %380 : vector<8x128xf32> to vector<8x128xbf16>
    %cst_94 = arith.constant dense<0.000000e+00> : vector<8x384xf32>
    %383 = tpu.matmul %382, %317, %cst_94 {dimension_numbers = #tpu.dot_dimension_numbers<[1], [0], [0], [1], [0, 0, 1, 1], [], []>} : vector<8x128xbf16>, vector<128x384xbf16>, vector<8x384xf32> -> vector<8x384xf32>
    %384 = arith.addf %383, %320 : vector<8x384xf32>
    %385 = vector.extract_strided_slice %316 {offsets = [0, 0], sizes = [8, 128], strides = [1, 1]} : vector<8x384xf32> to vector<8x128xf32>
    %386 = vector.extract_strided_slice %384 {offsets = [0, 0], sizes = [8, 128], strides = [1, 1]} : vector<8x384xf32> to vector<8x128xf32>
    %387 = arith.addf %385, %386 : vector<8x128xf32>
    %388 = arith.negf %387 : vector<8x128xf32>
    %389 = math.exp %388 : vector<8x128xf32>
    %cst_95 = arith.constant 1.000000e+00 : f32
    %390 = vector.broadcast %cst_95 : f32 to vector<8x128xf32>
    %391 = arith.addf %390, %389 : vector<8x128xf32>
    %392 = arith.divf %390, %391 : vector<8x128xf32>
    %393 = vector.extract_strided_slice %316 {offsets = [0, 128], sizes = [8, 128], strides = [1, 1]} : vector<8x384xf32> to vector<8x128xf32>
    %394 = vector.extract_strided_slice %384 {offsets = [0, 128], sizes = [8, 128], strides = [1, 1]} : vector<8x384xf32> to vector<8x128xf32>
    %395 = arith.addf %393, %394 : vector<8x128xf32>
    %396 = arith.negf %395 : vector<8x128xf32>
    %397 = math.exp %396 : vector<8x128xf32>
    %cst_96 = arith.constant 1.000000e+00 : f32
    %398 = vector.broadcast %cst_96 : f32 to vector<8x128xf32>
    %399 = arith.addf %398, %397 : vector<8x128xf32>
    %400 = arith.divf %398, %399 : vector<8x128xf32>
    %401 = vector.extract_strided_slice %316 {offsets = [0, 256], sizes = [8, 128], strides = [1, 1]} : vector<8x384xf32> to vector<8x128xf32>
    %402 = vector.extract_strided_slice %384 {offsets = [0, 256], sizes = [8, 128], strides = [1, 1]} : vector<8x384xf32> to vector<8x128xf32>
    %403 = arith.mulf %392, %402 : vector<8x128xf32>
    %404 = arith.addf %401, %403 : vector<8x128xf32>
    %405 = math.tanh %404 : vector<8x128xf32>
    %cst_97 = arith.constant 1.000000e+00 : f32
    %406 = vector.broadcast %cst_97 : f32 to vector<8x128xf32>
    %407 = arith.subf %406, %400 : vector<8x128xf32>
    %408 = arith.mulf %407, %405 : vector<8x128xf32>
    %409 = arith.mulf %400, %380 : vector<8x128xf32>
    %410 = arith.addf %408, %409 : vector<8x128xf32>
    %c16_98 = arith.constant 16 : index
    %c0_99 = arith.constant 0 : index
    %411 = vector.load %arg6[%c16_98, %c0_99] : memref<64x128xf32, #tpu.memory_space<vmem>>, vector<8x128xf32>
    tpu.vector_store %arg6[%c16_98, %c0_99], %410 {strides = array<i32>} : memref<64x128xf32, #tpu.memory_space<vmem>>, vector<8x128xf32>,
    %412 = arith.truncf %410 : vector<8x128xf32> to vector<8x128xbf16>
    %cst_100 = arith.constant dense<0.000000e+00> : vector<8x384xf32>
    %413 = tpu.matmul %412, %317, %cst_100 {dimension_numbers = #tpu.dot_dimension_numbers<[1], [0], [0], [1], [0, 0, 1, 1], [], []>} : vector<8x128xbf16>, vector<128x384xbf16>, vector<8x384xf32> -> vector<8x384xf32>
    %414 = arith.addf %413, %320 : vector<8x384xf32>
    %415 = vector.extract_strided_slice %316 {offsets = [0, 0], sizes = [8, 128], strides = [1, 1]} : vector<8x384xf32> to vector<8x128xf32>
    %416 = vector.extract_strided_slice %414 {offsets = [0, 0], sizes = [8, 128], strides = [1, 1]} : vector<8x384xf32> to vector<8x128xf32>
    %417 = arith.addf %415, %416 : vector<8x128xf32>
    %418 = arith.negf %417 : vector<8x128xf32>
    %419 = math.exp %418 : vector<8x128xf32>
    %cst_101 = arith.constant 1.000000e+00 : f32
    %420 = vector.broadcast %cst_101 : f32 to vector<8x128xf32>
    %421 = arith.addf %420, %419 : vector<8x128xf32>
    %422 = arith.divf %420, %421 : vector<8x128xf32>
    %423 = vector.extract_strided_slice %316 {offsets = [0, 128], sizes = [8, 128], strides = [1, 1]} : vector<8x384xf32> to vector<8x128xf32>
    %424 = vector.extract_strided_slice %414 {offsets = [0, 128], sizes = [8, 128], strides = [1, 1]} : vector<8x384xf32> to vector<8x128xf32>
    %425 = arith.addf %423, %424 : vector<8x128xf32>
    %426 = arith.negf %425 : vector<8x128xf32>
    %427 = math.exp %426 : vector<8x128xf32>
    %cst_102 = arith.constant 1.000000e+00 : f32
    %428 = vector.broadcast %cst_102 : f32 to vector<8x128xf32>
    %429 = arith.addf %428, %427 : vector<8x128xf32>
    %430 = arith.divf %428, %429 : vector<8x128xf32>
    %431 = vector.extract_strided_slice %316 {offsets = [0, 256], sizes = [8, 128], strides = [1, 1]} : vector<8x384xf32> to vector<8x128xf32>
    %432 = vector.extract_strided_slice %414 {offsets = [0, 256], sizes = [8, 128], strides = [1, 1]} : vector<8x384xf32> to vector<8x128xf32>
    %433 = arith.mulf %422, %432 : vector<8x128xf32>
    %434 = arith.addf %431, %433 : vector<8x128xf32>
    %435 = math.tanh %434 : vector<8x128xf32>
    %cst_103 = arith.constant 1.000000e+00 : f32
    %436 = vector.broadcast %cst_103 : f32 to vector<8x128xf32>
    %437 = arith.subf %436, %430 : vector<8x128xf32>
    %438 = arith.mulf %437, %435 : vector<8x128xf32>
    %439 = arith.mulf %430, %410 : vector<8x128xf32>
    %440 = arith.addf %438, %439 : vector<8x128xf32>
    %c24_104 = arith.constant 24 : index
    %c0_105 = arith.constant 0 : index
    %441 = vector.load %arg6[%c24_104, %c0_105] : memref<64x128xf32, #tpu.memory_space<vmem>>, vector<8x128xf32>
    tpu.vector_store %arg6[%c24_104, %c0_105], %440 {strides = array<i32>} : memref<64x128xf32, #tpu.memory_space<vmem>>, vector<8x128xf32>,
    %442 = arith.truncf %440 : vector<8x128xf32> to vector<8x128xbf16>
    %cst_106 = arith.constant dense<0.000000e+00> : vector<8x384xf32>
    %443 = tpu.matmul %442, %317, %cst_106 {dimension_numbers = #tpu.dot_dimension_numbers<[1], [0], [0], [1], [0, 0, 1, 1], [], []>} : vector<8x128xbf16>, vector<128x384xbf16>, vector<8x384xf32> -> vector<8x384xf32>
    %444 = arith.addf %443, %320 : vector<8x384xf32>
    %445 = vector.extract_strided_slice %316 {offsets = [0, 0], sizes = [8, 128], strides = [1, 1]} : vector<8x384xf32> to vector<8x128xf32>
    %446 = vector.extract_strided_slice %444 {offsets = [0, 0], sizes = [8, 128], strides = [1, 1]} : vector<8x384xf32> to vector<8x128xf32>
    %447 = arith.addf %445, %446 : vector<8x128xf32>
    %448 = arith.negf %447 : vector<8x128xf32>
    %449 = math.exp %448 : vector<8x128xf32>
    %cst_107 = arith.constant 1.000000e+00 : f32
    %450 = vector.broadcast %cst_107 : f32 to vector<8x128xf32>
    %451 = arith.addf %450, %449 : vector<8x128xf32>
    %452 = arith.divf %450, %451 : vector<8x128xf32>
    %453 = vector.extract_strided_slice %316 {offsets = [0, 128], sizes = [8, 128], strides = [1, 1]} : vector<8x384xf32> to vector<8x128xf32>
    %454 = vector.extract_strided_slice %444 {offsets = [0, 128], sizes = [8, 128], strides = [1, 1]} : vector<8x384xf32> to vector<8x128xf32>
    %455 = arith.addf %453, %454 : vector<8x128xf32>
    %456 = arith.negf %455 : vector<8x128xf32>
    %457 = math.exp %456 : vector<8x128xf32>
    %cst_108 = arith.constant 1.000000e+00 : f32
    %458 = vector.broadcast %cst_108 : f32 to vector<8x128xf32>
    %459 = arith.addf %458, %457 : vector<8x128xf32>
    %460 = arith.divf %458, %459 : vector<8x128xf32>
    %461 = vector.extract_strided_slice %316 {offsets = [0, 256], sizes = [8, 128], strides = [1, 1]} : vector<8x384xf32> to vector<8x128xf32>
    %462 = vector.extract_strided_slice %444 {offsets = [0, 256], sizes = [8, 128], strides = [1, 1]} : vector<8x384xf32> to vector<8x128xf32>
    %463 = arith.mulf %452, %462 : vector<8x128xf32>
    %464 = arith.addf %461, %463 : vector<8x128xf32>
    %465 = math.tanh %464 : vector<8x128xf32>
    %cst_109 = arith.constant 1.000000e+00 : f32
    %466 = vector.broadcast %cst_109 : f32 to vector<8x128xf32>
    %467 = arith.subf %466, %460 : vector<8x128xf32>
    %468 = arith.mulf %467, %465 : vector<8x128xf32>
    %469 = arith.mulf %460, %440 : vector<8x128xf32>
    %470 = arith.addf %468, %469 : vector<8x128xf32>
    %c32_110 = arith.constant 32 : index
    %c0_111 = arith.constant 0 : index
    %471 = vector.load %arg6[%c32_110, %c0_111] : memref<64x128xf32, #tpu.memory_space<vmem>>, vector<8x128xf32>
    tpu.vector_store %arg6[%c32_110, %c0_111], %470 {strides = array<i32>} : memref<64x128xf32, #tpu.memory_space<vmem>>, vector<8x128xf32>,
    %472 = arith.truncf %470 : vector<8x128xf32> to vector<8x128xbf16>
    %cst_112 = arith.constant dense<0.000000e+00> : vector<8x384xf32>
    %473 = tpu.matmul %472, %317, %cst_112 {dimension_numbers = #tpu.dot_dimension_numbers<[1], [0], [0], [1], [0, 0, 1, 1], [], []>} : vector<8x128xbf16>, vector<128x384xbf16>, vector<8x384xf32> -> vector<8x384xf32>
    %474 = arith.addf %473, %320 : vector<8x384xf32>
    %475 = vector.extract_strided_slice %316 {offsets = [0, 0], sizes = [8, 128], strides = [1, 1]} : vector<8x384xf32> to vector<8x128xf32>
    %476 = vector.extract_strided_slice %474 {offsets = [0, 0], sizes = [8, 128], strides = [1, 1]} : vector<8x384xf32> to vector<8x128xf32>
    %477 = arith.addf %475, %476 : vector<8x128xf32>
    %478 = arith.negf %477 : vector<8x128xf32>
    %479 = math.exp %478 : vector<8x128xf32>
    %cst_113 = arith.constant 1.000000e+00 : f32
    %480 = vector.broadcast %cst_113 : f32 to vector<8x128xf32>
    %481 = arith.addf %480, %479 : vector<8x128xf32>
    %482 = arith.divf %480, %481 : vector<8x128xf32>
    %483 = vector.extract_strided_slice %316 {offsets = [0, 128], sizes = [8, 128], strides = [1, 1]} : vector<8x384xf32> to vector<8x128xf32>
    %484 = vector.extract_strided_slice %474 {offsets = [0, 128], sizes = [8, 128], strides = [1, 1]} : vector<8x384xf32> to vector<8x128xf32>
    %485 = arith.addf %483, %484 : vector<8x128xf32>
    %486 = arith.negf %485 : vector<8x128xf32>
    %487 = math.exp %486 : vector<8x128xf32>
    %cst_114 = arith.constant 1.000000e+00 : f32
    %488 = vector.broadcast %cst_114 : f32 to vector<8x128xf32>
    %489 = arith.addf %488, %487 : vector<8x128xf32>
    %490 = arith.divf %488, %489 : vector<8x128xf32>
    %491 = vector.extract_strided_slice %316 {offsets = [0, 256], sizes = [8, 128], strides = [1, 1]} : vector<8x384xf32> to vector<8x128xf32>
    %492 = vector.extract_strided_slice %474 {offsets = [0, 256], sizes = [8, 128], strides = [1, 1]} : vector<8x384xf32> to vector<8x128xf32>
    %493 = arith.mulf %482, %492 : vector<8x128xf32>
    %494 = arith.addf %491, %493 : vector<8x128xf32>
    %495 = math.tanh %494 : vector<8x128xf32>
    %cst_115 = arith.constant 1.000000e+00 : f32
    %496 = vector.broadcast %cst_115 : f32 to vector<8x128xf32>
    %497 = arith.subf %496, %490 : vector<8x128xf32>
    %498 = arith.mulf %497, %495 : vector<8x128xf32>
    %499 = arith.mulf %490, %470 : vector<8x128xf32>
    %500 = arith.addf %498, %499 : vector<8x128xf32>
    %c40_116 = arith.constant 40 : index
    %c0_117 = arith.constant 0 : index
    %501 = vector.load %arg6[%c40_116, %c0_117] : memref<64x128xf32, #tpu.memory_space<vmem>>, vector<8x128xf32>
    tpu.vector_store %arg6[%c40_116, %c0_117], %500 {strides = array<i32>} : memref<64x128xf32, #tpu.memory_space<vmem>>, vector<8x128xf32>,
    %502 = arith.truncf %500 : vector<8x128xf32> to vector<8x128xbf16>
    %cst_118 = arith.constant dense<0.000000e+00> : vector<8x384xf32>
    %503 = tpu.matmul %502, %317, %cst_118 {dimension_numbers = #tpu.dot_dimension_numbers<[1], [0], [0], [1], [0, 0, 1, 1], [], []>} : vector<8x128xbf16>, vector<128x384xbf16>, vector<8x384xf32> -> vector<8x384xf32>
    %504 = arith.addf %503, %320 : vector<8x384xf32>
    %505 = vector.extract_strided_slice %316 {offsets = [0, 0], sizes = [8, 128], strides = [1, 1]} : vector<8x384xf32> to vector<8x128xf32>
    %506 = vector.extract_strided_slice %504 {offsets = [0, 0], sizes = [8, 128], strides = [1, 1]} : vector<8x384xf32> to vector<8x128xf32>
    %507 = arith.addf %505, %506 : vector<8x128xf32>
    %508 = arith.negf %507 : vector<8x128xf32>
    %509 = math.exp %508 : vector<8x128xf32>
    %cst_119 = arith.constant 1.000000e+00 : f32
    %510 = vector.broadcast %cst_119 : f32 to vector<8x128xf32>
    %511 = arith.addf %510, %509 : vector<8x128xf32>
    %512 = arith.divf %510, %511 : vector<8x128xf32>
    %513 = vector.extract_strided_slice %316 {offsets = [0, 128], sizes = [8, 128], strides = [1, 1]} : vector<8x384xf32> to vector<8x128xf32>
    %514 = vector.extract_strided_slice %504 {offsets = [0, 128], sizes = [8, 128], strides = [1, 1]} : vector<8x384xf32> to vector<8x128xf32>
    %515 = arith.addf %513, %514 : vector<8x128xf32>
    %516 = arith.negf %515 : vector<8x128xf32>
    %517 = math.exp %516 : vector<8x128xf32>
    %cst_120 = arith.constant 1.000000e+00 : f32
    %518 = vector.broadcast %cst_120 : f32 to vector<8x128xf32>
    %519 = arith.addf %518, %517 : vector<8x128xf32>
    %520 = arith.divf %518, %519 : vector<8x128xf32>
    %521 = vector.extract_strided_slice %316 {offsets = [0, 256], sizes = [8, 128], strides = [1, 1]} : vector<8x384xf32> to vector<8x128xf32>
    %522 = vector.extract_strided_slice %504 {offsets = [0, 256], sizes = [8, 128], strides = [1, 1]} : vector<8x384xf32> to vector<8x128xf32>
    %523 = arith.mulf %512, %522 : vector<8x128xf32>
    %524 = arith.addf %521, %523 : vector<8x128xf32>
    %525 = math.tanh %524 : vector<8x128xf32>
    %cst_121 = arith.constant 1.000000e+00 : f32
    %526 = vector.broadcast %cst_121 : f32 to vector<8x128xf32>
    %527 = arith.subf %526, %520 : vector<8x128xf32>
    %528 = arith.mulf %527, %525 : vector<8x128xf32>
    %529 = arith.mulf %520, %500 : vector<8x128xf32>
    %530 = arith.addf %528, %529 : vector<8x128xf32>
    %c48_122 = arith.constant 48 : index
    %c0_123 = arith.constant 0 : index
    %531 = vector.load %arg6[%c48_122, %c0_123] : memref<64x128xf32, #tpu.memory_space<vmem>>, vector<8x128xf32>
    tpu.vector_store %arg6[%c48_122, %c0_123], %530 {strides = array<i32>} : memref<64x128xf32, #tpu.memory_space<vmem>>, vector<8x128xf32>,
    %532 = arith.truncf %530 : vector<8x128xf32> to vector<8x128xbf16>
    %cst_124 = arith.constant dense<0.000000e+00> : vector<8x384xf32>
    %533 = tpu.matmul %532, %317, %cst_124 {dimension_numbers = #tpu.dot_dimension_numbers<[1], [0], [0], [1], [0, 0, 1, 1], [], []>} : vector<8x128xbf16>, vector<128x384xbf16>, vector<8x384xf32> -> vector<8x384xf32>
    %534 = arith.addf %533, %320 : vector<8x384xf32>
    %535 = vector.extract_strided_slice %316 {offsets = [0, 0], sizes = [8, 128], strides = [1, 1]} : vector<8x384xf32> to vector<8x128xf32>
    %536 = vector.extract_strided_slice %534 {offsets = [0, 0], sizes = [8, 128], strides = [1, 1]} : vector<8x384xf32> to vector<8x128xf32>
    %537 = arith.addf %535, %536 : vector<8x128xf32>
    %538 = arith.negf %537 : vector<8x128xf32>
    %539 = math.exp %538 : vector<8x128xf32>
    %cst_125 = arith.constant 1.000000e+00 : f32
    %540 = vector.broadcast %cst_125 : f32 to vector<8x128xf32>
    %541 = arith.addf %540, %539 : vector<8x128xf32>
    %542 = arith.divf %540, %541 : vector<8x128xf32>
    %543 = vector.extract_strided_slice %316 {offsets = [0, 128], sizes = [8, 128], strides = [1, 1]} : vector<8x384xf32> to vector<8x128xf32>
    %544 = vector.extract_strided_slice %534 {offsets = [0, 128], sizes = [8, 128], strides = [1, 1]} : vector<8x384xf32> to vector<8x128xf32>
    %545 = arith.addf %543, %544 : vector<8x128xf32>
    %546 = arith.negf %545 : vector<8x128xf32>
    %547 = math.exp %546 : vector<8x128xf32>
    %cst_126 = arith.constant 1.000000e+00 : f32
    %548 = vector.broadcast %cst_126 : f32 to vector<8x128xf32>
    %549 = arith.addf %548, %547 : vector<8x128xf32>
    %550 = arith.divf %548, %549 : vector<8x128xf32>
    %551 = vector.extract_strided_slice %316 {offsets = [0, 256], sizes = [8, 128], strides = [1, 1]} : vector<8x384xf32> to vector<8x128xf32>
    %552 = vector.extract_strided_slice %534 {offsets = [0, 256], sizes = [8, 128], strides = [1, 1]} : vector<8x384xf32> to vector<8x128xf32>
    %553 = arith.mulf %542, %552 : vector<8x128xf32>
    %554 = arith.addf %551, %553 : vector<8x128xf32>
    %555 = math.tanh %554 : vector<8x128xf32>
    %cst_127 = arith.constant 1.000000e+00 : f32
    %556 = vector.broadcast %cst_127 : f32 to vector<8x128xf32>
    %557 = arith.subf %556, %550 : vector<8x128xf32>
    %558 = arith.mulf %557, %555 : vector<8x128xf32>
    %559 = arith.mulf %550, %530 : vector<8x128xf32>
    %560 = arith.addf %558, %559 : vector<8x128xf32>
    %c56_128 = arith.constant 56 : index
    %c0_129 = arith.constant 0 : index
    %561 = vector.load %arg6[%c56_128, %c0_129] : memref<64x128xf32, #tpu.memory_space<vmem>>, vector<8x128xf32>
    tpu.vector_store %arg6[%c56_128, %c0_129], %560 {strides = array<i32>} : memref<64x128xf32, #tpu.memory_space<vmem>>, vector<8x128xf32>,
    %c0_130 = arith.constant 0 : index
    %c0_131 = arith.constant 0 : index
    %562 = vector.load %arg6[%c0_130, %c0_131] : memref<64x128xf32, #tpu.memory_space<vmem>>, vector<64x128xf32>
    %563 = arith.truncf %562 : vector<64x128xf32> to vector<64x128xbf16>
    %c0_132 = arith.constant 0 : index
    %c1792 = arith.constant 1792 : index
    %564 = vector.load %arg1[%c0_132, %c1792] : memref<128x2048xbf16, #tpu.memory_space<vmem>>, vector<128x128xbf16>
    %cst_133 = arith.constant dense<0.000000e+00> : vector<64x128xf32>
    %565 = tpu.matmul %563, %564, %cst_133 {dimension_numbers = #tpu.dot_dimension_numbers<[1], [0], [0], [1], [0, 0, 1, 1], [], []>} : vector<64x128xbf16>, vector<128x128xbf16>, vector<64x128xf32> -> vector<64x128xf32>
    %c0_134 = arith.constant 0 : index
    %c1792_135 = arith.constant 1792 : index
    %566 = vector.load %arg2[%c0_134, %c1792_135] : memref<1x2048xf32, #tpu.memory_space<vmem>>, vector<1x128xf32>
    %567 = vector.broadcast %566 : vector<1x128xf32> to vector<64x128xf32>
    %568 = arith.addf %565, %567 : vector<64x128xf32>
    %c0_136 = arith.constant 0 : index
    %c0_137 = arith.constant 0 : index
    %569 = vector.load %arg4[%c0_136, %c0_137] : memref<88x128xf32, #tpu.memory_space<vmem>>, vector<64x128xf32>
    tpu.vector_store %arg4[%c0_136, %c0_137], %568 {strides = array<i32>} : memref<88x128xf32, #tpu.memory_space<vmem>>, vector<64x128xf32>,
    return
  }
}

</mosaic_0001>

<llo_original>
// kernel: tpu_custom_call.1
$region0: #{tpu_custom_call.1}
  #allocation0 [shape = 'u32[]', space=smem, size = 0x4, offset = 0x4, fixed_abs, tag = 'smem constant byte address 0x4 - core index']
  #allocation1 [shape = 'u32[144,128]{1,0:T(1,128)}', space=vmem, size = 0x12000, scoped, tag = 'internal scratch']
  #allocation2 [shape = 'f32[64,384]{1,0:T(8,128)}', space=vmem, size = 0x18000, scoped, tag = 'scratch operand']
  #allocation3 [shape = 'f32[64,128]{1,0:T(8,128)}', space=vmem, size = 0x8000, scoped, tag = 'scratch operand']
  %s0 = inlined_call_operand.hbm [shape: f32[64,128], index: 0, kind: input, shape index: {}]
  %s1 = inlined_call_operand.hbm [shape: bf16[128,2048], index: 1, kind: input, shape index: {}]
  %s2 = inlined_call_operand.hbm [shape: f32[1,2048], index: 2, kind: input, shape index: {}]
  %s3 = inlined_call_operand.hbm [shape: f32[16,128], index: 3, kind: input, shape index: {}]
  %s4 = inlined_call_operand.hbm [shape: f32[88,128], index: 4, kind: output, shape index: {}]
  %s5 = sld [smem:[#allocation0]]
  $region42: #{tpu_custom_call.1} parent=0
    _
  %s7 = ssub.s32 1, %s5
  %s8 = scalar_select 0, %s7, %s5
  $region1: #{tpu_custom_call.1} parent=0
    #allocation4 [shape = 'u8[32768]{0}', space=vmem, size = 0x8000, scoped, tag = 'input window, operand 0, single buffered']
    #allocation5 [shape = 's32[1]{0}', space=sflag, size = 0x4, scoped, tag = 'scoped memory for tpu_custom_call.1']
    #allocation6 [shape = 's32[1]{0}', space=sflag, size = 0x4, scoped, tag = 'scoped memory for tpu_custom_call.1']
    #allocation7 [shape = 'u8[524288]{0}', space=vmem, size = 0x80000, scoped, tag = 'input window, operand 1, single buffered']
    #allocation8 [shape = 's32[1]{0}', space=sflag, size = 0x4, scoped, tag = 'scoped memory for tpu_custom_call.1']
    #allocation9 [shape = 'u8[8192]{0}', space=vmem, size = 0x2000, scoped, tag = 'input window, operand 2, single buffered']
    #allocation10 [shape = 'u8[8192]{0}', space=vmem, size = 0x2000, scoped, tag = 'input window, operand 3, single buffered']
    #allocation11 [shape = 's32[1]{0}', space=sflag, size = 0x4, scoped, tag = 'scoped memory for tpu_custom_call.1']
    #allocation12 [shape = 'u8[45056]{0}', space=vmem, size = 0xb000, scoped, tag = 'output window, operand 0, single buffered']
    %9 = vsyncpa [#allocation5], 0
    %10 = vsyncpa [#allocation8], 0
    %11 = vsyncpa [#allocation11], 0
    %12 = vsyncpa [#allocation6], 0
    // Predicated region
    $region2: #{tpu_custom_call.1} parent=1 // pred_check
      _
    $region3: #{tpu_custom_call.1} parent=1 // pred_check_branch
      %14 = sbr.rel (0) target = $region5
    $region4: #{tpu_custom_call.1} parent=1 // pred_region
      %s16 = ssub.s32 1024, 1024
      %17 = vsyncadd [#allocation5], %s16
      %s18 = sshll.u32 [#allocation4], 4
      %s19 = int_to_ptr.vmem [resolvable:$true] %s18
      %24 = dma.hbm_to_vmem [thread:$0]  %s0, 1024, %s19, [#allocation5], 128, 128, 8
    $region5: #{tpu_custom_call.1} parent=1 // pred_fallthru
      _
    // Predicated region
    $region6: #{tpu_custom_call.1} parent=1 // pred_check
      _
    $region7: #{tpu_custom_call.1} parent=1 // pred_check_branch
      %26 = sbr.rel (0) target = $region9
    $region8: #{tpu_custom_call.1} parent=1 // pred_region
      %s28 = ssub.s32 16384, 16384
      %29 = vsyncadd [#allocation8], %s28
      %s30 = sshll.u32 [#allocation7], 4
      %s31 = int_to_ptr.vmem [resolvable:$true] %s30
      %36 = dma.hbm_to_vmem [thread:$0]  %s1, 16384, %s31, [#allocation8], 1024, 1024, 64
    $region9: #{tpu_custom_call.1} parent=1 // pred_fallthru
      _
    // Predicated region
    $region10: #{tpu_custom_call.1} parent=1 // pred_check
      _
    $region11: #{tpu_custom_call.1} parent=1 // pred_check_branch
      %38 = sbr.rel (0) target = $region13
    $region12: #{tpu_custom_call.1} parent=1 // pred_region
      %s40 = ssub.s32 256, 256
      %41 = vsyncadd [#allocation8], %s40
      %s43 = sshll.u32 [#allocation9], 4
      %s44 = int_to_ptr.vmem [resolvable:$true] %s43
      %46 = dma.hbm_to_vmem [thread:$0]  %s2, 256, %s44, [#allocation8]
    $region13: #{tpu_custom_call.1} parent=1 // pred_fallthru
      _
    // Predicated region
    $region14: #{tpu_custom_call.1} parent=1 // pred_check
      _
    $region15: #{tpu_custom_call.1} parent=1 // pred_check_branch
      %48 = sbr.rel (0) target = $region17
    $region16: #{tpu_custom_call.1} parent=1 // pred_region
      %s50 = ssub.s32 256, 256
      %51 = vsyncadd [#allocation11], %s50
      %s52 = sshll.u32 [#allocation10], 4
      %s53 = int_to_ptr.vmem [resolvable:$true] %s52
      %58 = dma.hbm_to_vmem [thread:$0]  %s3, 256, %s53, [#allocation11], 128, 128, 8
    $region17: #{tpu_custom_call.1} parent=1 // pred_fallthru
      _
    // Predicated region
    $region18: #{tpu_custom_call.1} parent=1 // pred_check
      _
    $region19: #{tpu_custom_call.1} parent=1 // pred_check_branch
      %60 = sbr.rel (0) target = $region21
    $region20: #{tpu_custom_call.1} parent=1 // pred_region
      %61 = dma.done [#allocation5], 1024
    $region21: #{tpu_custom_call.1} parent=1 // pred_fallthru
      _
    // Predicated region
    $region22: #{tpu_custom_call.1} parent=1 // pred_check
      _
    $region23: #{tpu_custom_call.1} parent=1 // pred_check_branch
      %63 = sbr.rel (0) target = $region25
    $region24: #{tpu_custom_call.1} parent=1 // pred_region
      %64 = dma.done [#allocation8], 16384
    $region25: #{tpu_custom_call.1} parent=1 // pred_fallthru
      _
    // Predicated region
    $region26: #{tpu_custom_call.1} parent=1 // pred_check
      _
    $region27: #{tpu_custom_call.1} parent=1 // pred_check_branch
      %66 = sbr.rel (0) target = $region29
    $region28: #{tpu_custom_call.1} parent=1 // pred_region
      %67 = dma.done [#allocation8], 256
    $region29: #{tpu_custom_call.1} parent=1 // pred_fallthru
      _
    // Predicated region
    $region30: #{tpu_custom_call.1} parent=1 // pred_check
      _
    $region31: #{tpu_custom_call.1} parent=1 // pred_check_branch
      %69 = sbr.rel (0) target = $region33
    $region32: #{tpu_custom_call.1} parent=1 // pred_region
      %70 = dma.done [#allocation11], 256
    $region33: #{tpu_custom_call.1} parent=1 // pred_fallthru
      _
    %v72 = vld [vmem:[#allocation4] sm:$0xff]
    %v73 = vld [vmem:[#allocation4 + $0x8] sm:$0xff]
    %v74 = vld [vmem:[#allocation4 + $0x10] sm:$0xff]
    %v75 = vld [vmem:[#allocation4 + $0x18] sm:$0xff]
    %v76 = vld [vmem:[#allocation4 + $0x20] sm:$0xff]
    %v77 = vld [vmem:[#allocation4 + $0x28] sm:$0xff]
    %v78 = vld [vmem:[#allocation4 + $0x30] sm:$0xff]
    %v79 = vld [vmem:[#allocation4 + $0x38] sm:$0xff]
    %v80 = vpack.c.bf16 %v73, %v72
    %v81 = vpack.c.bf16 %v75, %v74
    %v82 = vpack.c.bf16 %v77, %v76
    %v83 = vpack.c.bf16 %v79, %v78
    %v84 = vld [vmem:[#allocation7] sm:$0xff]
    %v85 = vld [vmem:[#allocation7 + $0x8] sm:$0xf]
    %v86 = vld [vmem:[#allocation7 + $0x40] sm:$0xff]
    %v87 = vld [vmem:[#allocation7 + $0x48] sm:$0xf]
    %v88 = vld [vmem:[#allocation7 + $0x80] sm:$0xff]
    %v89 = vld [vmem:[#allocation7 + $0x88] sm:$0xf]
    %v90 = vld [vmem:[#allocation7 + $0xc0] sm:$0xff]
    %v91 = vld [vmem:[#allocation7 + $0xc8] sm:$0xf]
    %v92 = vld [vmem:[#allocation7 + $0x100] sm:$0xff]
    %v93 = vld [vmem:[#allocation7 + $0x108] sm:$0xf]
    %v94 = vld [vmem:[#allocation7 + $0x140] sm:$0xff]
    %v95 = vld [vmem:[#allocation7 + $0x148] sm:$0xf]
    %v96 = vld [vmem:[#allocation7 + $0x180] sm:$0xff]
    %v97 = vld [vmem:[#allocation7 + $0x188] sm:$0xf]
    %v98 = vld [vmem:[#allocation7 + $0x1c0] sm:$0xff]
    %v99 = vld [vmem:[#allocation7 + $0x1c8] sm:$0xf]
    %v100 = vld [vmem:[#allocation7 + $0x200] sm:$0xff]
    %v101 = vld [vmem:[#allocation7 + $0x208] sm:$0xf]
    %v102 = vld [vmem:[#allocation7 + $0x240] sm:$0xff]
    %v103 = vld [vmem:[#allocation7 + $0x248] sm:$0xf]
    %v104 = vld [vmem:[#allocation7 + $0x280] sm:$0xff]
    %v105 = vld [vmem:[#allocation7 + $0x288] sm:$0xf]
    %v106 = vld [vmem:[#allocation7 + $0x2c0] sm:$0xff]
    %v107 = vld [vmem:[#allocation7 + $0x2c8] sm:$0xf]
    %v108 = vld [vmem:[#allocation7 + $0x300] sm:$0xff]
    %v109 = vld [vmem:[#allocation7 + $0x308] sm:$0xf]
    %v110 = vld [vmem:[#allocation7 + $0x340] sm:$0xff]
    %v111 = vld [vmem:[#allocation7 + $0x348] sm:$0xf]
    %v112 = vld [vmem:[#allocation7 + $0x380] sm:$0xff]
    %v113 = vld [vmem:[#allocation7 + $0x388] sm:$0xf]
    %v114 = vld [vmem:[#allocation7 + $0x3c0] sm:$0xff]
    %v115 = vld [vmem:[#allocation7 + $0x3c8] sm:$0xf]
    %v116 = vld [vmem:[#allocation9] sm:$0x7]
    %v118 = vlaneseq
    %v119 = vshrl.u32 %v118, 7
    %v120 = vsub.s32 0, %v119
    %v121 = vrot.slane %v116, %v120
    %v122 = vlaneseq
    %v123 = vshrl.u32 %v122, 7
    %v124 = vsub.s32 1, %v123
    %v125 = vrot.slane %v116, %v124
    %v126 = vlaneseq
    %v127 = vshrl.u32 %v126, 7
    %v128 = vsub.s32 2, %v127
    %v129 = vrot.slane %v116, %v128
    %v165 = vunpack.c.l.b16 %v84
    %v166 = vunpack.c.h.b16 %v84
    %v167 = vunpack.c.l.b16 %v85
    %v168 = vunpack.c.l.b16 %v86
    %v169 = vunpack.c.h.b16 %v86
    %v170 = vunpack.c.l.b16 %v87
    %v171 = vunpack.c.l.b16 %v88
    %v172 = vunpack.c.h.b16 %v88
    %v173 = vunpack.c.l.b16 %v89
    %v174 = vunpack.c.l.b16 %v90
    %v175 = vunpack.c.h.b16 %v90
    %v176 = vunpack.c.l.b16 %v91
    %v177 = vunpack.c.l.b16 %v92
    %v178 = vunpack.c.h.b16 %v92
    %v179 = vunpack.c.l.b16 %v93
    %v180 = vunpack.c.l.b16 %v94
    %v181 = vunpack.c.h.b16 %v94
    %v182 = vunpack.c.l.b16 %v95
    %v183 = vunpack.c.l.b16 %v96
    %v184 = vunpack.c.h.b16 %v96
    %v185 = vunpack.c.l.b16 %v97
    %v186 = vunpack.c.l.b16 %v98
    %v187 = vunpack.c.h.b16 %v98
    %v188 = vunpack.c.l.b16 %v99
    %v189 = vunpack.c.l.b16 %v100
    %v190 = vunpack.c.h.b16 %v100
    %v191 = vunpack.c.l.b16 %v101
    %v192 = vunpack.c.l.b16 %v102
    %v193 = vunpack.c.h.b16 %v102
    %v194 = vunpack.c.l.b16 %v103
    %v195 = vunpack.c.l.b16 %v104
    %v196 = vunpack.c.h.b16 %v104
    %v197 = vunpack.c.l.b16 %v105
    %v198 = vunpack.c.l.b16 %v106
    %v199 = vunpack.c.h.b16 %v106
    %v200 = vunpack.c.l.b16 %v107
    %v201 = vunpack.c.l.b16 %v108
    %v202 = vunpack.c.h.b16 %v108
    %v203 = vunpack.c.l.b16 %v109
    %v204 = vunpack.c.l.b16 %v110
    %v205 = vunpack.c.h.b16 %v110
    %v206 = vunpack.c.l.b16 %v111
    %v207 = vunpack.c.l.b16 %v112
    %v208 = vunpack.c.h.b16 %v112
    %v209 = vunpack.c.l.b16 %v113
    %v210 = vunpack.c.l.b16 %v114
    %v211 = vunpack.c.h.b16 %v114
    %v212 = vunpack.c.l.b16 %v115
    %v213 = vpack.c.b16 %v168, %v165
    %v214 = vpack.c.b16 %v169, %v166
    %v215 = vpack.c.b16 %v170, %v167
    %v216 = vpack.c.b16 %v174, %v171
    %v217 = vpack.c.b16 %v175, %v172
    %v218 = vpack.c.b16 %v176, %v173
    %v219 = vpack.c.b16 %v180, %v177
    %v220 = vpack.c.b16 %v181, %v178
    %v221 = vpack.c.b16 %v182, %v179
    %v222 = vpack.c.b16 %v186, %v183
    %v223 = vpack.c.b16 %v187, %v184
    %v224 = vpack.c.b16 %v188, %v185
    %v225 = vpack.c.b16 %v192, %v189
    %v226 = vpack.c.b16 %v193, %v190
    %v227 = vpack.c.b16 %v194, %v191
    %v228 = vpack.c.b16 %v198, %v195
    %v229 = vpack.c.b16 %v199, %v196
    %v230 = vpack.c.b16 %v200, %v197
    %v231 = vpack.c.b16 %v204, %v201
    %v232 = vpack.c.b16 %v205, %v202
    %v233 = vpack.c.b16 %v206, %v203
    %v234 = vpack.c.b16 %v210, %v207
    %v235 = vpack.c.b16 %v211, %v208
    %v236 = vpack.c.b16 %v212, %v209
    %261 = vmatprep.subr.bf16.mxu0 %v214
    %262 = vmatpush1.bf16.msra.mxu0 %v213
    %263 = vmatprep.subr.bf16.mxu0 %v217
    %264 = vmatpush1.bf16.msra.mxu0 %v216
    %265 = vmatprep.subr.bf16.mxu0 %v220
    %266 = vmatpush1.bf16.msra.mxu0 %v219
    %267 = vmatprep.subr.bf16.mxu0 %v223
    %268 = vmatpush1.bf16.msra.mxu0 %v222
    %269 = vmatprep.subr.bf16.mxu0 %v226
    %270 = vmatpush1.bf16.msra.mxu0 %v225
    %271 = vmatprep.subr.bf16.mxu0 %v229
    %272 = vmatpush1.bf16.msra.mxu0 %v228
    %273 = vmatprep.subr.bf16.mxu0 %v232
    %274 = vmatpush1.bf16.msra.mxu0 %v231
    %275 = vmatprep.subr.bf16.mxu0 %v235
    %276 = vmatpush1.bf16.msra.mxu0 %v234
    %277 = vmatprep.subr.bf16.mxu0 0
    %278 = vmatpush1.bf16.msra.mxu0 0
    %279 = vmatprep.subr.bf16.mxu0 0
    %280 = vmatpush1.bf16.msra.mxu0 0
    %281 = vmatprep.subr.bf16.mxu0 0
    %282 = vmatpush1.bf16.msra.mxu0 0
    %283 = vmatprep.subr.bf16.mxu0 0
    %284 = vmatpush1.bf16.msra.mxu0 0
    %285 = vmatprep.subr.bf16.mxu0 0
    %286 = vmatpush1.bf16.msra.mxu0 0
    %287 = vmatprep.subr.bf16.mxu0 0
    %288 = vmatpush1.bf16.msra.mxu0 0
    %289 = vmatprep.subr.bf16.mxu0 0
    %290 = vmatpush1.bf16.msra.mxu0 0
    %291 = vmatprep.subr.bf16.mxu0 0
    %292 = vmatpush1.bf16.msra.mxu0 0
    %293 = vmatprep.mubr.bf16.mxu0 0
    %294 = vmatmul.mubr.bf16.gmra.mrb[0].mxu0 %v80
    %v295 = vpop.f32.mrb[0].mxu0
    %v296 = vadd.f32 %v121, %v295
    %v297 = vpop.f32.mrb[0].mxu0
    %v298 = vadd.f32 %v125, %v297
    %v299 = vpop.f32.mrb[0].mxu0
    %v300 = vadd.f32 %v121, %v299
    %v301 = vpop.f32.mrb[0].mxu0
    %v302 = vadd.f32 %v125, %v301
    %303 = vmatprep.mubr.bf16.mxu0 0
    %304 = vmatmul.mubr.bf16.gmra.mrb[0].mxu0 %v81
    %v305 = vpop.f32.mrb[0].mxu0
    %v306 = vadd.f32 %v121, %v305
    %v307 = vpop.f32.mrb[0].mxu0
    %v308 = vadd.f32 %v125, %v307
    %v309 = vpop.f32.mrb[0].mxu0
    %v310 = vadd.f32 %v121, %v309
    %v311 = vpop.f32.mrb[0].mxu0
    %v312 = vadd.f32 %v125, %v311
    %313 = vmatprep.mubr.bf16.mxu0 0
    %314 = vmatmul.mubr.bf16.gmra.mrb[0].mxu0 %v82
    %v315 = vpop.f32.mrb[0].mxu0
    %v316 = vadd.f32 %v121, %v315
    %v317 = vpop.f32.mrb[0].mxu0
    %v318 = vadd.f32 %v125, %v317
    %v319 = vpop.f32.mrb[0].mxu0
    %v320 = vadd.f32 %v121, %v319
    %v321 = vpop.f32.mrb[0].mxu0
    %v322 = vadd.f32 %v125, %v321
    %323 = vmatprep.mubr.bf16.mxu0 0
    %324 = vmatmul.mubr.bf16.gmra.mrb[0].mxu0 %v83
    %v325 = vpop.f32.mrb[0].mxu0
    %v326 = vadd.f32 %v121, %v325
    %v327 = vpop.f32.mrb[0].mxu0
    %v328 = vadd.f32 %v125, %v327
    %v329 = vpop.f32.mrb[0].mxu0
    %v330 = vadd.f32 %v121, %v329
    %v331 = vpop.f32.mrb[0].mxu0
    %v332 = vadd.f32 %v125, %v331
    %333 = vdwg.mxu0
    %334 = vmatprep.subr.bf16.mxu0 0
    %335 = vmatpush1.bf16.msra.mxu0 %v215
    %336 = vmatprep.subr.bf16.mxu0 0
    %337 = vmatpush1.bf16.msra.mxu0 %v218
    %338 = vmatprep.subr.bf16.mxu0 0
    %339 = vmatpush1.bf16.msra.mxu0 %v221
    %340 = vmatprep.subr.bf16.mxu0 0
    %341 = vmatpush1.bf16.msra.mxu0 %v224
    %342 = vmatprep.subr.bf16.mxu0 0
    %343 = vmatpush1.bf16.msra.mxu0 %v227
    %344 = vmatprep.subr.bf16.mxu0 0
    %345 = vmatpush1.bf16.msra.mxu0 %v230
    %346 = vmatprep.subr.bf16.mxu0 0
    %347 = vmatpush1.bf16.msra.mxu0 %v233
    %348 = vmatprep.subr.bf16.mxu0 0
    %349 = vmatpush1.bf16.msra.mxu0 %v236
    %350 = vmatprep.subr.bf16.mxu0 0
    %351 = vmatpush1.bf16.msra.mxu0 0
    %352 = vmatprep.subr.bf16.mxu0 0
    %353 = vmatpush1.bf16.msra.mxu0 0
    %354 = vmatprep.subr.bf16.mxu0 0
    %355 = vmatpush1.bf16.msra.mxu0 0
    %356 = vmatprep.subr.bf16.mxu0 0
    %357 = vmatpush1.bf16.msra.mxu0 0
    %358 = vmatprep.subr.bf16.mxu0 0
    %359 = vmatpush1.bf16.msra.mxu0 0
    %360 = vmatprep.subr.bf16.mxu0 0
    %361 = vmatpush1.bf16.msra.mxu0 0
    %362 = vmatprep.subr.bf16.mxu0 0
    %363 = vmatpush1.bf16.msra.mxu0 0
    %364 = vmatprep.subr.bf16.mxu0 0
    %365 = vmatpush1.bf16.msra.mxu0 0
    %366 = vmatprep.mubr.bf16.mxu0 0
    %367 = vmatmul.mubr.bf16.gmra.mrb[0].mxu0 %v80
    %v368 = vpop.f32.mrb[0].mxu0
    %v369 = vadd.f32 %v129, %v368
    %v370 = vpop.f32.mrb[0].mxu0
    %v371 = vpop.f32.mrb[0].mxu0
    %v372 = vadd.f32 %v129, %v371
    %v373 = vpop.f32.mrb[0].mxu0
    %374 = vmatprep.mubr.bf16.mxu0 0
    %375 = vmatmul.mubr.bf16.gmra.mrb[0].mxu0 %v81
    %v376 = vpop.f32.mrb[0].mxu0
    %v377 = vadd.f32 %v129, %v376
    %v378 = vpop.f32.mrb[0].mxu0
    %v379 = vpop.f32.mrb[0].mxu0
    %v380 = vadd.f32 %v129, %v379
    %v381 = vpop.f32.mrb[0].mxu0
    %382 = vmatprep.mubr.bf16.mxu0 0
    %383 = vmatmul.mubr.bf16.gmra.mrb[0].mxu0 %v82
    %v384 = vpop.f32.mrb[0].mxu0
    %v385 = vadd.f32 %v129, %v384
    %v386 = vpop.f32.mrb[0].mxu0
    %v387 = vpop.f32.mrb[0].mxu0
    %v388 = vadd.f32 %v129, %v387
    %v389 = vpop.f32.mrb[0].mxu0
    %390 = vmatprep.mubr.bf16.mxu0 0
    %391 = vmatmul.mubr.bf16.gmra.mrb[0].mxu0 %v83
    %v392 = vpop.f32.mrb[0].mxu0
    %v393 = vadd.f32 %v129, %v392
    %v394 = vpop.f32.mrb[0].mxu0
    %v395 = vpop.f32.mrb[0].mxu0
    %v396 = vadd.f32 %v129, %v395
    %v397 = vpop.f32.mrb[0].mxu0
    %398 = vdwg.mxu0
    %399 = vst [vmem:[#allocation2] sm:$0xff] %v296
    %400 = vst [vmem:[#allocation2 + $0x8] sm:$0xff] %v298
    %401 = vst [vmem:[#allocation2 + $0x10] sm:$0xff] %v369
    %402 = vst [vmem:[#allocation2 + $0x18] sm:$0xff] %v300
    %403 = vst [vmem:[#allocation2 + $0x20] sm:$0xff] %v302
    %404 = vst [vmem:[#allocation2 + $0x28] sm:$0xff] %v372
    %405 = vst [vmem:[#allocation2 + $0x30] sm:$0xff] %v306
    %406 = vst [vmem:[#allocation2 + $0x38] sm:$0xff] %v308
    %407 = vst [vmem:[#allocation2 + $0x40] sm:$0xff] %v377
    %408 = vst [vmem:[#allocation2 + $0x48] sm:$0xff] %v310
    %409 = vst [vmem:[#allocation2 + $0x50] sm:$0xff] %v312
    %410 = vst [vmem:[#allocation2 + $0x58] sm:$0xff] %v380
    %411 = vst [vmem:[#allocation2 + $0x60] sm:$0xff] %v316
    %412 = vst [vmem:[#allocation2 + $0x68] sm:$0xff] %v318
    %413 = vst [vmem:[#allocation2 + $0x70] sm:$0xff] %v385
    %414 = vst [vmem:[#allocation2 + $0x78] sm:$0xff] %v320
    %415 = vst [vmem:[#allocation2 + $0x80] sm:$0xff] %v322
    %416 = vst [vmem:[#allocation2 + $0x88] sm:$0xff] %v388
    %417 = vst [vmem:[#allocation2 + $0x90] sm:$0xff] %v326
    %418 = vst [vmem:[#allocation2 + $0x98] sm:$0xff] %v328
    %419 = vst [vmem:[#allocation2 + $0xa0] sm:$0xff] %v393
    %420 = vst [vmem:[#allocation2 + $0xa8] sm:$0xff] %v330
    %421 = vst [vmem:[#allocation2 + $0xb0] sm:$0xff] %v332
    %422 = vst [vmem:[#allocation2 + $0xb8] sm:$0xff] %v396
    %v423 = vld [vmem:[#allocation7 + $0xc] sm:$0xff]
    %v424 = vld [vmem:[#allocation7 + $0x14] sm:$0xf]
    %v425 = vld [vmem:[#allocation7 + $0x4c] sm:$0xff]
    %v426 = vld [vmem:[#allocation7 + $0x54] sm:$0xf]
    %v427 = vld [vmem:[#allocation7 + $0x8c] sm:$0xff]
    %v428 = vld [vmem:[#allocation7 + $0x94] sm:$0xf]
    %v429 = vld [vmem:[#allocation7 + $0xcc] sm:$0xff]
    %v430 = vld [vmem:[#allocation7 + $0xd4] sm:$0xf]
    %v431 = vld [vmem:[#allocation7 + $0x10c] sm:$0xff]
    %v432 = vld [vmem:[#allocation7 + $0x114] sm:$0xf]
    %v433 = vld [vmem:[#allocation7 + $0x14c] sm:$0xff]
    %v434 = vld [vmem:[#allocation7 + $0x154] sm:$0xf]
    %v435 = vld [vmem:[#allocation7 + $0x18c] sm:$0xff]
    %v436 = vld [vmem:[#allocation7 + $0x194] sm:$0xf]
    %v437 = vld [vmem:[#allocation7 + $0x1cc] sm:$0xff]
    %v438 = vld [vmem:[#allocation7 + $0x1d4] sm:$0xf]
    %v439 = vld [vmem:[#allocation7 + $0x20c] sm:$0xff]
    %v440 = vld [vmem:[#allocation7 + $0x214] sm:$0xf]
    %v441 = vld [vmem:[#allocation7 + $0x24c] sm:$0xff]
    %v442 = vld [vmem:[#allocation7 + $0x254] sm:$0xf]
    %v443 = vld [vmem:[#allocation7 + $0x28c] sm:$0xff]
    %v444 = vld [vmem:[#allocation7 + $0x294] sm:$0xf]
    %v445 = vld [vmem:[#allocation7 + $0x2cc] sm:$0xff]
    %v446 = vld [vmem:[#allocation7 + $0x2d4] sm:$0xf]
    %v447 = vld [vmem:[#allocation7 + $0x30c] sm:$0xff]
    %v448 = vld [vmem:[#allocation7 + $0x314] sm:$0xf]
    %v449 = vld [vmem:[#allocation7 + $0x34c] sm:$0xff]
    %v450 = vld [vmem:[#allocation7 + $0x354] sm:$0xf]
    %v451 = vld [vmem:[#allocation7 + $0x38c] sm:$0xff]
    %v452 = vld [vmem:[#allocation7 + $0x394] sm:$0xf]
    %v453 = vld [vmem:[#allocation7 + $0x3cc] sm:$0xff]
    %v454 = vld [vmem:[#allocation7 + $0x3d4] sm:$0xf]
    %v455 = vld [vmem:[#allocation9 + $0x3] sm:$0x7]
    %v457 = vlaneseq
    %v458 = vshrl.u32 %v457, 7
    %v459 = vsub.s32 0, %v458
    %v460 = vrot.slane %v455, %v459
    %v461 = vlaneseq
    %v462 = vshrl.u32 %v461, 7
    %v463 = vsub.s32 1, %v462
    %v464 = vrot.slane %v455, %v463
    %v465 = vlaneseq
    %v466 = vshrl.u32 %v465, 7
    %v467 = vsub.s32 2, %v466
    %v468 = vrot.slane %v455, %v467
    %v472 = vld [vmem:[#allocation2] sm:$0xff]
    %v473 = vld [vmem:[#allocation2 + $0x8] sm:$0xff]
    %v474 = vld [vmem:[#allocation2 + $0x10] sm:$0xff]
    %v507 = vunpack.c.l.b16 %v423
    %v508 = vunpack.c.h.b16 %v423
    %v509 = vunpack.c.l.b16 %v424
    %v510 = vunpack.c.l.b16 %v425
    %v511 = vunpack.c.h.b16 %v425
    %v512 = vunpack.c.l.b16 %v426
    %v513 = vunpack.c.l.b16 %v427
    %v514 = vunpack.c.h.b16 %v427
    %v515 = vunpack.c.l.b16 %v428
    %v516 = vunpack.c.l.b16 %v429
    %v517 = vunpack.c.h.b16 %v429
    %v518 = vunpack.c.l.b16 %v430
    %v519 = vunpack.c.l.b16 %v431
    %v520 = vunpack.c.h.b16 %v431
    %v521 = vunpack.c.l.b16 %v432
    %v522 = vunpack.c.l.b16 %v433
    %v523 = vunpack.c.h.b16 %v433
    %v524 = vunpack.c.l.b16 %v434
    %v525 = vunpack.c.l.b16 %v435
    %v526 = vunpack.c.h.b16 %v435
    %v527 = vunpack.c.l.b16 %v436
    %v528 = vunpack.c.l.b16 %v437
    %v529 = vunpack.c.h.b16 %v437
    %v530 = vunpack.c.l.b16 %v438
    %v531 = vunpack.c.l.b16 %v439
    %v532 = vunpack.c.h.b16 %v439
    %v533 = vunpack.c.l.b16 %v440
    %v534 = vunpack.c.l.b16 %v441
    %v535 = vunpack.c.h.b16 %v441
    %v536 = vunpack.c.l.b16 %v442
    %v537 = vunpack.c.l.b16 %v443
    %v538 = vunpack.c.h.b16 %v443
    %v539 = vunpack.c.l.b16 %v444
    %v540 = vunpack.c.l.b16 %v445
    %v541 = vunpack.c.h.b16 %v445
    %v542 = vunpack.c.l.b16 %v446
    %v543 = vunpack.c.l.b16 %v447
    %v544 = vunpack.c.h.b16 %v447
    %v545 = vunpack.c.l.b16 %v448
    %v546 = vunpack.c.l.b16 %v449
    %v547 = vunpack.c.h.b16 %v449
    %v548 = vunpack.c.l.b16 %v450
    %v549 = vunpack.c.l.b16 %v451
    %v550 = vunpack.c.h.b16 %v451
    %v551 = vunpack.c.l.b16 %v452
    %v552 = vunpack.c.l.b16 %v453
    %v553 = vunpack.c.h.b16 %v453
    %v554 = vunpack.c.l.b16 %v454
    %v555 = vpack.c.b16 %v510, %v507
    %v556 = vpack.c.b16 %v511, %v508
    %v557 = vpack.c.b16 %v512, %v509
    %v558 = vpack.c.b16 %v516, %v513
    %v559 = vpack.c.b16 %v517, %v514
    %v560 = vpack.c.b16 %v518, %v515
    %v561 = vpack.c.b16 %v522, %v519
    %v562 = vpack.c.b16 %v523, %v520
    %v563 = vpack.c.b16 %v524, %v521
    %v564 = vpack.c.b16 %v528, %v525
    %v565 = vpack.c.b16 %v529, %v526
    %v566 = vpack.c.b16 %v530, %v527
    %v567 = vpack.c.b16 %v534, %v531
    %v568 = vpack.c.b16 %v535, %v532
    %v569 = vpack.c.b16 %v536, %v533
    %v570 = vpack.c.b16 %v540, %v537
    %v571 = vpack.c.b16 %v541, %v538
    %v572 = vpack.c.b16 %v542, %v539
    %v573 = vpack.c.b16 %v546, %v543
    %v574 = vpack.c.b16 %v547, %v544
    %v575 = vpack.c.b16 %v548, %v545
    %v576 = vpack.c.b16 %v552, %v549
    %v577 = vpack.c.b16 %v553, %v550
    %v578 = vpack.c.b16 %v554, %v551
    %603 = vmatprep.subr.bf16.mxu0 %v556
    %604 = vmatpush1.bf16.msra.mxu0 %v555
    %605 = vmatprep.subr.bf16.mxu0 %v559
    %606 = vmatpush1.bf16.msra.mxu0 %v558
    %607 = vmatprep.subr.bf16.mxu0 %v562
    %608 = vmatpush1.bf16.msra.mxu0 %v561
    %609 = vmatprep.subr.bf16.mxu0 %v565
    %610 = vmatpush1.bf16.msra.mxu0 %v564
    %611 = vmatprep.subr.bf16.mxu0 %v568
    %612 = vmatpush1.bf16.msra.mxu0 %v567
    %613 = vmatprep.subr.bf16.mxu0 %v571
    %614 = vmatpush1.bf16.msra.mxu0 %v570
    %615 = vmatprep.subr.bf16.mxu0 %v574
    %616 = vmatpush1.bf16.msra.mxu0 %v573
    %617 = vmatprep.subr.bf16.mxu0 %v577
    %618 = vmatpush1.bf16.msra.mxu0 %v576
    %619 = vmatprep.subr.bf16.mxu0 0
    %620 = vmatpush1.bf16.msra.mxu0 0
    %621 = vmatprep.subr.bf16.mxu0 0
    %622 = vmatpush1.bf16.msra.mxu0 0
    %623 = vmatprep.subr.bf16.mxu0 0
    %624 = vmatpush1.bf16.msra.mxu0 0
    %625 = vmatprep.subr.bf16.mxu0 0
    %626 = vmatpush1.bf16.msra.mxu0 0
    %627 = vmatprep.subr.bf16.mxu0 0
    %628 = vmatpush1.bf16.msra.mxu0 0
    %629 = vmatprep.subr.bf16.mxu0 0
    %630 = vmatpush1.bf16.msra.mxu0 0
    %631 = vmatprep.subr.bf16.mxu0 0
    %632 = vmatpush1.bf16.msra.mxu0 0
    %633 = vmatprep.subr.bf16.mxu0 0
    %634 = vmatpush1.bf16.msra.mxu0 0
    %635 = vmatprep.mubr.bf16.mxu0 0
    %636 = vmatmul.mubr.bf16.gmra.mrb[0].mxu0 0
    %v637 = vpop.f32.mrb[0].mxu0
    %v638 = vadd.f32 %v460, %v637
    %v639 = vpop.f32.mrb[0].mxu0
    %v640 = vadd.f32 %v464, %v639
    %v641 = vpop.f32.mrb[0].mxu0
    %v642 = vpop.f32.mrb[0].mxu0
    %643 = vdwg.mxu0
    %644 = vmatprep.subr.bf16.mxu0 0
    %645 = vmatpush1.bf16.msra.mxu0 %v557
    %646 = vmatprep.subr.bf16.mxu0 0
    %647 = vmatpush1.bf16.msra.mxu0 %v560
    %648 = vmatprep.subr.bf16.mxu0 0
    %649 = vmatpush1.bf16.msra.mxu0 %v563
    %650 = vmatprep.subr.bf16.mxu0 0
    %651 = vmatpush1.bf16.msra.mxu0 %v566
    %652 = vmatprep.subr.bf16.mxu0 0
    %653 = vmatpush1.bf16.msra.mxu0 %v569
    %654 = vmatprep.subr.bf16.mxu0 0
    %655 = vmatpush1.bf16.msra.mxu0 %v572
    %656 = vmatprep.subr.bf16.mxu0 0
    %657 = vmatpush1.bf16.msra.mxu0 %v575
    %658 = vmatprep.subr.bf16.mxu0 0
    %659 = vmatpush1.bf16.msra.mxu0 %v578
    %660 = vmatprep.subr.bf16.mxu0 0
    %661 = vmatpush1.bf16.msra.mxu0 0
    %662 = vmatprep.subr.bf16.mxu0 0
    %663 = vmatpush1.bf16.msra.mxu0 0
    %664 = vmatprep.subr.bf16.mxu0 0
    %665 = vmatpush1.bf16.msra.mxu0 0
    %666 = vmatprep.subr.bf16.mxu0 0
    %667 = vmatpush1.bf16.msra.mxu0 0
    %668 = vmatprep.subr.bf16.mxu0 0
    %669 = vmatpush1.bf16.msra.mxu0 0
    %670 = vmatprep.subr.bf16.mxu0 0
    %671 = vmatpush1.bf16.msra.mxu0 0
    %672 = vmatprep.subr.bf16.mxu0 0
    %673 = vmatpush1.bf16.msra.mxu0 0
    %674 = vmatprep.subr.bf16.mxu0 0
    %675 = vmatpush1.bf16.msra.mxu0 0
    %676 = vmatprep.mubr.bf16.mxu0 0
    %677 = vmatmul.mubr.bf16.gmra.mrb[0].mxu0 0
    %v678 = vpop.f32.mrb[0].mxu0
    %v679 = vadd.f32 %v468, %v678
    %v680 = vpop.f32.mrb[0].mxu0
    %v681 = vpop.f32.mrb[0].mxu0
    %v682 = vpop.f32.mrb[0].mxu0
    %683 = vdwg.mxu0
    %v684 = vadd.f32 %v472, %v638
    %v685 = vxor.u32 %v684, 2147483648
    %v686 = vmul.f32 %v685, 1.442695
    %v687 = vpow.pop %v686
    %v688 = vadd.f32 %v687, 1.0
    %v689 = vrcp.pop %v688
    %v690 = vmul.f32 1.0, %v689
    %v691 = vadd.f32 %v473, %v640
    %v692 = vxor.u32 %v691, 2147483648
    %v693 = vmul.f32 %v692, 1.442695
    %v694 = vpow.pop %v693
    %v695 = vadd.f32 %v694, 1.0
    %v696 = vrcp.pop %v695
    %v697 = vmul.f32 1.0, %v696
    %v698 = vmul.f32 %v690, %v679
    %v699 = vadd.f32 %v474, %v698
    %v700 = vtanh.pop %v699
    %v701 = vsub.f32 1.0, %v697
    %v702 = vmul.f32 %v701, %v700
    %v703 = vmul.f32 %v697, 0.0
    %v704 = vadd.f32 %v702, %v703
    %v705 = vld [vmem:[#allocation2 + $0x18] sm:$0xff]
    %v706 = vld [vmem:[#allocation2 + $0x20] sm:$0xff]
    %v707 = vld [vmem:[#allocation2 + $0x28] sm:$0xff]
    %v708 = vpack.c.bf16 %v704, %v704
    %709 = vmatprep.subr.bf16.mxu0 %v556
    %710 = vmatpush1.bf16.msra.mxu0 %v555
    %711 = vmatprep.subr.bf16.mxu0 %v559
    %712 = vmatpush1.bf16.msra.mxu0 %v558
    %713 = vmatprep.subr.bf16.mxu0 %v562
    %714 = vmatpush1.bf16.msra.mxu0 %v561
    %715 = vmatprep.subr.bf16.mxu0 %v565
    %716 = vmatpush1.bf16.msra.mxu0 %v564
    %717 = vmatprep.subr.bf16.mxu0 %v568
    %718 = vmatpush1.bf16.msra.mxu0 %v567
    %719 = vmatprep.subr.bf16.mxu0 %v571
    %720 = vmatpush1.bf16.msra.mxu0 %v570
    %721 = vmatprep.subr.bf16.mxu0 %v574
    %722 = vmatpush1.bf16.msra.mxu0 %v573
    %723 = vmatprep.subr.bf16.mxu0 %v577
    %724 = vmatpush1.bf16.msra.mxu0 %v576
    %725 = vmatprep.subr.bf16.mxu0 0
    %726 = vmatpush1.bf16.msra.mxu0 0
    %727 = vmatprep.subr.bf16.mxu0 0
    %728 = vmatpush1.bf16.msra.mxu0 0
    %729 = vmatprep.subr.bf16.mxu0 0
    %730 = vmatpush1.bf16.msra.mxu0 0
    %731 = vmatprep.subr.bf16.mxu0 0
    %732 = vmatpush1.bf16.msra.mxu0 0
    %733 = vmatprep.subr.bf16.mxu0 0
    %734 = vmatpush1.bf16.msra.mxu0 0
    %735 = vmatprep.subr.bf16.mxu0 0
    %736 = vmatpush1.bf16.msra.mxu0 0
    %737 = vmatprep.subr.bf16.mxu0 0
    %738 = vmatpush1.bf16.msra.mxu0 0
    %739 = vmatprep.subr.bf16.mxu0 0
    %740 = vmatpush1.bf16.msra.mxu0 0
    %741 = vmatprep.mubr.bf16.mxu0 0
    %742 = vmatmul.mubr.bf16.gmra.mrb[0].mxu0 %v708
    %v743 = vpop.f32.mrb[0].mxu0
    %v744 = vadd.f32 %v460, %v743
    %v745 = vpop.f32.mrb[0].mxu0
    %v746 = vadd.f32 %v464, %v745
    %v747 = vpop.f32.mrb[0].mxu0
    %v748 = vpop.f32.mrb[0].mxu0
    %749 = vdwg.mxu0
    %750 = vmatprep.subr.bf16.mxu0 0
    %751 = vmatpush1.bf16.msra.mxu0 %v557
    %752 = vmatprep.subr.bf16.mxu0 0
    %753 = vmatpush1.bf16.msra.mxu0 %v560
    %754 = vmatprep.subr.bf16.mxu0 0
    %755 = vmatpush1.bf16.msra.mxu0 %v563
    %756 = vmatprep.subr.bf16.mxu0 0
    %757 = vmatpush1.bf16.msra.mxu0 %v566
    %758 = vmatprep.subr.bf16.mxu0 0
    %759 = vmatpush1.bf16.msra.mxu0 %v569
    %760 = vmatprep.subr.bf16.mxu0 0
    %761 = vmatpush1.bf16.msra.mxu0 %v572
    %762 = vmatprep.subr.bf16.mxu0 0
    %763 = vmatpush1.bf16.msra.mxu0 %v575
    %764 = vmatprep.subr.bf16.mxu0 0
    %765 = vmatpush1.bf16.msra.mxu0 %v578
    %766 = vmatprep.subr.bf16.mxu0 0
    %767 = vmatpush1.bf16.msra.mxu0 0
    %768 = vmatprep.subr.bf16.mxu0 0
    %769 = vmatpush1.bf16.msra.mxu0 0
    %770 = vmatprep.subr.bf16.mxu0 0
    %771 = vmatpush1.bf16.msra.mxu0 0
    %772 = vmatprep.subr.bf16.mxu0 0
    %773 = vmatpush1.bf16.msra.mxu0 0
    %774 = vmatprep.subr.bf16.mxu0 0
    %775 = vmatpush1.bf16.msra.mxu0 0
    %776 = vmatprep.subr.bf16.mxu0 0
    %777 = vmatpush1.bf16.msra.mxu0 0
    %778 = vmatprep.subr.bf16.mxu0 0
    %779 = vmatpush1.bf16.msra.mxu0 0
    %780 = vmatprep.subr.bf16.mxu0 0
    %781 = vmatpush1.bf16.msra.mxu0 0
    %782 = vmatprep.mubr.bf16.mxu0 0
    %783 = vmatmul.mubr.bf16.gmra.mrb[0].mxu0 %v708
    %v784 = vpop.f32.mrb[0].mxu0
    %v785 = vadd.f32 %v468, %v784
    %v786 = vpop.f32.mrb[0].mxu0
    %v787 = vpop.f32.mrb[0].mxu0
    %v788 = vpop.f32.mrb[0].mxu0
    %789 = vdwg.mxu0
    %v790 = vadd.f32 %v705, %v744
    %v791 = vxor.u32 %v790, 2147483648
    %v792 = vmul.f32 %v791, 1.442695
    %v793 = vpow.pop %v792
    %v794 = vadd.f32 %v793, 1.0
    %v795 = vrcp.pop %v794
    %v796 = vmul.f32 1.0, %v795
    %v797 = vadd.f32 %v706, %v746
    %v798 = vxor.u32 %v797, 2147483648
    %v799 = vmul.f32 %v798, 1.442695
    %v800 = vpow.pop %v799
    %v801 = vadd.f32 %v800, 1.0
    %v802 = vrcp.pop %v801
    %v803 = vmul.f32 1.0, %v802
    %v804 = vmul.f32 %v796, %v785
    %v805 = vadd.f32 %v707, %v804
    %v806 = vtanh.pop %v805
    %v807 = vsub.f32 1.0, %v803
    %v808 = vmul.f32 %v807, %v806
    %v809 = vmul.f32 %v803, %v704
    %v810 = vadd.f32 %v808, %v809
    %v811 = vld [vmem:[#allocation2 + $0x30] sm:$0xff]
    %v812 = vld [vmem:[#allocation2 + $0x38] sm:$0xff]
    %v813 = vld [vmem:[#allocation2 + $0x40] sm:$0xff]
    %v814 = vpack.c.bf16 %v810, %v810
    %815 = vmatprep.subr.bf16.mxu0 %v556
    %816 = vmatpush1.bf16.msra.mxu0 %v555
    %817 = vmatprep.subr.bf16.mxu0 %v559
    %818 = vmatpush1.bf16.msra.mxu0 %v558
    %819 = vmatprep.subr.bf16.mxu0 %v562
    %820 = vmatpush1.bf16.msra.mxu0 %v561
    %821 = vmatprep.subr.bf16.mxu0 %v565
    %822 = vmatpush1.bf16.msra.mxu0 %v564
    %823 = vmatprep.subr.bf16.mxu0 %v568
    %824 = vmatpush1.bf16.msra.mxu0 %v567
    %825 = vmatprep.subr.bf16.mxu0 %v571
    %826 = vmatpush1.bf16.msra.mxu0 %v570
    %827 = vmatprep.subr.bf16.mxu0 %v574
    %828 = vmatpush1.bf16.msra.mxu0 %v573
    %829 = vmatprep.subr.bf16.mxu0 %v577
    %830 = vmatpush1.bf16.msra.mxu0 %v576
    %831 = vmatprep.subr.bf16.mxu0 0
    %832 = vmatpush1.bf16.msra.mxu0 0
    %833 = vmatprep.subr.bf16.mxu0 0
    %834 = vmatpush1.bf16.msra.mxu0 0
    %835 = vmatprep.subr.bf16.mxu0 0
    %836 = vmatpush1.bf16.msra.mxu0 0
    %837 = vmatprep.subr.bf16.mxu0 0
    %838 = vmatpush1.bf16.msra.mxu0 0
    %839 = vmatprep.subr.bf16.mxu0 0
    %840 = vmatpush1.bf16.msra.mxu0 0
    %841 = vmatprep.subr.bf16.mxu0 0
    %842 = vmatpush1.bf16.msra.mxu0 0
    %843 = vmatprep.subr.bf16.mxu0 0
    %844 = vmatpush1.bf16.msra.mxu0 0
    %845 = vmatprep.subr.bf16.mxu0 0
    %846 = vmatpush1.bf16.msra.mxu0 0
    %847 = vmatprep.mubr.bf16.mxu0 0
    %848 = vmatmul.mubr.bf16.gmra.mrb[0].mxu0 %v814
    %v849 = vpop.f32.mrb[0].mxu0
    %v850 = vadd.f32 %v460, %v849
    %v851 = vpop.f32.mrb[0].mxu0
    %v852 = vadd.f32 %v464, %v851
    %v853 = vpop.f32.mrb[0].mxu0
    %v854 = vpop.f32.mrb[0].mxu0
    %855 = vdwg.mxu0
    %856 = vmatprep.subr.bf16.mxu0 0
    %857 = vmatpush1.bf16.msra.mxu0 %v557
    %858 = vmatprep.subr.bf16.mxu0 0
    %859 = vmatpush1.bf16.msra.mxu0 %v560
    %860 = vmatprep.subr.bf16.mxu0 0
    %861 = vmatpush1.bf16.msra.mxu0 %v563
    %862 = vmatprep.subr.bf16.mxu0 0
    %863 = vmatpush1.bf16.msra.mxu0 %v566
    %864 = vmatprep.subr.bf16.mxu0 0
    %865 = vmatpush1.bf16.msra.mxu0 %v569
    %866 = vmatprep.subr.bf16.mxu0 0
    %867 = vmatpush1.bf16.msra.mxu0 %v572
    %868 = vmatprep.subr.bf16.mxu0 0
    %869 = vmatpush1.bf16.msra.mxu0 %v575
    %870 = vmatprep.subr.bf16.mxu0 0
    %871 = vmatpush1.bf16.msra.mxu0 %v578
    %872 = vmatprep.subr.bf16.mxu0 0
    %873 = vmatpush1.bf16.msra.mxu0 0
    %874 = vmatprep.subr.bf16.mxu0 0
    %875 = vmatpush1.bf16.msra.mxu0 0
    %876 = vmatprep.subr.bf16.mxu0 0
    %877 = vmatpush1.bf16.msra.mxu0 0
    %878 = vmatprep.subr.bf16.mxu0 0
    %879 = vmatpush1.bf16.msra.mxu0 0
    %880 = vmatprep.subr.bf16.mxu0 0
    %881 = vmatpush1.bf16.msra.mxu0 0
    %882 = vmatprep.subr.bf16.mxu0 0
    %883 = vmatpush1.bf16.msra.mxu0 0
    %884 = vmatprep.subr.bf16.mxu0 0
    %885 = vmatpush1.bf16.msra.mxu0 0
    %886 = vmatprep.subr.bf16.mxu0 0
    %887 = vmatpush1.bf16.msra.mxu0 0
    %888 = vmatprep.mubr.bf16.mxu0 0
    %889 = vmatmul.mubr.bf16.gmra.mrb[0].mxu0 %v814
    %v890 = vpop.f32.mrb[0].mxu0
    %v891 = vadd.f32 %v468, %v890
    %v892 = vpop.f32.mrb[0].mxu0
    %v893 = vpop.f32.mrb[0].mxu0
    %v894 = vpop.f32.mrb[0].mxu0
    %895 = vdwg.mxu0
    %v896 = vadd.f32 %v811, %v850
    %v897 = vxor.u32 %v896, 2147483648
    %v898 = vmul.f32 %v897, 1.442695
    %v899 = vpow.pop %v898
    %v900 = vadd.f32 %v899, 1.0
    %v901 = vrcp.pop %v900
    %v902 = vmul.f32 1.0, %v901
    %v903 = vadd.f32 %v812, %v852
    %v904 = vxor.u32 %v903, 2147483648
    %v905 = vmul.f32 %v904, 1.442695
    %v906 = vpow.pop %v905
    %v907 = vadd.f32 %v906, 1.0
    %v908 = vrcp.pop %v907
    %v909 = vmul.f32 1.0, %v908
    %v910 = vmul.f32 %v902, %v891
    %v911 = vadd.f32 %v813, %v910
    %v912 = vtanh.pop %v911
    %v913 = vsub.f32 1.0, %v909
    %v914 = vmul.f32 %v913, %v912
    %v915 = vmul.f32 %v909, %v810
    %v916 = vadd.f32 %v914, %v915
    %v917 = vld [vmem:[#allocation2 + $0x48] sm:$0xff]
    %v918 = vld [vmem:[#allocation2 + $0x50] sm:$0xff]
    %v919 = vld [vmem:[#allocation2 + $0x58] sm:$0xff]
    %v920 = vpack.c.bf16 %v916, %v916
    %921 = vmatprep.subr.bf16.mxu0 %v556
    %922 = vmatpush1.bf16.msra.mxu0 %v555
    %923 = vmatprep.subr.bf16.mxu0 %v559
    %924 = vmatpush1.bf16.msra.mxu0 %v558
    %925 = vmatprep.subr.bf16.mxu0 %v562
    %926 = vmatpush1.bf16.msra.mxu0 %v561
    %927 = vmatprep.subr.bf16.mxu0 %v565
    %928 = vmatpush1.bf16.msra.mxu0 %v564
    %929 = vmatprep.subr.bf16.mxu0 %v568
    %930 = vmatpush1.bf16.msra.mxu0 %v567
    %931 = vmatprep.subr.bf16.mxu0 %v571
    %932 = vmatpush1.bf16.msra.mxu0 %v570
    %933 = vmatprep.subr.bf16.mxu0 %v574
    %934 = vmatpush1.bf16.msra.mxu0 %v573
    %935 = vmatprep.subr.bf16.mxu0 %v577
    %936 = vmatpush1.bf16.msra.mxu0 %v576
    %937 = vmatprep.subr.bf16.mxu0 0
    %938 = vmatpush1.bf16.msra.mxu0 0
    %939 = vmatprep.subr.bf16.mxu0 0
    %940 = vmatpush1.bf16.msra.mxu0 0
    %941 = vmatprep.subr.bf16.mxu0 0
    %942 = vmatpush1.bf16.msra.mxu0 0
    %943 = vmatprep.subr.bf16.mxu0 0
    %944 = vmatpush1.bf16.msra.mxu0 0
    %945 = vmatprep.subr.bf16.mxu0 0
    %946 = vmatpush1.bf16.msra.mxu0 0
    %947 = vmatprep.subr.bf16.mxu0 0
    %948 = vmatpush1.bf16.msra.mxu0 0
    %949 = vmatprep.subr.bf16.mxu0 0
    %950 = vmatpush1.bf16.msra.mxu0 0
    %951 = vmatprep.subr.bf16.mxu0 0
    %952 = vmatpush1.bf16.msra.mxu0 0
    %953 = vmatprep.mubr.bf16.mxu0 0
    %954 = vmatmul.mubr.bf16.gmra.mrb[0].mxu0 %v920
    %v955 = vpop.f32.mrb[0].mxu0
    %v956 = vadd.f32 %v460, %v955
    %v957 = vpop.f32.mrb[0].mxu0
    %v958 = vadd.f32 %v464, %v957
    %v959 = vpop.f32.mrb[0].mxu0
    %v960 = vpop.f32.mrb[0].mxu0
    %961 = vdwg.mxu0
    %962 = vmatprep.subr.bf16.mxu0 0
    %963 = vmatpush1.bf16.msra.mxu0 %v557
    %964 = vmatprep.subr.bf16.mxu0 0
    %965 = vmatpush1.bf16.msra.mxu0 %v560
    %966 = vmatprep.subr.bf16.mxu0 0
    %967 = vmatpush1.bf16.msra.mxu0 %v563
    %968 = vmatprep.subr.bf16.mxu0 0
    %969 = vmatpush1.bf16.msra.mxu0 %v566
    %970 = vmatprep.subr.bf16.mxu0 0
    %971 = vmatpush1.bf16.msra.mxu0 %v569
    %972 = vmatprep.subr.bf16.mxu0 0
    %973 = vmatpush1.bf16.msra.mxu0 %v572
    %974 = vmatprep.subr.bf16.mxu0 0
    %975 = vmatpush1.bf16.msra.mxu0 %v575
    %976 = vmatprep.subr.bf16.mxu0 0
    %977 = vmatpush1.bf16.msra.mxu0 %v578
    %978 = vmatprep.subr.bf16.mxu0 0
    %979 = vmatpush1.bf16.msra.mxu0 0
    %980 = vmatprep.subr.bf16.mxu0 0
    %981 = vmatpush1.bf16.msra.mxu0 0
    %982 = vmatprep.subr.bf16.mxu0 0
    %983 = vmatpush1.bf16.msra.mxu0 0
    %984 = vmatprep.subr.bf16.mxu0 0
    %985 = vmatpush1.bf16.msra.mxu0 0
    %986 = vmatprep.subr.bf16.mxu0 0
    %987 = vmatpush1.bf16.msra.mxu0 0
    %988 = vmatprep.subr.bf16.mxu0 0
    %989 = vmatpush1.bf16.msra.mxu0 0
    %990 = vmatprep.subr.bf16.mxu0 0
    %991 = vmatpush1.bf16.msra.mxu0 0
    %992 = vmatprep.subr.bf16.mxu0 0
    %993 = vmatpush1.bf16.msra.mxu0 0
    %994 = vmatprep.mubr.bf16.mxu0 0
    %995 = vmatmul.mubr.bf16.gmra.mrb[0].mxu0 %v920
    %v996 = vpop.f32.mrb[0].mxu0
    %v997 = vadd.f32 %v468, %v996
    %v998 = vpop.f32.mrb[0].mxu0
    %v999 = vpop.f32.mrb[0].mxu0
    %v1000 = vpop.f32.mrb[0].mxu0
    %1001 = vdwg.mxu0
    %v1002 = vadd.f32 %v917, %v956
    %v1003 = vxor.u32 %v1002, 2147483648
    %v1004 = vmul.f32 %v1003, 1.442695
    %v1005 = vpow.pop %v1004
    %v1006 = vadd.f32 %v1005, 1.0
    %v1007 = vrcp.pop %v1006
    %v1008 = vmul.f32 1.0, %v1007
    %v1009 = vadd.f32 %v918, %v958
    %v1010 = vxor.u32 %v1009, 2147483648
    %v1011 = vmul.f32 %v1010, 1.442695
    %v1012 = vpow.pop %v1011
    %v1013 = vadd.f32 %v1012, 1.0
    %v1014 = vrcp.pop %v1013
    %v1015 = vmul.f32 1.0, %v1014
    %v1016 = vmul.f32 %v1008, %v997
    %v1017 = vadd.f32 %v919, %v1016
    %v1018 = vtanh.pop %v1017
    %v1019 = vsub.f32 1.0, %v1015
    %v1020 = vmul.f32 %v1019, %v1018
    %v1021 = vmul.f32 %v1015, %v916
    %v1022 = vadd.f32 %v1020, %v1021
    %v1023 = vld [vmem:[#allocation2 + $0x60] sm:$0xff]
    %v1024 = vld [vmem:[#allocation2 + $0x68] sm:$0xff]
    %v1025 = vld [vmem:[#allocation2 + $0x70] sm:$0xff]
    %v1026 = vpack.c.bf16 %v1022, %v1022
    %1027 = vmatprep.subr.bf16.mxu0 %v556
    %1028 = vmatpush1.bf16.msra.mxu0 %v555
    %1029 = vmatprep.subr.bf16.mxu0 %v559
    %1030 = vmatpush1.bf16.msra.mxu0 %v558
    %1031 = vmatprep.subr.bf16.mxu0 %v562
    %1032 = vmatpush1.bf16.msra.mxu0 %v561
    %1033 = vmatprep.subr.bf16.mxu0 %v565
    %1034 = vmatpush1.bf16.msra.mxu0 %v564
    %1035 = vmatprep.subr.bf16.mxu0 %v568
    %1036 = vmatpush1.bf16.msra.mxu0 %v567
    %1037 = vmatprep.subr.bf16.mxu0 %v571
    %1038 = vmatpush1.bf16.msra.mxu0 %v570
    %1039 = vmatprep.subr.bf16.mxu0 %v574
    %1040 = vmatpush1.bf16.msra.mxu0 %v573
    %1041 = vmatprep.subr.bf16.mxu0 %v577
    %1042 = vmatpush1.bf16.msra.mxu0 %v576
    %1043 = vmatprep.subr.bf16.mxu0 0
    %1044 = vmatpush1.bf16.msra.mxu0 0
    %1045 = vmatprep.subr.bf16.mxu0 0
    %1046 = vmatpush1.bf16.msra.mxu0 0
    %1047 = vmatprep.subr.bf16.mxu0 0
    %1048 = vmatpush1.bf16.msra.mxu0 0
    %1049 = vmatprep.subr.bf16.mxu0 0
    %1050 = vmatpush1.bf16.msra.mxu0 0
    %1051 = vmatprep.subr.bf16.mxu0 0
    %1052 = vmatpush1.bf16.msra.mxu0 0
    %1053 = vmatprep.subr.bf16.mxu0 0
    %1054 = vmatpush1.bf16.msra.mxu0 0
    %1055 = vmatprep.subr.bf16.mxu0 0
    %1056 = vmatpush1.bf16.msra.mxu0 0
    %1057 = vmatprep.subr.bf16.mxu0 0
    %1058 = vmatpush1.bf16.msra.mxu0 0
    %1059 = vmatprep.mubr.bf16.mxu0 0
    %1060 = vmatmul.mubr.bf16.gmra.mrb[0].mxu0 %v1026
    %v1061 = vpop.f32.mrb[0].mxu0
    %v1062 = vadd.f32 %v460, %v1061
    %v1063 = vpop.f32.mrb[0].mxu0
    %v1064 = vadd.f32 %v464, %v1063
    %v1065 = vpop.f32.mrb[0].mxu0
    %v1066 = vpop.f32.mrb[0].mxu0
    %1067 = vdwg.mxu0
    %1068 = vmatprep.subr.bf16.mxu0 0
    %1069 = vmatpush1.bf16.msra.mxu0 %v557
    %1070 = vmatprep.subr.bf16.mxu0 0
    %1071 = vmatpush1.bf16.msra.mxu0 %v560
    %1072 = vmatprep.subr.bf16.mxu0 0
    %1073 = vmatpush1.bf16.msra.mxu0 %v563
    %1074 = vmatprep.subr.bf16.mxu0 0
    %1075 = vmatpush1.bf16.msra.mxu0 %v566
    %1076 = vmatprep.subr.bf16.mxu0 0
    %1077 = vmatpush1.bf16.msra.mxu0 %v569
    %1078 = vmatprep.subr.bf16.mxu0 0
    %1079 = vmatpush1.bf16.msra.mxu0 %v572
    %1080 = vmatprep.subr.bf16.mxu0 0
    %1081 = vmatpush1.bf16.msra.mxu0 %v575
    %1082 = vmatprep.subr.bf16.mxu0 0
    %1083 = vmatpush1.bf16.msra.mxu0 %v578
    %1084 = vmatprep.subr.bf16.mxu0 0
    %1085 = vmatpush1.bf16.msra.mxu0 0
    %1086 = vmatprep.subr.bf16.mxu0 0
    %1087 = vmatpush1.bf16.msra.mxu0 0
    %1088 = vmatprep.subr.bf16.mxu0 0
    %1089 = vmatpush1.bf16.msra.mxu0 0
    %1090 = vmatprep.subr.bf16.mxu0 0
    %1091 = vmatpush1.bf16.msra.mxu0 0
    %1092 = vmatprep.subr.bf16.mxu0 0
    %1093 = vmatpush1.bf16.msra.mxu0 0
    %1094 = vmatprep.subr.bf16.mxu0 0
    %1095 = vmatpush1.bf16.msra.mxu0 0
    %1096 = vmatprep.subr.bf16.mxu0 0
    %1097 = vmatpush1.bf16.msra.mxu0 0
    %1098 = vmatprep.subr.bf16.mxu0 0
    %1099 = vmatpush1.bf16.msra.mxu0 0
    %1100 = vmatprep.mubr.bf16.mxu0 0
    %1101 = vmatmul.mubr.bf16.gmra.mrb[0].mxu0 %v1026
    %v1102 = vpop.f32.mrb[0].mxu0
    %v1103 = vadd.f32 %v468, %v1102
    %v1104 = vpop.f32.mrb[0].mxu0
    %v1105 = vpop.f32.mrb[0].mxu0
    %v1106 = vpop.f32.mrb[0].mxu0
    %1107 = vdwg.mxu0
    %v1108 = vadd.f32 %v1023, %v1062
    %v1109 = vxor.u32 %v1108, 2147483648
    %v1110 = vmul.f32 %v1109, 1.442695
    %v1111 = vpow.pop %v1110
    %v1112 = vadd.f32 %v1111, 1.0
    %v1113 = vrcp.pop %v1112
    %v1114 = vmul.f32 1.0, %v1113
    %v1115 = vadd.f32 %v1024, %v1064
    %v1116 = vxor.u32 %v1115, 2147483648
    %v1117 = vmul.f32 %v1116, 1.442695
    %v1118 = vpow.pop %v1117
    %v1119 = vadd.f32 %v1118, 1.0
    %v1120 = vrcp.pop %v1119
    %v1121 = vmul.f32 1.0, %v1120
    %v1122 = vmul.f32 %v1114, %v1103
    %v1123 = vadd.f32 %v1025, %v1122
    %v1124 = vtanh.pop %v1123
    %v1125 = vsub.f32 1.0, %v1121
    %v1126 = vmul.f32 %v1125, %v1124
    %v1127 = vmul.f32 %v1121, %v1022
    %v1128 = vadd.f32 %v1126, %v1127
    %v1129 = vld [vmem:[#allocation2 + $0x78] sm:$0xff]
    %v1130 = vld [vmem:[#allocation2 + $0x80] sm:$0xff]
    %v1131 = vld [vmem:[#allocation2 + $0x88] sm:$0xff]
    %v1132 = vpack.c.bf16 %v1128, %v1128
    %1133 = vmatprep.subr.bf16.mxu0 %v556
    %1134 = vmatpush1.bf16.msra.mxu0 %v555
    %1135 = vmatprep.subr.bf16.mxu0 %v559
    %1136 = vmatpush1.bf16.msra.mxu0 %v558
    %1137 = vmatprep.subr.bf16.mxu0 %v562
    %1138 = vmatpush1.bf16.msra.mxu0 %v561
    %1139 = vmatprep.subr.bf16.mxu0 %v565
    %1140 = vmatpush1.bf16.msra.mxu0 %v564
    %1141 = vmatprep.subr.bf16.mxu0 %v568
    %1142 = vmatpush1.bf16.msra.mxu0 %v567
    %1143 = vmatprep.subr.bf16.mxu0 %v571
    %1144 = vmatpush1.bf16.msra.mxu0 %v570
    %1145 = vmatprep.subr.bf16.mxu0 %v574
    %1146 = vmatpush1.bf16.msra.mxu0 %v573
    %1147 = vmatprep.subr.bf16.mxu0 %v577
    %1148 = vmatpush1.bf16.msra.mxu0 %v576
    %1149 = vmatprep.subr.bf16.mxu0 0
    %1150 = vmatpush1.bf16.msra.mxu0 0
    %1151 = vmatprep.subr.bf16.mxu0 0
    %1152 = vmatpush1.bf16.msra.mxu0 0
    %1153 = vmatprep.subr.bf16.mxu0 0
    %1154 = vmatpush1.bf16.msra.mxu0 0
    %1155 = vmatprep.subr.bf16.mxu0 0
    %1156 = vmatpush1.bf16.msra.mxu0 0
    %1157 = vmatprep.subr.bf16.mxu0 0
    %1158 = vmatpush1.bf16.msra.mxu0 0
    %1159 = vmatprep.subr.bf16.mxu0 0
    %1160 = vmatpush1.bf16.msra.mxu0 0
    %1161 = vmatprep.subr.bf16.mxu0 0
    %1162 = vmatpush1.bf16.msra.mxu0 0
    %1163 = vmatprep.subr.bf16.mxu0 0
    %1164 = vmatpush1.bf16.msra.mxu0 0
    %1165 = vmatprep.mubr.bf16.mxu0 0
    %1166 = vmatmul.mubr.bf16.gmra.mrb[0].mxu0 %v1132
    %v1167 = vpop.f32.mrb[0].mxu0
    %v1168 = vadd.f32 %v460, %v1167
    %v1169 = vpop.f32.mrb[0].mxu0
    %v1170 = vadd.f32 %v464, %v1169
    %v1171 = vpop.f32.mrb[0].mxu0
    %v1172 = vpop.f32.mrb[0].mxu0
    %1173 = vdwg.mxu0
    %1174 = vmatprep.subr.bf16.mxu0 0
    %1175 = vmatpush1.bf16.msra.mxu0 %v557
    %1176 = vmatprep.subr.bf16.mxu0 0
    %1177 = vmatpush1.bf16.msra.mxu0 %v560
    %1178 = vmatprep.subr.bf16.mxu0 0
    %1179 = vmatpush1.bf16.msra.mxu0 %v563
    %1180 = vmatprep.subr.bf16.mxu0 0
    %1181 = vmatpush1.bf16.msra.mxu0 %v566
    %1182 = vmatprep.subr.bf16.mxu0 0
    %1183 = vmatpush1.bf16.msra.mxu0 %v569
    %1184 = vmatprep.subr.bf16.mxu0 0
    %1185 = vmatpush1.bf16.msra.mxu0 %v572
    %1186 = vmatprep.subr.bf16.mxu0 0
    %1187 = vmatpush1.bf16.msra.mxu0 %v575
    %1188 = vmatprep.subr.bf16.mxu0 0
    %1189 = vmatpush1.bf16.msra.mxu0 %v578
    %1190 = vmatprep.subr.bf16.mxu0 0
    %1191 = vmatpush1.bf16.msra.mxu0 0
    %1192 = vmatprep.subr.bf16.mxu0 0
    %1193 = vmatpush1.bf16.msra.mxu0 0
    %1194 = vmatprep.subr.bf16.mxu0 0
    %1195 = vmatpush1.bf16.msra.mxu0 0
    %1196 = vmatprep.subr.bf16.mxu0 0
    %1197 = vmatpush1.bf16.msra.mxu0 0
    %1198 = vmatprep.subr.bf16.mxu0 0
    %1199 = vmatpush1.bf16.msra.mxu0 0
    %1200 = vmatprep.subr.bf16.mxu0 0
    %1201 = vmatpush1.bf16.msra.mxu0 0
    %1202 = vmatprep.subr.bf16.mxu0 0
    %1203 = vmatpush1.bf16.msra.mxu0 0
    %1204 = vmatprep.subr.bf16.mxu0 0
    %1205 = vmatpush1.bf16.msra.mxu0 0
    %1206 = vmatprep.mubr.bf16.mxu0 0
    %1207 = vmatmul.mubr.bf16.gmra.mrb[0].mxu0 %v1132
    %v1208 = vpop.f32.mrb[0].mxu0
    %v1209 = vadd.f32 %v468, %v1208
    %v1210 = vpop.f32.mrb[0].mxu0
    %v1211 = vpop.f32.mrb[0].mxu0
    %v1212 = vpop.f32.mrb[0].mxu0
    %1213 = vdwg.mxu0
    %v1214 = vadd.f32 %v1129, %v1168
    %v1215 = vxor.u32 %v1214, 2147483648
    %v1216 = vmul.f32 %v1215, 1.442695
    %v1217 = vpow.pop %v1216
    %v1218 = vadd.f32 %v1217, 1.0
    %v1219 = vrcp.pop %v1218
    %v1220 = vmul.f32 1.0, %v1219
    %v1221 = vadd.f32 %v1130, %v1170
    %v1222 = vxor.u32 %v1221, 2147483648
    %v1223 = vmul.f32 %v1222, 1.442695
    %v1224 = vpow.pop %v1223
    %v1225 = vadd.f32 %v1224, 1.0
    %v1226 = vrcp.pop %v1225
    %v1227 = vmul.f32 1.0, %v1226
    %v1228 = vmul.f32 %v1220, %v1209
    %v1229 = vadd.f32 %v1131, %v1228
    %v1230 = vtanh.pop %v1229
    %v1231 = vsub.f32 1.0, %v1227
    %v1232 = vmul.f32 %v1231, %v1230
    %v1233 = vmul.f32 %v1227, %v1128
    %v1234 = vadd.f32 %v1232, %v1233
    %v1235 = vld [vmem:[#allocation2 + $0x90] sm:$0xff]
    %v1236 = vld [vmem:[#allocation2 + $0x98] sm:$0xff]
    %v1237 = vld [vmem:[#allocation2 + $0xa0] sm:$0xff]
    %v1238 = vpack.c.bf16 %v1234, %v1234
    %1239 = vmatprep.subr.bf16.mxu0 %v556
    %1240 = vmatpush1.bf16.msra.mxu0 %v555
    %1241 = vmatprep.subr.bf16.mxu0 %v559
    %1242 = vmatpush1.bf16.msra.mxu0 %v558
    %1243 = vmatprep.subr.bf16.mxu0 %v562
    %1244 = vmatpush1.bf16.msra.mxu0 %v561
    %1245 = vmatprep.subr.bf16.mxu0 %v565
    %1246 = vmatpush1.bf16.msra.mxu0 %v564
    %1247 = vmatprep.subr.bf16.mxu0 %v568
    %1248 = vmatpush1.bf16.msra.mxu0 %v567
    %1249 = vmatprep.subr.bf16.mxu0 %v571
    %1250 = vmatpush1.bf16.msra.mxu0 %v570
    %1251 = vmatprep.subr.bf16.mxu0 %v574
    %1252 = vmatpush1.bf16.msra.mxu0 %v573
    %1253 = vmatprep.subr.bf16.mxu0 %v577
    %1254 = vmatpush1.bf16.msra.mxu0 %v576
    %1255 = vmatprep.subr.bf16.mxu0 0
    %1256 = vmatpush1.bf16.msra.mxu0 0
    %1257 = vmatprep.subr.bf16.mxu0 0
    %1258 = vmatpush1.bf16.msra.mxu0 0
    %1259 = vmatprep.subr.bf16.mxu0 0
    %1260 = vmatpush1.bf16.msra.mxu0 0
    %1261 = vmatprep.subr.bf16.mxu0 0
    %1262 = vmatpush1.bf16.msra.mxu0 0
    %1263 = vmatprep.subr.bf16.mxu0 0
    %1264 = vmatpush1.bf16.msra.mxu0 0
    %1265 = vmatprep.subr.bf16.mxu0 0
    %1266 = vmatpush1.bf16.msra.mxu0 0
    %1267 = vmatprep.subr.bf16.mxu0 0
    %1268 = vmatpush1.bf16.msra.mxu0 0
    %1269 = vmatprep.subr.bf16.mxu0 0
    %1270 = vmatpush1.bf16.msra.mxu0 0
    %1271 = vmatprep.mubr.bf16.mxu0 0
    %1272 = vmatmul.mubr.bf16.gmra.mrb[0].mxu0 %v1238
    %v1273 = vpop.f32.mrb[0].mxu0
    %v1274 = vadd.f32 %v460, %v1273
    %v1275 = vpop.f32.mrb[0].mxu0
    %v1276 = vadd.f32 %v464, %v1275
    %v1277 = vpop.f32.mrb[0].mxu0
    %v1278 = vpop.f32.mrb[0].mxu0
    %1279 = vdwg.mxu0
    %1280 = vmatprep.subr.bf16.mxu0 0
    %1281 = vmatpush1.bf16.msra.mxu0 %v557
    %1282 = vmatprep.subr.bf16.mxu0 0
    %1283 = vmatpush1.bf16.msra.mxu0 %v560
    %1284 = vmatprep.subr.bf16.mxu0 0
    %1285 = vmatpush1.bf16.msra.mxu0 %v563
    %1286 = vmatprep.subr.bf16.mxu0 0
    %1287 = vmatpush1.bf16.msra.mxu0 %v566
    %1288 = vmatprep.subr.bf16.mxu0 0
    %1289 = vmatpush1.bf16.msra.mxu0 %v569
    %1290 = vmatprep.subr.bf16.mxu0 0
    %1291 = vmatpush1.bf16.msra.mxu0 %v572
    %1292 = vmatprep.subr.bf16.mxu0 0
    %1293 = vmatpush1.bf16.msra.mxu0 %v575
    %1294 = vmatprep.subr.bf16.mxu0 0
    %1295 = vmatpush1.bf16.msra.mxu0 %v578
    %1296 = vmatprep.subr.bf16.mxu0 0
    %1297 = vmatpush1.bf16.msra.mxu0 0
    %1298 = vmatprep.subr.bf16.mxu0 0
    %1299 = vmatpush1.bf16.msra.mxu0 0
    %1300 = vmatprep.subr.bf16.mxu0 0
    %1301 = vmatpush1.bf16.msra.mxu0 0
    %1302 = vmatprep.subr.bf16.mxu0 0
    %1303 = vmatpush1.bf16.msra.mxu0 0
    %1304 = vmatprep.subr.bf16.mxu0 0
    %1305 = vmatpush1.bf16.msra.mxu0 0
    %1306 = vmatprep.subr.bf16.mxu0 0
    %1307 = vmatpush1.bf16.msra.mxu0 0
    %1308 = vmatprep.subr.bf16.mxu0 0
    %1309 = vmatpush1.bf16.msra.mxu0 0
    %1310 = vmatprep.subr.bf16.mxu0 0
    %1311 = vmatpush1.bf16.msra.mxu0 0
    %1312 = vmatprep.mubr.bf16.mxu0 0
    %1313 = vmatmul.mubr.bf16.gmra.mrb[0].mxu0 %v1238
    %v1314 = vpop.f32.mrb[0].mxu0
    %v1315 = vadd.f32 %v468, %v1314
    %v1316 = vpop.f32.mrb[0].mxu0
    %v1317 = vpop.f32.mrb[0].mxu0
    %v1318 = vpop.f32.mrb[0].mxu0
    %1319 = vdwg.mxu0
    %v1320 = vadd.f32 %v1235, %v1274
    %v1321 = vxor.u32 %v1320, 2147483648
    %v1322 = vmul.f32 %v1321, 1.442695
    %v1323 = vpow.pop %v1322
    %v1324 = vadd.f32 %v1323, 1.0
    %v1325 = vrcp.pop %v1324
    %v1326 = vmul.f32 1.0, %v1325
    %v1327 = vadd.f32 %v1236, %v1276
    %v1328 = vxor.u32 %v1327, 2147483648
    %v1329 = vmul.f32 %v1328, 1.442695
    %v1330 = vpow.pop %v1329
    %v1331 = vadd.f32 %v1330, 1.0
    %v1332 = vrcp.pop %v1331
    %v1333 = vmul.f32 1.0, %v1332
    %v1334 = vmul.f32 %v1326, %v1315
    %v1335 = vadd.f32 %v1237, %v1334
    %v1336 = vtanh.pop %v1335
    %v1337 = vsub.f32 1.0, %v1333
    %v1338 = vmul.f32 %v1337, %v1336
    %v1339 = vmul.f32 %v1333, %v1234
    %v1340 = vadd.f32 %v1338, %v1339
    %v1341 = vld [vmem:[#allocation2 + $0xa8] sm:$0xff]
    %v1342 = vld [vmem:[#allocation2 + $0xb0] sm:$0xff]
    %v1343 = vld [vmem:[#allocation2 + $0xb8] sm:$0xff]
    %v1344 = vpack.c.bf16 %v1340, %v1340
    %1345 = vmatprep.subr.bf16.mxu0 %v556
    %1346 = vmatpush1.bf16.msra.mxu0 %v555
    %1347 = vmatprep.subr.bf16.mxu0 %v559
    %1348 = vmatpush1.bf16.msra.mxu0 %v558
    %1349 = vmatprep.subr.bf16.mxu0 %v562
    %1350 = vmatpush1.bf16.msra.mxu0 %v561
    %1351 = vmatprep.subr.bf16.mxu0 %v565
    %1352 = vmatpush1.bf16.msra.mxu0 %v564
    %1353 = vmatprep.subr.bf16.mxu0 %v568
    %1354 = vmatpush1.bf16.msra.mxu0 %v567
    %1355 = vmatprep.subr.bf16.mxu0 %v571
    %1356 = vmatpush1.bf16.msra.mxu0 %v570
    %1357 = vmatprep.subr.bf16.mxu0 %v574
    %1358 = vmatpush1.bf16.msra.mxu0 %v573
    %1359 = vmatprep.subr.bf16.mxu0 %v577
    %1360 = vmatpush1.bf16.msra.mxu0 %v576
    %1361 = vmatprep.subr.bf16.mxu0 0
    %1362 = vmatpush1.bf16.msra.mxu0 0
    %1363 = vmatprep.subr.bf16.mxu0 0
    %1364 = vmatpush1.bf16.msra.mxu0 0
    %1365 = vmatprep.subr.bf16.mxu0 0
    %1366 = vmatpush1.bf16.msra.mxu0 0
    %1367 = vmatprep.subr.bf16.mxu0 0
    %1368 = vmatpush1.bf16.msra.mxu0 0
    %1369 = vmatprep.subr.bf16.mxu0 0
    %1370 = vmatpush1.bf16.msra.mxu0 0
    %1371 = vmatprep.subr.bf16.mxu0 0
    %1372 = vmatpush1.bf16.msra.mxu0 0
    %1373 = vmatprep.subr.bf16.mxu0 0
    %1374 = vmatpush1.bf16.msra.mxu0 0
    %1375 = vmatprep.subr.bf16.mxu0 0
    %1376 = vmatpush1.bf16.msra.mxu0 0
    %1377 = vmatprep.mubr.bf16.mxu0 0
    %1378 = vmatmul.mubr.bf16.gmra.mrb[0].mxu0 %v1344
    %v1379 = vpop.f32.mrb[0].mxu0
    %v1380 = vadd.f32 %v460, %v1379
    %v1381 = vpop.f32.mrb[0].mxu0
    %v1382 = vadd.f32 %v464, %v1381
    %v1383 = vpop.f32.mrb[0].mxu0
    %v1384 = vpop.f32.mrb[0].mxu0
    %1385 = vdwg.mxu0
    %1386 = vmatprep.subr.bf16.mxu0 0
    %1387 = vmatpush1.bf16.msra.mxu0 %v557
    %1388 = vmatprep.subr.bf16.mxu0 0
    %1389 = vmatpush1.bf16.msra.mxu0 %v560
    %1390 = vmatprep.subr.bf16.mxu0 0
    %1391 = vmatpush1.bf16.msra.mxu0 %v563
    %1392 = vmatprep.subr.bf16.mxu0 0
    %1393 = vmatpush1.bf16.msra.mxu0 %v566
    %1394 = vmatprep.subr.bf16.mxu0 0
    %1395 = vmatpush1.bf16.msra.mxu0 %v569
    %1396 = vmatprep.subr.bf16.mxu0 0
    %1397 = vmatpush1.bf16.msra.mxu0 %v572
    %1398 = vmatprep.subr.bf16.mxu0 0
    %1399 = vmatpush1.bf16.msra.mxu0 %v575
    %1400 = vmatprep.subr.bf16.mxu0 0
    %1401 = vmatpush1.bf16.msra.mxu0 %v578
    %1402 = vmatprep.subr.bf16.mxu0 0
    %1403 = vmatpush1.bf16.msra.mxu0 0
    %1404 = vmatprep.subr.bf16.mxu0 0
    %1405 = vmatpush1.bf16.msra.mxu0 0
    %1406 = vmatprep.subr.bf16.mxu0 0
    %1407 = vmatpush1.bf16.msra.mxu0 0
    %1408 = vmatprep.subr.bf16.mxu0 0
    %1409 = vmatpush1.bf16.msra.mxu0 0
    %1410 = vmatprep.subr.bf16.mxu0 0
    %1411 = vmatpush1.bf16.msra.mxu0 0
    %1412 = vmatprep.subr.bf16.mxu0 0
    %1413 = vmatpush1.bf16.msra.mxu0 0
    %1414 = vmatprep.subr.bf16.mxu0 0
    %1415 = vmatpush1.bf16.msra.mxu0 0
    %1416 = vmatprep.subr.bf16.mxu0 0
    %1417 = vmatpush1.bf16.msra.mxu0 0
    %1418 = vmatprep.mubr.bf16.mxu0 0
    %1419 = vmatmul.mubr.bf16.gmra.mrb[0].mxu0 %v1344
    %v1420 = vpop.f32.mrb[0].mxu0
    %v1421 = vadd.f32 %v468, %v1420
    %v1422 = vpop.f32.mrb[0].mxu0
    %v1423 = vpop.f32.mrb[0].mxu0
    %v1424 = vpop.f32.mrb[0].mxu0
    %1425 = vdwg.mxu0
    %v1426 = vadd.f32 %v1341, %v1380
    %v1427 = vxor.u32 %v1426, 2147483648
    %v1428 = vmul.f32 %v1427, 1.442695
    %v1429 = vpow.pop %v1428
    %v1430 = vadd.f32 %v1429, 1.0
    %v1431 = vrcp.pop %v1430
    %v1432 = vmul.f32 1.0, %v1431
    %v1433 = vadd.f32 %v1342, %v1382
    %v1434 = vxor.u32 %v1433, 2147483648
    %v1435 = vmul.f32 %v1434, 1.442695
    %v1436 = vpow.pop %v1435
    %v1437 = vadd.f32 %v1436, 1.0
    %v1438 = vrcp.pop %v1437
    %v1439 = vmul.f32 1.0, %v1438
    %v1440 = vmul.f32 %v1432, %v1421
    %v1441 = vadd.f32 %v1343, %v1440
    %v1442 = vtanh.pop %v1441
    %v1443 = vsub.f32 1.0, %v1439
    %v1444 = vmul.f32 %v1443, %v1442
    %v1445 = vmul.f32 %v1439, %v1340
    %v1446 = vadd.f32 %v1444, %v1445
    %v1447 = vpack.c.bf16 %v1446, %v1446
    %v1448 = vld [vmem:[#allocation7 + $0x30] sm:$0xff]
    %v1449 = vld [vmem:[#allocation7 + $0x70] sm:$0xff]
    %v1450 = vld [vmem:[#allocation7 + $0xb0] sm:$0xff]
    %v1451 = vld [vmem:[#allocation7 + $0xf0] sm:$0xff]
    %v1452 = vld [vmem:[#allocation7 + $0x130] sm:$0xff]
    %v1453 = vld [vmem:[#allocation7 + $0x170] sm:$0xff]
    %v1454 = vld [vmem:[#allocation7 + $0x1b0] sm:$0xff]
    %v1455 = vld [vmem:[#allocation7 + $0x1f0] sm:$0xff]
    %v1456 = vld [vmem:[#allocation7 + $0x230] sm:$0xff]
    %v1457 = vld [vmem:[#allocation7 + $0x270] sm:$0xff]
    %v1458 = vld [vmem:[#allocation7 + $0x2b0] sm:$0xff]
    %v1459 = vld [vmem:[#allocation7 + $0x2f0] sm:$0xff]
    %v1460 = vld [vmem:[#allocation7 + $0x330] sm:$0xff]
    %v1461 = vld [vmem:[#allocation7 + $0x370] sm:$0xff]
    %v1462 = vld [vmem:[#allocation7 + $0x3b0] sm:$0xff]
    %v1463 = vld [vmem:[#allocation7 + $0x3f0] sm:$0xff]
    %v1464 = vld [vmem:[#allocation9 + $0xc] sm:$0x3]
    %v1466 = vlaneseq
    %v1467 = vshrl.u32 %v1466, 7
    %v1468 = vsub.s32 0, %v1467
    %v1469 = vrot.slane %v1464, %v1468
    %v1470 = vlaneseq
    %v1471 = vshrl.u32 %v1470, 7
    %v1472 = vsub.s32 1, %v1471
    %v1473 = vrot.slane %v1464, %v1472
    %v1492 = vunpack.c.l.b16 %v1448
    %v1493 = vunpack.c.h.b16 %v1448
    %v1494 = vunpack.c.l.b16 %v1449
    %v1495 = vunpack.c.h.b16 %v1449
    %v1496 = vunpack.c.l.b16 %v1450
    %v1497 = vunpack.c.h.b16 %v1450
    %v1498 = vunpack.c.l.b16 %v1451
    %v1499 = vunpack.c.h.b16 %v1451
    %v1500 = vunpack.c.l.b16 %v1452
    %v1501 = vunpack.c.h.b16 %v1452
    %v1502 = vunpack.c.l.b16 %v1453
    %v1503 = vunpack.c.h.b16 %v1453
    %v1504 = vunpack.c.l.b16 %v1454
    %v1505 = vunpack.c.h.b16 %v1454
    %v1506 = vunpack.c.l.b16 %v1455
    %v1507 = vunpack.c.h.b16 %v1455
    %v1508 = vunpack.c.l.b16 %v1456
    %v1509 = vunpack.c.h.b16 %v1456
    %v1510 = vunpack.c.l.b16 %v1457
    %v1511 = vunpack.c.h.b16 %v1457
    %v1512 = vunpack.c.l.b16 %v1458
    %v1513 = vunpack.c.h.b16 %v1458
    %v1514 = vunpack.c.l.b16 %v1459
    %v1515 = vunpack.c.h.b16 %v1459
    %v1516 = vunpack.c.l.b16 %v1460
    %v1517 = vunpack.c.h.b16 %v1460
    %v1518 = vunpack.c.l.b16 %v1461
    %v1519 = vunpack.c.h.b16 %v1461
    %v1520 = vunpack.c.l.b16 %v1462
    %v1521 = vunpack.c.h.b16 %v1462
    %v1522 = vunpack.c.l.b16 %v1463
    %v1523 = vunpack.c.h.b16 %v1463
    %v1524 = vpack.c.b16 %v1494, %v1492
    %v1525 = vpack.c.b16 %v1495, %v1493
    %v1526 = vpack.c.b16 %v1498, %v1496
    %v1527 = vpack.c.b16 %v1499, %v1497
    %v1528 = vpack.c.b16 %v1502, %v1500
    %v1529 = vpack.c.b16 %v1503, %v1501
    %v1530 = vpack.c.b16 %v1506, %v1504
    %v1531 = vpack.c.b16 %v1507, %v1505
    %v1532 = vpack.c.b16 %v1510, %v1508
    %v1533 = vpack.c.b16 %v1511, %v1509
    %v1534 = vpack.c.b16 %v1514, %v1512
    %v1535 = vpack.c.b16 %v1515, %v1513
    %v1536 = vpack.c.b16 %v1518, %v1516
    %v1537 = vpack.c.b16 %v1519, %v1517
    %v1538 = vpack.c.b16 %v1522, %v1520
    %v1539 = vpack.c.b16 %v1523, %v1521
    %1556 = vmatprep.subr.bf16.mxu0 %v1525
    %1557 = vmatpush1.bf16.msra.mxu0 %v1524
    %1558 = vmatprep.subr.bf16.mxu0 %v1527
    %1559 = vmatpush1.bf16.msra.mxu0 %v1526
    %1560 = vmatprep.subr.bf16.mxu0 %v1529
    %1561 = vmatpush1.bf16.msra.mxu0 %v1528
    %1562 = vmatprep.subr.bf16.mxu0 %v1531
    %1563 = vmatpush1.bf16.msra.mxu0 %v1530
    %1564 = vmatprep.subr.bf16.mxu0 %v1533
    %1565 = vmatpush1.bf16.msra.mxu0 %v1532
    %1566 = vmatprep.subr.bf16.mxu0 %v1535
    %1567 = vmatpush1.bf16.msra.mxu0 %v1534
    %1568 = vmatprep.subr.bf16.mxu0 %v1537
    %1569 = vmatpush1.bf16.msra.mxu0 %v1536
    %1570 = vmatprep.subr.bf16.mxu0 %v1539
    %1571 = vmatpush1.bf16.msra.mxu0 %v1538
    %1572 = vmatprep.subr.bf16.mxu0 0
    %1573 = vmatpush1.bf16.msra.mxu0 0
    %1574 = vmatprep.subr.bf16.mxu0 0
    %1575 = vmatpush1.bf16.msra.mxu0 0
    %1576 = vmatprep.subr.bf16.mxu0 0
    %1577 = vmatpush1.bf16.msra.mxu0 0
    %1578 = vmatprep.subr.bf16.mxu0 0
    %1579 = vmatpush1.bf16.msra.mxu0 0
    %1580 = vmatprep.subr.bf16.mxu0 0
    %1581 = vmatpush1.bf16.msra.mxu0 0
    %1582 = vmatprep.subr.bf16.mxu0 0
    %1583 = vmatpush1.bf16.msra.mxu0 0
    %1584 = vmatprep.subr.bf16.mxu0 0
    %1585 = vmatpush1.bf16.msra.mxu0 0
    %1586 = vmatprep.subr.bf16.mxu0 0
    %1587 = vmatpush1.bf16.msra.mxu0 0
    %1588 = vmatprep.mubr.bf16.mxu0 0
    %1589 = vmatmul.mubr.bf16.gmra.mrb[0].mxu0 %v1447
    %v1590 = vpop.f32.mrb[0].mxu0
    %v1591 = vadd.f32 %v1469, %v1590
    %v1592 = vpop.f32.mrb[0].mxu0
    %v1593 = vadd.f32 %v1473, %v1592
    %v1594 = vpop.f32.mrb[0].mxu0
    %v1595 = vpop.f32.mrb[0].mxu0
    %1596 = vdwg.mxu0
    %v1597 = vmul.f32 %v1593, 0.5
    %v1598 = vmul.f32 %v1597, 1.442695
    %v1599 = vpow.pop %v1598
    %v1600 = vld [vmem:[#allocation10] sm:$0xff]
    %v1601 = vld [vmem:[#allocation10 + $0x8] sm:$0xff]
    %v1602 = vmul.f32 %v1600, %v1599
    %v1603 = vadd.f32 %v1591, %v1602
    %v1604 = vmul.f32 %v1601, %v1599
    %v1605 = vadd.f32 %v1591, %v1604
    %v1606 = vlaneseq
    %v1607 = vshrl.u32 %v1606, 7
    %vm1608 = vcmp.lt.s32.totalorder %v1607, 2
    %v1609 = vsel %vm1608, 1, 0
    %v1610 = vcvt.s32.f32 %v1609
    %v1611 = vmul.f32 %v1603, %v1610
    %v1612 = vrot.slane %v1611, 4
    %v1613 = vadd.f32 %v1611, %v1612
    %v1614 = vrot.slane %v1613, 2
    %v1615 = vadd.f32 %v1613, %v1614
    %v1616 = vrot.slane %v1615, 1
    %v1617 = vadd.f32 %v1615, %v1616
    %v1618 = vmul.f32 %v1617, 0.5
    %v1619 = vld [vmem:[#allocation9 + $0xf] sm:$0x1]
    %v1620 = vpack.c.bf16 %v1618, %v1618
    %v1621 = vld [vmem:[#allocation7 + $0x3c] sm:$0xf]
    %v1622 = vld [vmem:[#allocation7 + $0x7c] sm:$0xf]
    %v1623 = vld [vmem:[#allocation7 + $0xbc] sm:$0xf]
    %v1624 = vld [vmem:[#allocation7 + $0xfc] sm:$0xf]
    %v1625 = vld [vmem:[#allocation7 + $0x13c] sm:$0xf]
    %v1626 = vld [vmem:[#allocation7 + $0x17c] sm:$0xf]
    %v1627 = vld [vmem:[#allocation7 + $0x1bc] sm:$0xf]
    %v1628 = vld [vmem:[#allocation7 + $0x1fc] sm:$0xf]
    %v1629 = vld [vmem:[#allocation7 + $0x23c] sm:$0xf]
    %v1630 = vld [vmem:[#allocation7 + $0x27c] sm:$0xf]
    %v1631 = vld [vmem:[#allocation7 + $0x2bc] sm:$0xf]
    %v1632 = vld [vmem:[#allocation7 + $0x2fc] sm:$0xf]
    %v1633 = vld [vmem:[#allocation7 + $0x33c] sm:$0xf]
    %v1634 = vld [vmem:[#allocation7 + $0x37c] sm:$0xf]
    %v1635 = vld [vmem:[#allocation7 + $0x3bc] sm:$0xf]
    %v1636 = vld [vmem:[#allocation7 + $0x3fc] sm:$0xf]
    %v1653 = vunpack.c.l.b16 %v1621
    %v1654 = vunpack.c.l.b16 %v1622
    %v1655 = vunpack.c.l.b16 %v1623
    %v1656 = vunpack.c.l.b16 %v1624
    %v1657 = vunpack.c.l.b16 %v1625
    %v1658 = vunpack.c.l.b16 %v1626
    %v1659 = vunpack.c.l.b16 %v1627
    %v1660 = vunpack.c.l.b16 %v1628
    %v1661 = vunpack.c.l.b16 %v1629
    %v1662 = vunpack.c.l.b16 %v1630
    %v1663 = vunpack.c.l.b16 %v1631
    %v1664 = vunpack.c.l.b16 %v1632
    %v1665 = vunpack.c.l.b16 %v1633
    %v1666 = vunpack.c.l.b16 %v1634
    %v1667 = vunpack.c.l.b16 %v1635
    %v1668 = vunpack.c.l.b16 %v1636
    %v1669 = vpack.c.b16 %v1654, %v1653
    %v1670 = vpack.c.b16 %v1656, %v1655
    %v1671 = vpack.c.b16 %v1658, %v1657
    %v1672 = vpack.c.b16 %v1660, %v1659
    %v1673 = vpack.c.b16 %v1662, %v1661
    %v1674 = vpack.c.b16 %v1664, %v1663
    %v1675 = vpack.c.b16 %v1666, %v1665
    %v1676 = vpack.c.b16 %v1668, %v1667
    %1685 = vmatprep.subr.bf16.mxu0 0
    %1686 = vmatpush1.bf16.msra.mxu0 %v1669
    %1687 = vmatprep.subr.bf16.mxu0 0
    %1688 = vmatpush1.bf16.msra.mxu0 %v1670
    %1689 = vmatprep.subr.bf16.mxu0 0
    %1690 = vmatpush1.bf16.msra.mxu0 %v1671
    %1691 = vmatprep.subr.bf16.mxu0 0
    %1692 = vmatpush1.bf16.msra.mxu0 %v1672
    %1693 = vmatprep.subr.bf16.mxu0 0
    %1694 = vmatpush1.bf16.msra.mxu0 %v1673
    %1695 = vmatprep.subr.bf16.mxu0 0
    %1696 = vmatpush1.bf16.msra.mxu0 %v1674
    %1697 = vmatprep.subr.bf16.mxu0 0
    %1698 = vmatpush1.bf16.msra.mxu0 %v1675
    %1699 = vmatprep.subr.bf16.mxu0 0
    %1700 = vmatpush1.bf16.msra.mxu0 %v1676
    %1701 = vmatprep.subr.bf16.mxu0 0
    %1702 = vmatpush1.bf16.msra.mxu0 0
    %1703 = vmatprep.subr.bf16.mxu0 0
    %1704 = vmatpush1.bf16.msra.mxu0 0
    %1705 = vmatprep.subr.bf16.mxu0 0
    %1706 = vmatpush1.bf16.msra.mxu0 0
    %1707 = vmatprep.subr.bf16.mxu0 0
    %1708 = vmatpush1.bf16.msra.mxu0 0
    %1709 = vmatprep.subr.bf16.mxu0 0
    %1710 = vmatpush1.bf16.msra.mxu0 0
    %1711 = vmatprep.subr.bf16.mxu0 0
    %1712 = vmatpush1.bf16.msra.mxu0 0
    %1713 = vmatprep.subr.bf16.mxu0 0
    %1714 = vmatpush1.bf16.msra.mxu0 0
    %1715 = vmatprep.subr.bf16.mxu0 0
    %1716 = vmatpush1.bf16.msra.mxu0 0
    %1717 = vmatprep.mubr.bf16.mxu0 0
    %1718 = vmatmul.mubr.bf16.gmra.mrb[0].mxu0 %v1620
    %v1719 = vpop.f32.mrb[0].mxu0
    %v1720 = vadd.f32 0.0, %v1719
    %v1721 = vpop.f32.mrb[0].mxu0
    %v1722 = vpop.f32.mrb[0].mxu0
    %v1723 = vpop.f32.mrb[0].mxu0
    %1724 = vdwg.mxu0
    %v1725 = vadd.f32 %v1619, %v1720
    %v1726 = vxor.u32 %v1725, 2147483648
    %v1727 = vmul.f32 %v1726, 1.442695
    %v1728 = vpow.pop %v1727
    %v1729 = vadd.f32 %v1728, 1.0
    %v1730 = vrcp.pop %v1729
    %v1731 = vmul.f32 1.0, %v1730
    %v1732 = vmul.f32 %v1611, %v1611
    %1733 = vadd.xlane.f32.xlu0 %v1732
    %v1734 = vpop.xlane.xlu0 %1733
    %v1735 = vrot.slane %v1734, 4
    %v1736 = vadd.f32 %v1734, %v1735
    %v1737 = vrot.slane %v1736, 2
    %v1738 = vadd.f32 %v1736, %v1737
    %v1739 = vrot.slane %v1738, 1
    %v1740 = vadd.f32 %v1738, %v1739
    %s1741 = vtos %v1740
    %v1742 = vstv %s1741
    %v1743 = vmul.f32 %v1742, -0.5
    %v1744 = vrcp.pop 16.0
    %v1745 = vmul.f32 %v1743, %v1744
    %v1746 = vlaneseq
    %v1747 = vand.u32 %v1746, 127
    %vm1748 = vcmp.eq.s32.totalorder %v1747, 32
    %v1749 = vsel %vm1748, %v1745, %v1731
    %1750 = vst [vmem:[#allocation12 + $0x40] sm:$0xff] %v1591
    %1751 = vst [vmem:[#allocation12 + $0x48] sm:$0xff] %v1593
    %v1752 = vlaneseq
    %v1753 = vshrl.u32 %v1752, 7
    %v1754 = vsub.s32 0, %v1753
    %v1755 = vrot.slane %v1749, %v1754
    %1756 = vst [vmem:[#allocation12 + $0x50] sm:$0xff] %v1755
    %v1757 = vpack.c.bf16 %v1605, %v1605
    %v1758 = vld [vmem:[#allocation7 + $0x18] sm:$0xff]
    %v1759 = vld [vmem:[#allocation7 + $0x20] sm:$0xf]
    %v1760 = vld [vmem:[#allocation7 + $0x58] sm:$0xff]
    %v1761 = vld [vmem:[#allocation7 + $0x60] sm:$0xf]
    %v1762 = vld [vmem:[#allocation7 + $0x98] sm:$0xff]
    %v1763 = vld [vmem:[#allocation7 + $0xa0] sm:$0xf]
    %v1764 = vld [vmem:[#allocation7 + $0xd8] sm:$0xff]
    %v1765 = vld [vmem:[#allocation7 + $0xe0] sm:$0xf]
    %v1766 = vld [vmem:[#allocation7 + $0x118] sm:$0xff]
    %v1767 = vld [vmem:[#allocation7 + $0x120] sm:$0xf]
    %v1768 = vld [vmem:[#allocation7 + $0x158] sm:$0xff]
    %v1769 = vld [vmem:[#allocation7 + $0x160] sm:$0xf]
    %v1770 = vld [vmem:[#allocation7 + $0x198] sm:$0xff]
    %v1771 = vld [vmem:[#allocation7 + $0x1a0] sm:$0xf]
    %v1772 = vld [vmem:[#allocation7 + $0x1d8] sm:$0xff]
    %v1773 = vld [vmem:[#allocation7 + $0x1e0] sm:$0xf]
    %v1774 = vld [vmem:[#allocation7 + $0x218] sm:$0xff]
    %v1775 = vld [vmem:[#allocation7 + $0x220] sm:$0xf]
    %v1776 = vld [vmem:[#allocation7 + $0x258] sm:$0xff]
    %v1777 = vld [vmem:[#allocation7 + $0x260] sm:$0xf]
    %v1778 = vld [vmem:[#allocation7 + $0x298] sm:$0xff]
    %v1779 = vld [vmem:[#allocation7 + $0x2a0] sm:$0xf]
    %v1780 = vld [vmem:[#allocation7 + $0x2d8] sm:$0xff]
    %v1781 = vld [vmem:[#allocation7 + $0x2e0] sm:$0xf]
    %v1782 = vld [vmem:[#allocation7 + $0x318] sm:$0xff]
    %v1783 = vld [vmem:[#allocation7 + $0x320] sm:$0xf]
    %v1784 = vld [vmem:[#allocation7 + $0x358] sm:$0xff]
    %v1785 = vld [vmem:[#allocation7 + $0x360] sm:$0xf]
    %v1786 = vld [vmem:[#allocation7 + $0x398] sm:$0xff]
    %v1787 = vld [vmem:[#allocation7 + $0x3a0] sm:$0xf]
    %v1788 = vld [vmem:[#allocation7 + $0x3d8] sm:$0xff]
    %v1789 = vld [vmem:[#allocation7 + $0x3e0] sm:$0xf]
    %v1790 = vld [vmem:[#allocation9 + $0x6] sm:$0x7]
    %v1792 = vlaneseq
    %v1793 = vshrl.u32 %v1792, 7
    %v1794 = vsub.s32 0, %v1793
    %v1795 = vrot.slane %v1790, %v1794
    %v1796 = vlaneseq
    %v1797 = vshrl.u32 %v1796, 7
    %v1798 = vsub.s32 1, %v1797
    %v1799 = vrot.slane %v1790, %v1798
    %v1800 = vlaneseq
    %v1801 = vshrl.u32 %v1800, 7
    %v1802 = vsub.s32 2, %v1801
    %v1803 = vrot.slane %v1790, %v1802
    %v1839 = vunpack.c.l.b16 %v1758
    %v1840 = vunpack.c.h.b16 %v1758
    %v1841 = vunpack.c.l.b16 %v1759
    %v1842 = vunpack.c.l.b16 %v1760
    %v1843 = vunpack.c.h.b16 %v1760
    %v1844 = vunpack.c.l.b16 %v1761
    %v1845 = vunpack.c.l.b16 %v1762
    %v1846 = vunpack.c.h.b16 %v1762
    %v1847 = vunpack.c.l.b16 %v1763
    %v1848 = vunpack.c.l.b16 %v1764
    %v1849 = vunpack.c.h.b16 %v1764
    %v1850 = vunpack.c.l.b16 %v1765
    %v1851 = vunpack.c.l.b16 %v1766
    %v1852 = vunpack.c.h.b16 %v1766
    %v1853 = vunpack.c.l.b16 %v1767
    %v1854 = vunpack.c.l.b16 %v1768
    %v1855 = vunpack.c.h.b16 %v1768
    %v1856 = vunpack.c.l.b16 %v1769
    %v1857 = vunpack.c.l.b16 %v1770
    %v1858 = vunpack.c.h.b16 %v1770
    %v1859 = vunpack.c.l.b16 %v1771
    %v1860 = vunpack.c.l.b16 %v1772
    %v1861 = vunpack.c.h.b16 %v1772
    %v1862 = vunpack.c.l.b16 %v1773
    %v1863 = vunpack.c.l.b16 %v1774
    %v1864 = vunpack.c.h.b16 %v1774
    %v1865 = vunpack.c.l.b16 %v1775
    %v1866 = vunpack.c.l.b16 %v1776
    %v1867 = vunpack.c.h.b16 %v1776
    %v1868 = vunpack.c.l.b16 %v1777
    %v1869 = vunpack.c.l.b16 %v1778
    %v1870 = vunpack.c.h.b16 %v1778
    %v1871 = vunpack.c.l.b16 %v1779
    %v1872 = vunpack.c.l.b16 %v1780
    %v1873 = vunpack.c.h.b16 %v1780
    %v1874 = vunpack.c.l.b16 %v1781
    %v1875 = vunpack.c.l.b16 %v1782
    %v1876 = vunpack.c.h.b16 %v1782
    %v1877 = vunpack.c.l.b16 %v1783
    %v1878 = vunpack.c.l.b16 %v1784
    %v1879 = vunpack.c.h.b16 %v1784
    %v1880 = vunpack.c.l.b16 %v1785
    %v1881 = vunpack.c.l.b16 %v1786
    %v1882 = vunpack.c.h.b16 %v1786
    %v1883 = vunpack.c.l.b16 %v1787
    %v1884 = vunpack.c.l.b16 %v1788
    %v1885 = vunpack.c.h.b16 %v1788
    %v1886 = vunpack.c.l.b16 %v1789
    %v1887 = vpack.c.b16 %v1842, %v1839
    %v1888 = vpack.c.b16 %v1843, %v1840
    %v1889 = vpack.c.b16 %v1844, %v1841
    %v1890 = vpack.c.b16 %v1848, %v1845
    %v1891 = vpack.c.b16 %v1849, %v1846
    %v1892 = vpack.c.b16 %v1850, %v1847
    %v1893 = vpack.c.b16 %v1854, %v1851
    %v1894 = vpack.c.b16 %v1855, %v1852
    %v1895 = vpack.c.b16 %v1856, %v1853
    %v1896 = vpack.c.b16 %v1860, %v1857
    %v1897 = vpack.c.b16 %v1861, %v1858
    %v1898 = vpack.c.b16 %v1862, %v1859
    %v1899 = vpack.c.b16 %v1866, %v1863
    %v1900 = vpack.c.b16 %v1867, %v1864
    %v1901 = vpack.c.b16 %v1868, %v1865
    %v1902 = vpack.c.b16 %v1872, %v1869
    %v1903 = vpack.c.b16 %v1873, %v1870
    %v1904 = vpack.c.b16 %v1874, %v1871
    %v1905 = vpack.c.b16 %v1878, %v1875
    %v1906 = vpack.c.b16 %v1879, %v1876
    %v1907 = vpack.c.b16 %v1880, %v1877
    %v1908 = vpack.c.b16 %v1884, %v1881
    %v1909 = vpack.c.b16 %v1885, %v1882
    %v1910 = vpack.c.b16 %v1886, %v1883
    %1935 = vmatprep.subr.bf16.mxu0 %v1888
    %1936 = vmatpush1.bf16.msra.mxu0 %v1887
    %1937 = vmatprep.subr.bf16.mxu0 %v1891
    %1938 = vmatpush1.bf16.msra.mxu0 %v1890
    %1939 = vmatprep.subr.bf16.mxu0 %v1894
    %1940 = vmatpush1.bf16.msra.mxu0 %v1893
    %1941 = vmatprep.subr.bf16.mxu0 %v1897
    %1942 = vmatpush1.bf16.msra.mxu0 %v1896
    %1943 = vmatprep.subr.bf16.mxu0 %v1900
    %1944 = vmatpush1.bf16.msra.mxu0 %v1899
    %1945 = vmatprep.subr.bf16.mxu0 %v1903
    %1946 = vmatpush1.bf16.msra.mxu0 %v1902
    %1947 = vmatprep.subr.bf16.mxu0 %v1906
    %1948 = vmatpush1.bf16.msra.mxu0 %v1905
    %1949 = vmatprep.subr.bf16.mxu0 %v1909
    %1950 = vmatpush1.bf16.msra.mxu0 %v1908
    %1951 = vmatprep.subr.bf16.mxu0 0
    %1952 = vmatpush1.bf16.msra.mxu0 0
    %1953 = vmatprep.subr.bf16.mxu0 0
    %1954 = vmatpush1.bf16.msra.mxu0 0
    %1955 = vmatprep.subr.bf16.mxu0 0
    %1956 = vmatpush1.bf16.msra.mxu0 0
    %1957 = vmatprep.subr.bf16.mxu0 0
    %1958 = vmatpush1.bf16.msra.mxu0 0
    %1959 = vmatprep.subr.bf16.mxu0 0
    %1960 = vmatpush1.bf16.msra.mxu0 0
    %1961 = vmatprep.subr.bf16.mxu0 0
    %1962 = vmatpush1.bf16.msra.mxu0 0
    %1963 = vmatprep.subr.bf16.mxu0 0
    %1964 = vmatpush1.bf16.msra.mxu0 0
    %1965 = vmatprep.subr.bf16.mxu0 0
    %1966 = vmatpush1.bf16.msra.mxu0 0
    %1967 = vmatprep.mubr.bf16.mxu0 0
    %1968 = vmatmul.mubr.bf16.gmra.mrb[0].mxu0 %v1757
    %v1969 = vpop.f32.mrb[0].mxu0
    %v1970 = vadd.f32 %v1795, %v1969
    %v1971 = vpop.f32.mrb[0].mxu0
    %v1972 = vadd.f32 %v1799, %v1971
    %v1973 = vpop.f32.mrb[0].mxu0
    %v1974 = vpop.f32.mrb[0].mxu0
    %1975 = vdwg.mxu0
    %1976 = vmatprep.subr.bf16.mxu0 0
    %1977 = vmatpush1.bf16.msra.mxu0 %v1889
    %1978 = vmatprep.subr.bf16.mxu0 0
    %1979 = vmatpush1.bf16.msra.mxu0 %v1892
    %1980 = vmatprep.subr.bf16.mxu0 0
    %1981 = vmatpush1.bf16.msra.mxu0 %v1895
    %1982 = vmatprep.subr.bf16.mxu0 0
    %1983 = vmatpush1.bf16.msra.mxu0 %v1898
    %1984 = vmatprep.subr.bf16.mxu0 0
    %1985 = vmatpush1.bf16.msra.mxu0 %v1901
    %1986 = vmatprep.subr.bf16.mxu0 0
    %1987 = vmatpush1.bf16.msra.mxu0 %v1904
    %1988 = vmatprep.subr.bf16.mxu0 0
    %1989 = vmatpush1.bf16.msra.mxu0 %v1907
    %1990 = vmatprep.subr.bf16.mxu0 0
    %1991 = vmatpush1.bf16.msra.mxu0 %v1910
    %1992 = vmatprep.subr.bf16.mxu0 0
    %1993 = vmatpush1.bf16.msra.mxu0 0
    %1994 = vmatprep.subr.bf16.mxu0 0
    %1995 = vmatpush1.bf16.msra.mxu0 0
    %1996 = vmatprep.subr.bf16.mxu0 0
    %1997 = vmatpush1.bf16.msra.mxu0 0
    %1998 = vmatprep.subr.bf16.mxu0 0
    %1999 = vmatpush1.bf16.msra.mxu0 0
    %2000 = vmatprep.subr.bf16.mxu0 0
    %2001 = vmatpush1.bf16.msra.mxu0 0
    %2002 = vmatprep.subr.bf16.mxu0 0
    %2003 = vmatpush1.bf16.msra.mxu0 0
    %2004 = vmatprep.subr.bf16.mxu0 0
    %2005 = vmatpush1.bf16.msra.mxu0 0
    %2006 = vmatprep.subr.bf16.mxu0 0
    %2007 = vmatpush1.bf16.msra.mxu0 0
    %2008 = vmatprep.mubr.bf16.mxu0 0
    %2009 = vmatmul.mubr.bf16.gmra.mrb[0].mxu0 %v1757
    %v2010 = vpop.f32.mrb[0].mxu0
    %v2011 = vadd.f32 %v1803, %v2010
    %v2012 = vpop.f32.mrb[0].mxu0
    %v2013 = vpop.f32.mrb[0].mxu0
    %v2014 = vpop.f32.mrb[0].mxu0
    %2015 = vdwg.mxu0
    %v2016 = vld [vmem:[#allocation7 + $0x24] sm:$0xff]
    %v2017 = vld [vmem:[#allocation7 + $0x2c] sm:$0xf]
    %v2018 = vld [vmem:[#allocation7 + $0x64] sm:$0xff]
    %v2019 = vld [vmem:[#allocation7 + $0x6c] sm:$0xf]
    %v2020 = vld [vmem:[#allocation7 + $0xa4] sm:$0xff]
    %v2021 = vld [vmem:[#allocation7 + $0xac] sm:$0xf]
    %v2022 = vld [vmem:[#allocation7 + $0xe4] sm:$0xff]
    %v2023 = vld [vmem:[#allocation7 + $0xec] sm:$0xf]
    %v2024 = vld [vmem:[#allocation7 + $0x124] sm:$0xff]
    %v2025 = vld [vmem:[#allocation7 + $0x12c] sm:$0xf]
    %v2026 = vld [vmem:[#allocation7 + $0x164] sm:$0xff]
    %v2027 = vld [vmem:[#allocation7 + $0x16c] sm:$0xf]
    %v2028 = vld [vmem:[#allocation7 + $0x1a4] sm:$0xff]
    %v2029 = vld [vmem:[#allocation7 + $0x1ac] sm:$0xf]
    %v2030 = vld [vmem:[#allocation7 + $0x1e4] sm:$0xff]
    %v2031 = vld [vmem:[#allocation7 + $0x1ec] sm:$0xf]
    %v2032 = vld [vmem:[#allocation7 + $0x224] sm:$0xff]
    %v2033 = vld [vmem:[#allocation7 + $0x22c] sm:$0xf]
    %v2034 = vld [vmem:[#allocation7 + $0x264] sm:$0xff]
    %v2035 = vld [vmem:[#allocation7 + $0x26c] sm:$0xf]
    %v2036 = vld [vmem:[#allocation7 + $0x2a4] sm:$0xff]
    %v2037 = vld [vmem:[#allocation7 + $0x2ac] sm:$0xf]
    %v2038 = vld [vmem:[#allocation7 + $0x2e4] sm:$0xff]
    %v2039 = vld [vmem:[#allocation7 + $0x2ec] sm:$0xf]
    %v2040 = vld [vmem:[#allocation7 + $0x324] sm:$0xff]
    %v2041 = vld [vmem:[#allocation7 + $0x32c] sm:$0xf]
    %v2042 = vld [vmem:[#allocation7 + $0x364] sm:$0xff]
    %v2043 = vld [vmem:[#allocation7 + $0x36c] sm:$0xf]
    %v2044 = vld [vmem:[#allocation7 + $0x3a4] sm:$0xff]
    %v2045 = vld [vmem:[#allocation7 + $0x3ac] sm:$0xf]
    %v2046 = vld [vmem:[#allocation7 + $0x3e4] sm:$0xff]
    %v2047 = vld [vmem:[#allocation7 + $0x3ec] sm:$0xf]
    %v2048 = vld [vmem:[#allocation9 + $0x9] sm:$0x7]
    %v2050 = vlaneseq
    %v2051 = vshrl.u32 %v2050, 7
    %v2052 = vsub.s32 0, %v2051
    %v2053 = vrot.slane %v2048, %v2052
    %v2054 = vlaneseq
    %v2055 = vshrl.u32 %v2054, 7
    %v2056 = vsub.s32 1, %v2055
    %v2057 = vrot.slane %v2048, %v2056
    %v2058 = vlaneseq
    %v2059 = vshrl.u32 %v2058, 7
    %v2060 = vsub.s32 2, %v2059
    %v2061 = vrot.slane %v2048, %v2060
    %v2097 = vunpack.c.l.b16 %v2016
    %v2098 = vunpack.c.h.b16 %v2016
    %v2099 = vunpack.c.l.b16 %v2017
    %v2100 = vunpack.c.l.b16 %v2018
    %v2101 = vunpack.c.h.b16 %v2018
    %v2102 = vunpack.c.l.b16 %v2019
    %v2103 = vunpack.c.l.b16 %v2020
    %v2104 = vunpack.c.h.b16 %v2020
    %v2105 = vunpack.c.l.b16 %v2021
    %v2106 = vunpack.c.l.b16 %v2022
    %v2107 = vunpack.c.h.b16 %v2022
    %v2108 = vunpack.c.l.b16 %v2023
    %v2109 = vunpack.c.l.b16 %v2024
    %v2110 = vunpack.c.h.b16 %v2024
    %v2111 = vunpack.c.l.b16 %v2025
    %v2112 = vunpack.c.l.b16 %v2026
    %v2113 = vunpack.c.h.b16 %v2026
    %v2114 = vunpack.c.l.b16 %v2027
    %v2115 = vunpack.c.l.b16 %v2028
    %v2116 = vunpack.c.h.b16 %v2028
    %v2117 = vunpack.c.l.b16 %v2029
    %v2118 = vunpack.c.l.b16 %v2030
    %v2119 = vunpack.c.h.b16 %v2030
    %v2120 = vunpack.c.l.b16 %v2031
    %v2121 = vunpack.c.l.b16 %v2032
    %v2122 = vunpack.c.h.b16 %v2032
    %v2123 = vunpack.c.l.b16 %v2033
    %v2124 = vunpack.c.l.b16 %v2034
    %v2125 = vunpack.c.h.b16 %v2034
    %v2126 = vunpack.c.l.b16 %v2035
    %v2127 = vunpack.c.l.b16 %v2036
    %v2128 = vunpack.c.h.b16 %v2036
    %v2129 = vunpack.c.l.b16 %v2037
    %v2130 = vunpack.c.l.b16 %v2038
    %v2131 = vunpack.c.h.b16 %v2038
    %v2132 = vunpack.c.l.b16 %v2039
    %v2133 = vunpack.c.l.b16 %v2040
    %v2134 = vunpack.c.h.b16 %v2040
    %v2135 = vunpack.c.l.b16 %v2041
    %v2136 = vunpack.c.l.b16 %v2042
    %v2137 = vunpack.c.h.b16 %v2042
    %v2138 = vunpack.c.l.b16 %v2043
    %v2139 = vunpack.c.l.b16 %v2044
    %v2140 = vunpack.c.h.b16 %v2044
    %v2141 = vunpack.c.l.b16 %v2045
    %v2142 = vunpack.c.l.b16 %v2046
    %v2143 = vunpack.c.h.b16 %v2046
    %v2144 = vunpack.c.l.b16 %v2047
    %v2145 = vpack.c.b16 %v2100, %v2097
    %v2146 = vpack.c.b16 %v2101, %v2098
    %v2147 = vpack.c.b16 %v2102, %v2099
    %v2148 = vpack.c.b16 %v2106, %v2103
    %v2149 = vpack.c.b16 %v2107, %v2104
    %v2150 = vpack.c.b16 %v2108, %v2105
    %v2151 = vpack.c.b16 %v2112, %v2109
    %v2152 = vpack.c.b16 %v2113, %v2110
    %v2153 = vpack.c.b16 %v2114, %v2111
    %v2154 = vpack.c.b16 %v2118, %v2115
    %v2155 = vpack.c.b16 %v2119, %v2116
    %v2156 = vpack.c.b16 %v2120, %v2117
    %v2157 = vpack.c.b16 %v2124, %v2121
    %v2158 = vpack.c.b16 %v2125, %v2122
    %v2159 = vpack.c.b16 %v2126, %v2123
    %v2160 = vpack.c.b16 %v2130, %v2127
    %v2161 = vpack.c.b16 %v2131, %v2128
    %v2162 = vpack.c.b16 %v2132, %v2129
    %v2163 = vpack.c.b16 %v2136, %v2133
    %v2164 = vpack.c.b16 %v2137, %v2134
    %v2165 = vpack.c.b16 %v2138, %v2135
    %v2166 = vpack.c.b16 %v2142, %v2139
    %v2167 = vpack.c.b16 %v2143, %v2140
    %v2168 = vpack.c.b16 %v2144, %v2141
    %2193 = vmatprep.subr.bf16.mxu0 %v2146
    %2194 = vmatpush1.bf16.msra.mxu0 %v2145
    %2195 = vmatprep.subr.bf16.mxu0 %v2149
    %2196 = vmatpush1.bf16.msra.mxu0 %v2148
    %2197 = vmatprep.subr.bf16.mxu0 %v2152
    %2198 = vmatpush1.bf16.msra.mxu0 %v2151
    %2199 = vmatprep.subr.bf16.mxu0 %v2155
    %2200 = vmatpush1.bf16.msra.mxu0 %v2154
    %2201 = vmatprep.subr.bf16.mxu0 %v2158
    %2202 = vmatpush1.bf16.msra.mxu0 %v2157
    %2203 = vmatprep.subr.bf16.mxu0 %v2161
    %2204 = vmatpush1.bf16.msra.mxu0 %v2160
    %2205 = vmatprep.subr.bf16.mxu0 %v2164
    %2206 = vmatpush1.bf16.msra.mxu0 %v2163
    %2207 = vmatprep.subr.bf16.mxu0 %v2167
    %2208 = vmatpush1.bf16.msra.mxu0 %v2166
    %2209 = vmatprep.subr.bf16.mxu0 0
    %2210 = vmatpush1.bf16.msra.mxu0 0
    %2211 = vmatprep.subr.bf16.mxu0 0
    %2212 = vmatpush1.bf16.msra.mxu0 0
    %2213 = vmatprep.subr.bf16.mxu0 0
    %2214 = vmatpush1.bf16.msra.mxu0 0
    %2215 = vmatprep.subr.bf16.mxu0 0
    %2216 = vmatpush1.bf16.msra.mxu0 0
    %2217 = vmatprep.subr.bf16.mxu0 0
    %2218 = vmatpush1.bf16.msra.mxu0 0
    %2219 = vmatprep.subr.bf16.mxu0 0
    %2220 = vmatpush1.bf16.msra.mxu0 0
    %2221 = vmatprep.subr.bf16.mxu0 0
    %2222 = vmatpush1.bf16.msra.mxu0 0
    %2223 = vmatprep.subr.bf16.mxu0 0
    %2224 = vmatpush1.bf16.msra.mxu0 0
    %2225 = vmatprep.mubr.bf16.mxu0 0
    %2226 = vmatmul.mubr.bf16.gmra.mrb[0].mxu0 0
    %v2227 = vpop.f32.mrb[0].mxu0
    %v2228 = vadd.f32 %v2053, %v2227
    %v2229 = vpop.f32.mrb[0].mxu0
    %v2230 = vadd.f32 %v2057, %v2229
    %v2231 = vpop.f32.mrb[0].mxu0
    %v2232 = vpop.f32.mrb[0].mxu0
    %2233 = vdwg.mxu0
    %2234 = vmatprep.subr.bf16.mxu0 0
    %2235 = vmatpush1.bf16.msra.mxu0 %v2147
    %2236 = vmatprep.subr.bf16.mxu0 0
    %2237 = vmatpush1.bf16.msra.mxu0 %v2150
    %2238 = vmatprep.subr.bf16.mxu0 0
    %2239 = vmatpush1.bf16.msra.mxu0 %v2153
    %2240 = vmatprep.subr.bf16.mxu0 0
    %2241 = vmatpush1.bf16.msra.mxu0 %v2156
    %2242 = vmatprep.subr.bf16.mxu0 0
    %2243 = vmatpush1.bf16.msra.mxu0 %v2159
    %2244 = vmatprep.subr.bf16.mxu0 0
    %2245 = vmatpush1.bf16.msra.mxu0 %v2162
    %2246 = vmatprep.subr.bf16.mxu0 0
    %2247 = vmatpush1.bf16.msra.mxu0 %v2165
    %2248 = vmatprep.subr.bf16.mxu0 0
    %2249 = vmatpush1.bf16.msra.mxu0 %v2168
    %2250 = vmatprep.subr.bf16.mxu0 0
    %2251 = vmatpush1.bf16.msra.mxu0 0
    %2252 = vmatprep.subr.bf16.mxu0 0
    %2253 = vmatpush1.bf16.msra.mxu0 0
    %2254 = vmatprep.subr.bf16.mxu0 0
    %2255 = vmatpush1.bf16.msra.mxu0 0
    %2256 = vmatprep.subr.bf16.mxu0 0
    %2257 = vmatpush1.bf16.msra.mxu0 0
    %2258 = vmatprep.subr.bf16.mxu0 0
    %2259 = vmatpush1.bf16.msra.mxu0 0
    %2260 = vmatprep.subr.bf16.mxu0 0
    %2261 = vmatpush1.bf16.msra.mxu0 0
    %2262 = vmatprep.subr.bf16.mxu0 0
    %2263 = vmatpush1.bf16.msra.mxu0 0
    %2264 = vmatprep.subr.bf16.mxu0 0
    %2265 = vmatpush1.bf16.msra.mxu0 0
    %2266 = vmatprep.mubr.bf16.mxu0 0
    %2267 = vmatmul.mubr.bf16.gmra.mrb[0].mxu0 0
    %v2268 = vpop.f32.mrb[0].mxu0
    %v2269 = vadd.f32 %v2061, %v2268
    %v2270 = vpop.f32.mrb[0].mxu0
    %v2271 = vpop.f32.mrb[0].mxu0
    %v2272 = vpop.f32.mrb[0].mxu0
    %2273 = vdwg.mxu0
    %v2274 = vadd.f32 %v1970, %v2228
    %v2275 = vxor.u32 %v2274, 2147483648
    %v2276 = vmul.f32 %v2275, 1.442695
    %v2277 = vpow.pop %v2276
    %v2278 = vadd.f32 %v2277, 1.0
    %v2279 = vrcp.pop %v2278
    %v2280 = vmul.f32 1.0, %v2279
    %v2281 = vadd.f32 %v1972, %v2230
    %v2282 = vxor.u32 %v2281, 2147483648
    %v2283 = vmul.f32 %v2282, 1.442695
    %v2284 = vpow.pop %v2283
    %v2285 = vadd.f32 %v2284, 1.0
    %v2286 = vrcp.pop %v2285
    %v2287 = vmul.f32 1.0, %v2286
    %v2288 = vmul.f32 %v2280, %v2269
    %v2289 = vadd.f32 %v2011, %v2288
    %v2290 = vtanh.pop %v2289
    %v2291 = vsub.f32 1.0, %v2287
    %v2292 = vmul.f32 %v2291, %v2290
    %v2293 = vmul.f32 %v2287, 0.0
    %v2294 = vadd.f32 %v2292, %v2293
    %2295 = vst [vmem:[#allocation3] sm:$0xff] %v2294
    %v2296 = vpack.c.bf16 %v2294, %v2294
    %2297 = vmatprep.subr.bf16.mxu0 %v2146
    %2298 = vmatpush1.bf16.msra.mxu0 %v2145
    %2299 = vmatprep.subr.bf16.mxu0 %v2149
    %2300 = vmatpush1.bf16.msra.mxu0 %v2148
    %2301 = vmatprep.subr.bf16.mxu0 %v2152
    %2302 = vmatpush1.bf16.msra.mxu0 %v2151
    %2303 = vmatprep.subr.bf16.mxu0 %v2155
    %2304 = vmatpush1.bf16.msra.mxu0 %v2154
    %2305 = vmatprep.subr.bf16.mxu0 %v2158
    %2306 = vmatpush1.bf16.msra.mxu0 %v2157
    %2307 = vmatprep.subr.bf16.mxu0 %v2161
    %2308 = vmatpush1.bf16.msra.mxu0 %v2160
    %2309 = vmatprep.subr.bf16.mxu0 %v2164
    %2310 = vmatpush1.bf16.msra.mxu0 %v2163
    %2311 = vmatprep.subr.bf16.mxu0 %v2167
    %2312 = vmatpush1.bf16.msra.mxu0 %v2166
    %2313 = vmatprep.subr.bf16.mxu0 0
    %2314 = vmatpush1.bf16.msra.mxu0 0
    %2315 = vmatprep.subr.bf16.mxu0 0
    %2316 = vmatpush1.bf16.msra.mxu0 0
    %2317 = vmatprep.subr.bf16.mxu0 0
    %2318 = vmatpush1.bf16.msra.mxu0 0
    %2319 = vmatprep.subr.bf16.mxu0 0
    %2320 = vmatpush1.bf16.msra.mxu0 0
    %2321 = vmatprep.subr.bf16.mxu0 0
    %2322 = vmatpush1.bf16.msra.mxu0 0
    %2323 = vmatprep.subr.bf16.mxu0 0
    %2324 = vmatpush1.bf16.msra.mxu0 0
    %2325 = vmatprep.subr.bf16.mxu0 0
    %2326 = vmatpush1.bf16.msra.mxu0 0
    %2327 = vmatprep.subr.bf16.mxu0 0
    %2328 = vmatpush1.bf16.msra.mxu0 0
    %2329 = vmatprep.mubr.bf16.mxu0 0
    %2330 = vmatmul.mubr.bf16.gmra.mrb[0].mxu0 %v2296
    %v2331 = vpop.f32.mrb[0].mxu0
    %v2332 = vadd.f32 %v2053, %v2331
    %v2333 = vpop.f32.mrb[0].mxu0
    %v2334 = vadd.f32 %v2057, %v2333
    %v2335 = vpop.f32.mrb[0].mxu0
    %v2336 = vpop.f32.mrb[0].mxu0
    %2337 = vdwg.mxu0
    %2338 = vmatprep.subr.bf16.mxu0 0
    %2339 = vmatpush1.bf16.msra.mxu0 %v2147
    %2340 = vmatprep.subr.bf16.mxu0 0
    %2341 = vmatpush1.bf16.msra.mxu0 %v2150
    %2342 = vmatprep.subr.bf16.mxu0 0
    %2343 = vmatpush1.bf16.msra.mxu0 %v2153
    %2344 = vmatprep.subr.bf16.mxu0 0
    %2345 = vmatpush1.bf16.msra.mxu0 %v2156
    %2346 = vmatprep.subr.bf16.mxu0 0
    %2347 = vmatpush1.bf16.msra.mxu0 %v2159
    %2348 = vmatprep.subr.bf16.mxu0 0
    %2349 = vmatpush1.bf16.msra.mxu0 %v2162
    %2350 = vmatprep.subr.bf16.mxu0 0
    %2351 = vmatpush1.bf16.msra.mxu0 %v2165
    %2352 = vmatprep.subr.bf16.mxu0 0
    %2353 = vmatpush1.bf16.msra.mxu0 %v2168
    %2354 = vmatprep.subr.bf16.mxu0 0
    %2355 = vmatpush1.bf16.msra.mxu0 0
    %2356 = vmatprep.subr.bf16.mxu0 0
    %2357 = vmatpush1.bf16.msra.mxu0 0
    %2358 = vmatprep.subr.bf16.mxu0 0
    %2359 = vmatpush1.bf16.msra.mxu0 0
    %2360 = vmatprep.subr.bf16.mxu0 0
    %2361 = vmatpush1.bf16.msra.mxu0 0
    %2362 = vmatprep.subr.bf16.mxu0 0
    %2363 = vmatpush1.bf16.msra.mxu0 0
    %2364 = vmatprep.subr.bf16.mxu0 0
    %2365 = vmatpush1.bf16.msra.mxu0 0
    %2366 = vmatprep.subr.bf16.mxu0 0
    %2367 = vmatpush1.bf16.msra.mxu0 0
    %2368 = vmatprep.subr.bf16.mxu0 0
    %2369 = vmatpush1.bf16.msra.mxu0 0
    %2370 = vmatprep.mubr.bf16.mxu0 0
    %2371 = vmatmul.mubr.bf16.gmra.mrb[0].mxu0 %v2296
    %v2372 = vpop.f32.mrb[0].mxu0
    %v2373 = vadd.f32 %v2061, %v2372
    %v2374 = vpop.f32.mrb[0].mxu0
    %v2375 = vpop.f32.mrb[0].mxu0
    %v2376 = vpop.f32.mrb[0].mxu0
    %2377 = vdwg.mxu0
    %v2378 = vadd.f32 %v1970, %v2332
    %v2379 = vxor.u32 %v2378, 2147483648
    %v2380 = vmul.f32 %v2379, 1.442695
    %v2381 = vpow.pop %v2380
    %v2382 = vadd.f32 %v2381, 1.0
    %v2383 = vrcp.pop %v2382
    %v2384 = vmul.f32 1.0, %v2383
    %v2385 = vadd.f32 %v1972, %v2334
    %v2386 = vxor.u32 %v2385, 2147483648
    %v2387 = vmul.f32 %v2386, 1.442695
    %v2388 = vpow.pop %v2387
    %v2389 = vadd.f32 %v2388, 1.0
    %v2390 = vrcp.pop %v2389
    %v2391 = vmul.f32 1.0, %v2390
    %v2392 = vmul.f32 %v2384, %v2373
    %v2393 = vadd.f32 %v2011, %v2392
    %v2394 = vtanh.pop %v2393
    %v2395 = vsub.f32 1.0, %v2391
    %v2396 = vmul.f32 %v2395, %v2394
    %v2397 = vmul.f32 %v2391, %v2294
    %v2398 = vadd.f32 %v2396, %v2397
    %2399 = vst [vmem:[#allocation3 + $0x8] sm:$0xff] %v2398
    %v2400 = vpack.c.bf16 %v2398, %v2398
    %2401 = vmatprep.subr.bf16.mxu0 %v2146
    %2402 = vmatpush1.bf16.msra.mxu0 %v2145
    %2403 = vmatprep.subr.bf16.mxu0 %v2149
    %2404 = vmatpush1.bf16.msra.mxu0 %v2148
    %2405 = vmatprep.subr.bf16.mxu0 %v2152
    %2406 = vmatpush1.bf16.msra.mxu0 %v2151
    %2407 = vmatprep.subr.bf16.mxu0 %v2155
    %2408 = vmatpush1.bf16.msra.mxu0 %v2154
    %2409 = vmatprep.subr.bf16.mxu0 %v2158
    %2410 = vmatpush1.bf16.msra.mxu0 %v2157
    %2411 = vmatprep.subr.bf16.mxu0 %v2161
    %2412 = vmatpush1.bf16.msra.mxu0 %v2160
    %2413 = vmatprep.subr.bf16.mxu0 %v2164
    %2414 = vmatpush1.bf16.msra.mxu0 %v2163
    %2415 = vmatprep.subr.bf16.mxu0 %v2167
    %2416 = vmatpush1.bf16.msra.mxu0 %v2166
    %2417 = vmatprep.subr.bf16.mxu0 0
    %2418 = vmatpush1.bf16.msra.mxu0 0
    %2419 = vmatprep.subr.bf16.mxu0 0
    %2420 = vmatpush1.bf16.msra.mxu0 0
    %2421 = vmatprep.subr.bf16.mxu0 0
    %2422 = vmatpush1.bf16.msra.mxu0 0
    %2423 = vmatprep.subr.bf16.mxu0 0
    %2424 = vmatpush1.bf16.msra.mxu0 0
    %2425 = vmatprep.subr.bf16.mxu0 0
    %2426 = vmatpush1.bf16.msra.mxu0 0
    %2427 = vmatprep.subr.bf16.mxu0 0
    %2428 = vmatpush1.bf16.msra.mxu0 0
    %2429 = vmatprep.subr.bf16.mxu0 0
    %2430 = vmatpush1.bf16.msra.mxu0 0
    %2431 = vmatprep.subr.bf16.mxu0 0
    %2432 = vmatpush1.bf16.msra.mxu0 0
    %2433 = vmatprep.mubr.bf16.mxu0 0
    %2434 = vmatmul.mubr.bf16.gmra.mrb[0].mxu0 %v2400
    %v2435 = vpop.f32.mrb[0].mxu0
    %v2436 = vadd.f32 %v2053, %v2435
    %v2437 = vpop.f32.mrb[0].mxu0
    %v2438 = vadd.f32 %v2057, %v2437
    %v2439 = vpop.f32.mrb[0].mxu0
    %v2440 = vpop.f32.mrb[0].mxu0
    %2441 = vdwg.mxu0
    %2442 = vmatprep.subr.bf16.mxu0 0
    %2443 = vmatpush1.bf16.msra.mxu0 %v2147
    %2444 = vmatprep.subr.bf16.mxu0 0
    %2445 = vmatpush1.bf16.msra.mxu0 %v2150
    %2446 = vmatprep.subr.bf16.mxu0 0
    %2447 = vmatpush1.bf16.msra.mxu0 %v2153
    %2448 = vmatprep.subr.bf16.mxu0 0
    %2449 = vmatpush1.bf16.msra.mxu0 %v2156
    %2450 = vmatprep.subr.bf16.mxu0 0
    %2451 = vmatpush1.bf16.msra.mxu0 %v2159
    %2452 = vmatprep.subr.bf16.mxu0 0
    %2453 = vmatpush1.bf16.msra.mxu0 %v2162
    %2454 = vmatprep.subr.bf16.mxu0 0
    %2455 = vmatpush1.bf16.msra.mxu0 %v2165
    %2456 = vmatprep.subr.bf16.mxu0 0
    %2457 = vmatpush1.bf16.msra.mxu0 %v2168
    %2458 = vmatprep.subr.bf16.mxu0 0
    %2459 = vmatpush1.bf16.msra.mxu0 0
    %2460 = vmatprep.subr.bf16.mxu0 0
    %2461 = vmatpush1.bf16.msra.mxu0 0
    %2462 = vmatprep.subr.bf16.mxu0 0
    %2463 = vmatpush1.bf16.msra.mxu0 0
    %2464 = vmatprep.subr.bf16.mxu0 0
    %2465 = vmatpush1.bf16.msra.mxu0 0
    %2466 = vmatprep.subr.bf16.mxu0 0
    %2467 = vmatpush1.bf16.msra.mxu0 0
    %2468 = vmatprep.subr.bf16.mxu0 0
    %2469 = vmatpush1.bf16.msra.mxu0 0
    %2470 = vmatprep.subr.bf16.mxu0 0
    %2471 = vmatpush1.bf16.msra.mxu0 0
    %2472 = vmatprep.subr.bf16.mxu0 0
    %2473 = vmatpush1.bf16.msra.mxu0 0
    %2474 = vmatprep.mubr.bf16.mxu0 0
    %2475 = vmatmul.mubr.bf16.gmra.mrb[0].mxu0 %v2400
    %v2476 = vpop.f32.mrb[0].mxu0
    %v2477 = vadd.f32 %v2061, %v2476
    %v2478 = vpop.f32.mrb[0].mxu0
    %v2479 = vpop.f32.mrb[0].mxu0
    %v2480 = vpop.f32.mrb[0].mxu0
    %2481 = vdwg.mxu0
    %v2482 = vadd.f32 %v1970, %v2436
    %v2483 = vxor.u32 %v2482, 2147483648
    %v2484 = vmul.f32 %v2483, 1.442695
    %v2485 = vpow.pop %v2484
    %v2486 = vadd.f32 %v2485, 1.0
    %v2487 = vrcp.pop %v2486
    %v2488 = vmul.f32 1.0, %v2487
    %v2489 = vadd.f32 %v1972, %v2438
    %v2490 = vxor.u32 %v2489, 2147483648
    %v2491 = vmul.f32 %v2490, 1.442695
    %v2492 = vpow.pop %v2491
    %v2493 = vadd.f32 %v2492, 1.0
    %v2494 = vrcp.pop %v2493
    %v2495 = vmul.f32 1.0, %v2494
    %v2496 = vmul.f32 %v2488, %v2477
    %v2497 = vadd.f32 %v2011, %v2496
    %v2498 = vtanh.pop %v2497
    %v2499 = vsub.f32 1.0, %v2495
    %v2500 = vmul.f32 %v2499, %v2498
    %v2501 = vmul.f32 %v2495, %v2398
    %v2502 = vadd.f32 %v2500, %v2501
    %2503 = vst [vmem:[#allocation3 + $0x10] sm:$0xff] %v2502
    %v2504 = vpack.c.bf16 %v2502, %v2502
    %2505 = vmatprep.subr.bf16.mxu0 %v2146
    %2506 = vmatpush1.bf16.msra.mxu0 %v2145
    %2507 = vmatprep.subr.bf16.mxu0 %v2149
    %2508 = vmatpush1.bf16.msra.mxu0 %v2148
    %2509 = vmatprep.subr.bf16.mxu0 %v2152
    %2510 = vmatpush1.bf16.msra.mxu0 %v2151
    %2511 = vmatprep.subr.bf16.mxu0 %v2155
    %2512 = vmatpush1.bf16.msra.mxu0 %v2154
    %2513 = vmatprep.subr.bf16.mxu0 %v2158
    %2514 = vmatpush1.bf16.msra.mxu0 %v2157
    %2515 = vmatprep.subr.bf16.mxu0 %v2161
    %2516 = vmatpush1.bf16.msra.mxu0 %v2160
    %2517 = vmatprep.subr.bf16.mxu0 %v2164
    %2518 = vmatpush1.bf16.msra.mxu0 %v2163
    %2519 = vmatprep.subr.bf16.mxu0 %v2167
    %2520 = vmatpush1.bf16.msra.mxu0 %v2166
    %2521 = vmatprep.subr.bf16.mxu0 0
    %2522 = vmatpush1.bf16.msra.mxu0 0
    %2523 = vmatprep.subr.bf16.mxu0 0
    %2524 = vmatpush1.bf16.msra.mxu0 0
    %2525 = vmatprep.subr.bf16.mxu0 0
    %2526 = vmatpush1.bf16.msra.mxu0 0
    %2527 = vmatprep.subr.bf16.mxu0 0
    %2528 = vmatpush1.bf16.msra.mxu0 0
    %2529 = vmatprep.subr.bf16.mxu0 0
    %2530 = vmatpush1.bf16.msra.mxu0 0
    %2531 = vmatprep.subr.bf16.mxu0 0
    %2532 = vmatpush1.bf16.msra.mxu0 0
    %2533 = vmatprep.subr.bf16.mxu0 0
    %2534 = vmatpush1.bf16.msra.mxu0 0
    %2535 = vmatprep.subr.bf16.mxu0 0
    %2536 = vmatpush1.bf16.msra.mxu0 0
    %2537 = vmatprep.mubr.bf16.mxu0 0
    %2538 = vmatmul.mubr.bf16.gmra.mrb[0].mxu0 %v2504
    %v2539 = vpop.f32.mrb[0].mxu0
    %v2540 = vadd.f32 %v2053, %v2539
    %v2541 = vpop.f32.mrb[0].mxu0
    %v2542 = vadd.f32 %v2057, %v2541
    %v2543 = vpop.f32.mrb[0].mxu0
    %v2544 = vpop.f32.mrb[0].mxu0
    %2545 = vdwg.mxu0
    %2546 = vmatprep.subr.bf16.mxu0 0
    %2547 = vmatpush1.bf16.msra.mxu0 %v2147
    %2548 = vmatprep.subr.bf16.mxu0 0
    %2549 = vmatpush1.bf16.msra.mxu0 %v2150
    %2550 = vmatprep.subr.bf16.mxu0 0
    %2551 = vmatpush1.bf16.msra.mxu0 %v2153
    %2552 = vmatprep.subr.bf16.mxu0 0
    %2553 = vmatpush1.bf16.msra.mxu0 %v2156
    %2554 = vmatprep.subr.bf16.mxu0 0
    %2555 = vmatpush1.bf16.msra.mxu0 %v2159
    %2556 = vmatprep.subr.bf16.mxu0 0
    %2557 = vmatpush1.bf16.msra.mxu0 %v2162
    %2558 = vmatprep.subr.bf16.mxu0 0
    %2559 = vmatpush1.bf16.msra.mxu0 %v2165
    %2560 = vmatprep.subr.bf16.mxu0 0
    %2561 = vmatpush1.bf16.msra.mxu0 %v2168
    %2562 = vmatprep.subr.bf16.mxu0 0
    %2563 = vmatpush1.bf16.msra.mxu0 0
    %2564 = vmatprep.subr.bf16.mxu0 0
    %2565 = vmatpush1.bf16.msra.mxu0 0
    %2566 = vmatprep.subr.bf16.mxu0 0
    %2567 = vmatpush1.bf16.msra.mxu0 0
    %2568 = vmatprep.subr.bf16.mxu0 0
    %2569 = vmatpush1.bf16.msra.mxu0 0
    %2570 = vmatprep.subr.bf16.mxu0 0
    %2571 = vmatpush1.bf16.msra.mxu0 0
    %2572 = vmatprep.subr.bf16.mxu0 0
    %2573 = vmatpush1.bf16.msra.mxu0 0
    %2574 = vmatprep.subr.bf16.mxu0 0
    %2575 = vmatpush1.bf16.msra.mxu0 0
    %2576 = vmatprep.subr.bf16.mxu0 0
    %2577 = vmatpush1.bf16.msra.mxu0 0
    %2578 = vmatprep.mubr.bf16.mxu0 0
    %2579 = vmatmul.mubr.bf16.gmra.mrb[0].mxu0 %v2504
    %v2580 = vpop.f32.mrb[0].mxu0
    %v2581 = vadd.f32 %v2061, %v2580
    %v2582 = vpop.f32.mrb[0].mxu0
    %v2583 = vpop.f32.mrb[0].mxu0
    %v2584 = vpop.f32.mrb[0].mxu0
    %2585 = vdwg.mxu0
    %v2586 = vadd.f32 %v1970, %v2540
    %v2587 = vxor.u32 %v2586, 2147483648
    %v2588 = vmul.f32 %v2587, 1.442695
    %v2589 = vpow.pop %v2588
    %v2590 = vadd.f32 %v2589, 1.0
    %v2591 = vrcp.pop %v2590
    %v2592 = vmul.f32 1.0, %v2591
    %v2593 = vadd.f32 %v1972, %v2542
    %v2594 = vxor.u32 %v2593, 2147483648
    %v2595 = vmul.f32 %v2594, 1.442695
    %v2596 = vpow.pop %v2595
    %v2597 = vadd.f32 %v2596, 1.0
    %v2598 = vrcp.pop %v2597
    %v2599 = vmul.f32 1.0, %v2598
    %v2600 = vmul.f32 %v2592, %v2581
    %v2601 = vadd.f32 %v2011, %v2600
    %v2602 = vtanh.pop %v2601
    %v2603 = vsub.f32 1.0, %v2599
    %v2604 = vmul.f32 %v2603, %v2602
    %v2605 = vmul.f32 %v2599, %v2502
    %v2606 = vadd.f32 %v2604, %v2605
    %2607 = vst [vmem:[#allocation3 + $0x18] sm:$0xff] %v2606
    %v2608 = vpack.c.bf16 %v2606, %v2606
    %2609 = vmatprep.subr.bf16.mxu0 %v2146
    %2610 = vmatpush1.bf16.msra.mxu0 %v2145
    %2611 = vmatprep.subr.bf16.mxu0 %v2149
    %2612 = vmatpush1.bf16.msra.mxu0 %v2148
    %2613 = vmatprep.subr.bf16.mxu0 %v2152
    %2614 = vmatpush1.bf16.msra.mxu0 %v2151
    %2615 = vmatprep.subr.bf16.mxu0 %v2155
    %2616 = vmatpush1.bf16.msra.mxu0 %v2154
    %2617 = vmatprep.subr.bf16.mxu0 %v2158
    %2618 = vmatpush1.bf16.msra.mxu0 %v2157
    %2619 = vmatprep.subr.bf16.mxu0 %v2161
    %2620 = vmatpush1.bf16.msra.mxu0 %v2160
    %2621 = vmatprep.subr.bf16.mxu0 %v2164
    %2622 = vmatpush1.bf16.msra.mxu0 %v2163
    %2623 = vmatprep.subr.bf16.mxu0 %v2167
    %2624 = vmatpush1.bf16.msra.mxu0 %v2166
    %2625 = vmatprep.subr.bf16.mxu0 0
    %2626 = vmatpush1.bf16.msra.mxu0 0
    %2627 = vmatprep.subr.bf16.mxu0 0
    %2628 = vmatpush1.bf16.msra.mxu0 0
    %2629 = vmatprep.subr.bf16.mxu0 0
    %2630 = vmatpush1.bf16.msra.mxu0 0
    %2631 = vmatprep.subr.bf16.mxu0 0
    %2632 = vmatpush1.bf16.msra.mxu0 0
    %2633 = vmatprep.subr.bf16.mxu0 0
    %2634 = vmatpush1.bf16.msra.mxu0 0
    %2635 = vmatprep.subr.bf16.mxu0 0
    %2636 = vmatpush1.bf16.msra.mxu0 0
    %2637 = vmatprep.subr.bf16.mxu0 0
    %2638 = vmatpush1.bf16.msra.mxu0 0
    %2639 = vmatprep.subr.bf16.mxu0 0
    %2640 = vmatpush1.bf16.msra.mxu0 0
    %2641 = vmatprep.mubr.bf16.mxu0 0
    %2642 = vmatmul.mubr.bf16.gmra.mrb[0].mxu0 %v2608
    %v2643 = vpop.f32.mrb[0].mxu0
    %v2644 = vadd.f32 %v2053, %v2643
    %v2645 = vpop.f32.mrb[0].mxu0
    %v2646 = vadd.f32 %v2057, %v2645
    %v2647 = vpop.f32.mrb[0].mxu0
    %v2648 = vpop.f32.mrb[0].mxu0
    %2649 = vdwg.mxu0
    %2650 = vmatprep.subr.bf16.mxu0 0
    %2651 = vmatpush1.bf16.msra.mxu0 %v2147
    %2652 = vmatprep.subr.bf16.mxu0 0
    %2653 = vmatpush1.bf16.msra.mxu0 %v2150
    %2654 = vmatprep.subr.bf16.mxu0 0
    %2655 = vmatpush1.bf16.msra.mxu0 %v2153
    %2656 = vmatprep.subr.bf16.mxu0 0
    %2657 = vmatpush1.bf16.msra.mxu0 %v2156
    %2658 = vmatprep.subr.bf16.mxu0 0
    %2659 = vmatpush1.bf16.msra.mxu0 %v2159
    %2660 = vmatprep.subr.bf16.mxu0 0
    %2661 = vmatpush1.bf16.msra.mxu0 %v2162
    %2662 = vmatprep.subr.bf16.mxu0 0
    %2663 = vmatpush1.bf16.msra.mxu0 %v2165
    %2664 = vmatprep.subr.bf16.mxu0 0
    %2665 = vmatpush1.bf16.msra.mxu0 %v2168
    %2666 = vmatprep.subr.bf16.mxu0 0
    %2667 = vmatpush1.bf16.msra.mxu0 0
    %2668 = vmatprep.subr.bf16.mxu0 0
    %2669 = vmatpush1.bf16.msra.mxu0 0
    %2670 = vmatprep.subr.bf16.mxu0 0
    %2671 = vmatpush1.bf16.msra.mxu0 0
    %2672 = vmatprep.subr.bf16.mxu0 0
    %2673 = vmatpush1.bf16.msra.mxu0 0
    %2674 = vmatprep.subr.bf16.mxu0 0
    %2675 = vmatpush1.bf16.msra.mxu0 0
    %2676 = vmatprep.subr.bf16.mxu0 0
    %2677 = vmatpush1.bf16.msra.mxu0 0
    %2678 = vmatprep.subr.bf16.mxu0 0
    %2679 = vmatpush1.bf16.msra.mxu0 0
    %2680 = vmatprep.subr.bf16.mxu0 0
    %2681 = vmatpush1.bf16.msra.mxu0 0
    %2682 = vmatprep.mubr.bf16.mxu0 0
    %2683 = vmatmul.mubr.bf16.gmra.mrb[0].mxu0 %v2608
    %v2684 = vpop.f32.mrb[0].mxu0
    %v2685 = vadd.f32 %v2061, %v2684
    %v2686 = vpop.f32.mrb[0].mxu0
    %v2687 = vpop.f32.mrb[0].mxu0
    %v2688 = vpop.f32.mrb[0].mxu0
    %2689 = vdwg.mxu0
    %v2690 = vadd.f32 %v1970, %v2644
    %v2691 = vxor.u32 %v2690, 2147483648
    %v2692 = vmul.f32 %v2691, 1.442695
    %v2693 = vpow.pop %v2692
    %v2694 = vadd.f32 %v2693, 1.0
    %v2695 = vrcp.pop %v2694
    %v2696 = vmul.f32 1.0, %v2695
    %v2697 = vadd.f32 %v1972, %v2646
    %v2698 = vxor.u32 %v2697, 2147483648
    %v2699 = vmul.f32 %v2698, 1.442695
    %v2700 = vpow.pop %v2699
    %v2701 = vadd.f32 %v2700, 1.0
    %v2702 = vrcp.pop %v2701
    %v2703 = vmul.f32 1.0, %v2702
    %v2704 = vmul.f32 %v2696, %v2685
    %v2705 = vadd.f32 %v2011, %v2704
    %v2706 = vtanh.pop %v2705
    %v2707 = vsub.f32 1.0, %v2703
    %v2708 = vmul.f32 %v2707, %v2706
    %v2709 = vmul.f32 %v2703, %v2606
    %v2710 = vadd.f32 %v2708, %v2709
    %2711 = vst [vmem:[#allocation3 + $0x20] sm:$0xff] %v2710
    %v2712 = vpack.c.bf16 %v2710, %v2710
    %2713 = vmatprep.subr.bf16.mxu0 %v2146
    %2714 = vmatpush1.bf16.msra.mxu0 %v2145
    %2715 = vmatprep.subr.bf16.mxu0 %v2149
    %2716 = vmatpush1.bf16.msra.mxu0 %v2148
    %2717 = vmatprep.subr.bf16.mxu0 %v2152
    %2718 = vmatpush1.bf16.msra.mxu0 %v2151
    %2719 = vmatprep.subr.bf16.mxu0 %v2155
    %2720 = vmatpush1.bf16.msra.mxu0 %v2154
    %2721 = vmatprep.subr.bf16.mxu0 %v2158
    %2722 = vmatpush1.bf16.msra.mxu0 %v2157
    %2723 = vmatprep.subr.bf16.mxu0 %v2161
    %2724 = vmatpush1.bf16.msra.mxu0 %v2160
    %2725 = vmatprep.subr.bf16.mxu0 %v2164
    %2726 = vmatpush1.bf16.msra.mxu0 %v2163
    %2727 = vmatprep.subr.bf16.mxu0 %v2167
    %2728 = vmatpush1.bf16.msra.mxu0 %v2166
    %2729 = vmatprep.subr.bf16.mxu0 0
    %2730 = vmatpush1.bf16.msra.mxu0 0
    %2731 = vmatprep.subr.bf16.mxu0 0
    %2732 = vmatpush1.bf16.msra.mxu0 0
    %2733 = vmatprep.subr.bf16.mxu0 0
    %2734 = vmatpush1.bf16.msra.mxu0 0
    %2735 = vmatprep.subr.bf16.mxu0 0
    %2736 = vmatpush1.bf16.msra.mxu0 0
    %2737 = vmatprep.subr.bf16.mxu0 0
    %2738 = vmatpush1.bf16.msra.mxu0 0
    %2739 = vmatprep.subr.bf16.mxu0 0
    %2740 = vmatpush1.bf16.msra.mxu0 0
    %2741 = vmatprep.subr.bf16.mxu0 0
    %2742 = vmatpush1.bf16.msra.mxu0 0
    %2743 = vmatprep.subr.bf16.mxu0 0
    %2744 = vmatpush1.bf16.msra.mxu0 0
    %2745 = vmatprep.mubr.bf16.mxu0 0
    %2746 = vmatmul.mubr.bf16.gmra.mrb[0].mxu0 %v2712
    %v2747 = vpop.f32.mrb[0].mxu0
    %v2748 = vadd.f32 %v2053, %v2747
    %v2749 = vpop.f32.mrb[0].mxu0
    %v2750 = vadd.f32 %v2057, %v2749
    %v2751 = vpop.f32.mrb[0].mxu0
    %v2752 = vpop.f32.mrb[0].mxu0
    %2753 = vdwg.mxu0
    %2754 = vmatprep.subr.bf16.mxu0 0
    %2755 = vmatpush1.bf16.msra.mxu0 %v2147
    %2756 = vmatprep.subr.bf16.mxu0 0
    %2757 = vmatpush1.bf16.msra.mxu0 %v2150
    %2758 = vmatprep.subr.bf16.mxu0 0
    %2759 = vmatpush1.bf16.msra.mxu0 %v2153
    %2760 = vmatprep.subr.bf16.mxu0 0
    %2761 = vmatpush1.bf16.msra.mxu0 %v2156
    %2762 = vmatprep.subr.bf16.mxu0 0
    %2763 = vmatpush1.bf16.msra.mxu0 %v2159
    %2764 = vmatprep.subr.bf16.mxu0 0
    %2765 = vmatpush1.bf16.msra.mxu0 %v2162
    %2766 = vmatprep.subr.bf16.mxu0 0
    %2767 = vmatpush1.bf16.msra.mxu0 %v2165
    %2768 = vmatprep.subr.bf16.mxu0 0
    %2769 = vmatpush1.bf16.msra.mxu0 %v2168
    %2770 = vmatprep.subr.bf16.mxu0 0
    %2771 = vmatpush1.bf16.msra.mxu0 0
    %2772 = vmatprep.subr.bf16.mxu0 0
    %2773 = vmatpush1.bf16.msra.mxu0 0
    %2774 = vmatprep.subr.bf16.mxu0 0
    %2775 = vmatpush1.bf16.msra.mxu0 0
    %2776 = vmatprep.subr.bf16.mxu0 0
    %2777 = vmatpush1.bf16.msra.mxu0 0
    %2778 = vmatprep.subr.bf16.mxu0 0
    %2779 = vmatpush1.bf16.msra.mxu0 0
    %2780 = vmatprep.subr.bf16.mxu0 0
    %2781 = vmatpush1.bf16.msra.mxu0 0
    %2782 = vmatprep.subr.bf16.mxu0 0
    %2783 = vmatpush1.bf16.msra.mxu0 0
    %2784 = vmatprep.subr.bf16.mxu0 0
    %2785 = vmatpush1.bf16.msra.mxu0 0
    %2786 = vmatprep.mubr.bf16.mxu0 0
    %2787 = vmatmul.mubr.bf16.gmra.mrb[0].mxu0 %v2712
    %v2788 = vpop.f32.mrb[0].mxu0
    %v2789 = vadd.f32 %v2061, %v2788
    %v2790 = vpop.f32.mrb[0].mxu0
    %v2791 = vpop.f32.mrb[0].mxu0
    %v2792 = vpop.f32.mrb[0].mxu0
    %2793 = vdwg.mxu0
    %v2794 = vadd.f32 %v1970, %v2748
    %v2795 = vxor.u32 %v2794, 2147483648
    %v2796 = vmul.f32 %v2795, 1.442695
    %v2797 = vpow.pop %v2796
    %v2798 = vadd.f32 %v2797, 1.0
    %v2799 = vrcp.pop %v2798
    %v2800 = vmul.f32 1.0, %v2799
    %v2801 = vadd.f32 %v1972, %v2750
    %v2802 = vxor.u32 %v2801, 2147483648
    %v2803 = vmul.f32 %v2802, 1.442695
    %v2804 = vpow.pop %v2803
    %v2805 = vadd.f32 %v2804, 1.0
    %v2806 = vrcp.pop %v2805
    %v2807 = vmul.f32 1.0, %v2806
    %v2808 = vmul.f32 %v2800, %v2789
    %v2809 = vadd.f32 %v2011, %v2808
    %v2810 = vtanh.pop %v2809
    %v2811 = vsub.f32 1.0, %v2807
    %v2812 = vmul.f32 %v2811, %v2810
    %v2813 = vmul.f32 %v2807, %v2710
    %v2814 = vadd.f32 %v2812, %v2813
    %2815 = vst [vmem:[#allocation3 + $0x28] sm:$0xff] %v2814
    %v2816 = vpack.c.bf16 %v2814, %v2814
    %2817 = vmatprep.subr.bf16.mxu0 %v2146
    %2818 = vmatpush1.bf16.msra.mxu0 %v2145
    %2819 = vmatprep.subr.bf16.mxu0 %v2149
    %2820 = vmatpush1.bf16.msra.mxu0 %v2148
    %2821 = vmatprep.subr.bf16.mxu0 %v2152
    %2822 = vmatpush1.bf16.msra.mxu0 %v2151
    %2823 = vmatprep.subr.bf16.mxu0 %v2155
    %2824 = vmatpush1.bf16.msra.mxu0 %v2154
    %2825 = vmatprep.subr.bf16.mxu0 %v2158
    %2826 = vmatpush1.bf16.msra.mxu0 %v2157
    %2827 = vmatprep.subr.bf16.mxu0 %v2161
    %2828 = vmatpush1.bf16.msra.mxu0 %v2160
    %2829 = vmatprep.subr.bf16.mxu0 %v2164
    %2830 = vmatpush1.bf16.msra.mxu0 %v2163
    %2831 = vmatprep.subr.bf16.mxu0 %v2167
    %2832 = vmatpush1.bf16.msra.mxu0 %v2166
    %2833 = vmatprep.subr.bf16.mxu0 0
    %2834 = vmatpush1.bf16.msra.mxu0 0
    %2835 = vmatprep.subr.bf16.mxu0 0
    %2836 = vmatpush1.bf16.msra.mxu0 0
    %2837 = vmatprep.subr.bf16.mxu0 0
    %2838 = vmatpush1.bf16.msra.mxu0 0
    %2839 = vmatprep.subr.bf16.mxu0 0
    %2840 = vmatpush1.bf16.msra.mxu0 0
    %2841 = vmatprep.subr.bf16.mxu0 0
    %2842 = vmatpush1.bf16.msra.mxu0 0
    %2843 = vmatprep.subr.bf16.mxu0 0
    %2844 = vmatpush1.bf16.msra.mxu0 0
    %2845 = vmatprep.subr.bf16.mxu0 0
    %2846 = vmatpush1.bf16.msra.mxu0 0
    %2847 = vmatprep.subr.bf16.mxu0 0
    %2848 = vmatpush1.bf16.msra.mxu0 0
    %2849 = vmatprep.mubr.bf16.mxu0 0
    %2850 = vmatmul.mubr.bf16.gmra.mrb[0].mxu0 %v2816
    %v2851 = vpop.f32.mrb[0].mxu0
    %v2852 = vadd.f32 %v2053, %v2851
    %v2853 = vpop.f32.mrb[0].mxu0
    %v2854 = vadd.f32 %v2057, %v2853
    %v2855 = vpop.f32.mrb[0].mxu0
    %v2856 = vpop.f32.mrb[0].mxu0
    %2857 = vdwg.mxu0
    %2858 = vmatprep.subr.bf16.mxu0 0
    %2859 = vmatpush1.bf16.msra.mxu0 %v2147
    %2860 = vmatprep.subr.bf16.mxu0 0
    %2861 = vmatpush1.bf16.msra.mxu0 %v2150
    %2862 = vmatprep.subr.bf16.mxu0 0
    %2863 = vmatpush1.bf16.msra.mxu0 %v2153
    %2864 = vmatprep.subr.bf16.mxu0 0
    %2865 = vmatpush1.bf16.msra.mxu0 %v2156
    %2866 = vmatprep.subr.bf16.mxu0 0
    %2867 = vmatpush1.bf16.msra.mxu0 %v2159
    %2868 = vmatprep.subr.bf16.mxu0 0
    %2869 = vmatpush1.bf16.msra.mxu0 %v2162
    %2870 = vmatprep.subr.bf16.mxu0 0
    %2871 = vmatpush1.bf16.msra.mxu0 %v2165
    %2872 = vmatprep.subr.bf16.mxu0 0
    %2873 = vmatpush1.bf16.msra.mxu0 %v2168
    %2874 = vmatprep.subr.bf16.mxu0 0
    %2875 = vmatpush1.bf16.msra.mxu0 0
    %2876 = vmatprep.subr.bf16.mxu0 0
    %2877 = vmatpush1.bf16.msra.mxu0 0
    %2878 = vmatprep.subr.bf16.mxu0 0
    %2879 = vmatpush1.bf16.msra.mxu0 0
    %2880 = vmatprep.subr.bf16.mxu0 0
    %2881 = vmatpush1.bf16.msra.mxu0 0
    %2882 = vmatprep.subr.bf16.mxu0 0
    %2883 = vmatpush1.bf16.msra.mxu0 0
    %2884 = vmatprep.subr.bf16.mxu0 0
    %2885 = vmatpush1.bf16.msra.mxu0 0
    %2886 = vmatprep.subr.bf16.mxu0 0
    %2887 = vmatpush1.bf16.msra.mxu0 0
    %2888 = vmatprep.subr.bf16.mxu0 0
    %2889 = vmatpush1.bf16.msra.mxu0 0
    %2890 = vmatprep.mubr.bf16.mxu0 0
    %2891 = vmatmul.mubr.bf16.gmra.mrb[0].mxu0 %v2816
    %v2892 = vpop.f32.mrb[0].mxu0
    %v2893 = vadd.f32 %v2061, %v2892
    %v2894 = vpop.f32.mrb[0].mxu0
    %v2895 = vpop.f32.mrb[0].mxu0
    %v2896 = vpop.f32.mrb[0].mxu0
    %2897 = vdwg.mxu0
    %v2898 = vadd.f32 %v1970, %v2852
    %v2899 = vxor.u32 %v2898, 2147483648
    %v2900 = vmul.f32 %v2899, 1.442695
    %v2901 = vpow.pop %v2900
    %v2902 = vadd.f32 %v2901, 1.0
    %v2903 = vrcp.pop %v2902
    %v2904 = vmul.f32 1.0, %v2903
    %v2905 = vadd.f32 %v1972, %v2854
    %v2906 = vxor.u32 %v2905, 2147483648
    %v2907 = vmul.f32 %v2906, 1.442695
    %v2908 = vpow.pop %v2907
    %v2909 = vadd.f32 %v2908, 1.0
    %v2910 = vrcp.pop %v2909
    %v2911 = vmul.f32 1.0, %v2910
    %v2912 = vmul.f32 %v2904, %v2893
    %v2913 = vadd.f32 %v2011, %v2912
    %v2914 = vtanh.pop %v2913
    %v2915 = vsub.f32 1.0, %v2911
    %v2916 = vmul.f32 %v2915, %v2914
    %v2917 = vmul.f32 %v2911, %v2814
    %v2918 = vadd.f32 %v2916, %v2917
    %2919 = vst [vmem:[#allocation3 + $0x30] sm:$0xff] %v2918
    %v2920 = vpack.c.bf16 %v2918, %v2918
    %2921 = vmatprep.subr.bf16.mxu0 %v2146
    %2922 = vmatpush1.bf16.msra.mxu0 %v2145
    %2923 = vmatprep.subr.bf16.mxu0 %v2149
    %2924 = vmatpush1.bf16.msra.mxu0 %v2148
    %2925 = vmatprep.subr.bf16.mxu0 %v2152
    %2926 = vmatpush1.bf16.msra.mxu0 %v2151
    %2927 = vmatprep.subr.bf16.mxu0 %v2155
    %2928 = vmatpush1.bf16.msra.mxu0 %v2154
    %2929 = vmatprep.subr.bf16.mxu0 %v2158
    %2930 = vmatpush1.bf16.msra.mxu0 %v2157
    %2931 = vmatprep.subr.bf16.mxu0 %v2161
    %2932 = vmatpush1.bf16.msra.mxu0 %v2160
    %2933 = vmatprep.subr.bf16.mxu0 %v2164
    %2934 = vmatpush1.bf16.msra.mxu0 %v2163
    %2935 = vmatprep.subr.bf16.mxu0 %v2167
    %2936 = vmatpush1.bf16.msra.mxu0 %v2166
    %2937 = vmatprep.subr.bf16.mxu0 0
    %2938 = vmatpush1.bf16.msra.mxu0 0
    %2939 = vmatprep.subr.bf16.mxu0 0
    %2940 = vmatpush1.bf16.msra.mxu0 0
    %2941 = vmatprep.subr.bf16.mxu0 0
    %2942 = vmatpush1.bf16.msra.mxu0 0
    %2943 = vmatprep.subr.bf16.mxu0 0
    %2944 = vmatpush1.bf16.msra.mxu0 0
    %2945 = vmatprep.subr.bf16.mxu0 0
    %2946 = vmatpush1.bf16.msra.mxu0 0
    %2947 = vmatprep.subr.bf16.mxu0 0
    %2948 = vmatpush1.bf16.msra.mxu0 0
    %2949 = vmatprep.subr.bf16.mxu0 0
    %2950 = vmatpush1.bf16.msra.mxu0 0
    %2951 = vmatprep.subr.bf16.mxu0 0
    %2952 = vmatpush1.bf16.msra.mxu0 0
    %2953 = vmatprep.mubr.bf16.mxu0 0
    %2954 = vmatmul.mubr.bf16.gmra.mrb[0].mxu0 %v2920
    %v2955 = vpop.f32.mrb[0].mxu0
    %v2956 = vadd.f32 %v2053, %v2955
    %v2957 = vpop.f32.mrb[0].mxu0
    %v2958 = vadd.f32 %v2057, %v2957
    %v2959 = vpop.f32.mrb[0].mxu0
    %v2960 = vpop.f32.mrb[0].mxu0
    %2961 = vdwg.mxu0
    %2962 = vmatprep.subr.bf16.mxu0 0
    %2963 = vmatpush1.bf16.msra.mxu0 %v2147
    %2964 = vmatprep.subr.bf16.mxu0 0
    %2965 = vmatpush1.bf16.msra.mxu0 %v2150
    %2966 = vmatprep.subr.bf16.mxu0 0
    %2967 = vmatpush1.bf16.msra.mxu0 %v2153
    %2968 = vmatprep.subr.bf16.mxu0 0
    %2969 = vmatpush1.bf16.msra.mxu0 %v2156
    %2970 = vmatprep.subr.bf16.mxu0 0
    %2971 = vmatpush1.bf16.msra.mxu0 %v2159
    %2972 = vmatprep.subr.bf16.mxu0 0
    %2973 = vmatpush1.bf16.msra.mxu0 %v2162
    %2974 = vmatprep.subr.bf16.mxu0 0
    %2975 = vmatpush1.bf16.msra.mxu0 %v2165
    %2976 = vmatprep.subr.bf16.mxu0 0
    %2977 = vmatpush1.bf16.msra.mxu0 %v2168
    %2978 = vmatprep.subr.bf16.mxu0 0
    %2979 = vmatpush1.bf16.msra.mxu0 0
    %2980 = vmatprep.subr.bf16.mxu0 0
    %2981 = vmatpush1.bf16.msra.mxu0 0
    %2982 = vmatprep.subr.bf16.mxu0 0
    %2983 = vmatpush1.bf16.msra.mxu0 0
    %2984 = vmatprep.subr.bf16.mxu0 0
    %2985 = vmatpush1.bf16.msra.mxu0 0
    %2986 = vmatprep.subr.bf16.mxu0 0
    %2987 = vmatpush1.bf16.msra.mxu0 0
    %2988 = vmatprep.subr.bf16.mxu0 0
    %2989 = vmatpush1.bf16.msra.mxu0 0
    %2990 = vmatprep.subr.bf16.mxu0 0
    %2991 = vmatpush1.bf16.msra.mxu0 0
    %2992 = vmatprep.subr.bf16.mxu0 0
    %2993 = vmatpush1.bf16.msra.mxu0 0
    %2994 = vmatprep.mubr.bf16.mxu0 0
    %2995 = vmatmul.mubr.bf16.gmra.mrb[0].mxu0 %v2920
    %v2996 = vpop.f32.mrb[0].mxu0
    %v2997 = vadd.f32 %v2061, %v2996
    %v2998 = vpop.f32.mrb[0].mxu0
    %v2999 = vpop.f32.mrb[0].mxu0
    %v3000 = vpop.f32.mrb[0].mxu0
    %3001 = vdwg.mxu0
    %v3002 = vadd.f32 %v1970, %v2956
    %v3003 = vxor.u32 %v3002, 2147483648
    %v3004 = vmul.f32 %v3003, 1.442695
    %v3005 = vpow.pop %v3004
    %v3006 = vadd.f32 %v3005, 1.0
    %v3007 = vrcp.pop %v3006
    %v3008 = vmul.f32 1.0, %v3007
    %v3009 = vadd.f32 %v1972, %v2958
    %v3010 = vxor.u32 %v3009, 2147483648
    %v3011 = vmul.f32 %v3010, 1.442695
    %v3012 = vpow.pop %v3011
    %v3013 = vadd.f32 %v3012, 1.0
    %v3014 = vrcp.pop %v3013
    %v3015 = vmul.f32 1.0, %v3014
    %v3016 = vmul.f32 %v3008, %v2997
    %v3017 = vadd.f32 %v2011, %v3016
    %v3018 = vtanh.pop %v3017
    %v3019 = vsub.f32 1.0, %v3015
    %v3020 = vmul.f32 %v3019, %v3018
    %v3021 = vmul.f32 %v3015, %v2918
    %v3022 = vadd.f32 %v3020, %v3021
    %3023 = vst [vmem:[#allocation3 + $0x38] sm:$0xff] %v3022
    %v3024 = vld [vmem:[#allocation3] sm:$0xff]
    %v3025 = vld [vmem:[#allocation3 + $0x8] sm:$0xff]
    %v3026 = vld [vmem:[#allocation3 + $0x10] sm:$0xff]
    %v3027 = vld [vmem:[#allocation3 + $0x18] sm:$0xff]
    %v3028 = vld [vmem:[#allocation3 + $0x20] sm:$0xff]
    %v3029 = vld [vmem:[#allocation3 + $0x28] sm:$0xff]
    %v3030 = vld [vmem:[#allocation3 + $0x30] sm:$0xff]
    %v3031 = vld [vmem:[#allocation3 + $0x38] sm:$0xff]
    %v3032 = vpack.c.bf16 %v3025, %v3024
    %v3033 = vpack.c.bf16 %v3027, %v3026
    %v3034 = vpack.c.bf16 %v3029, %v3028
    %v3035 = vpack.c.bf16 %v3031, %v3030
    %v3036 = vld [vmem:[#allocation7 + $0x38] sm:$0xf]
    %v3037 = vld [vmem:[#allocation7 + $0x78] sm:$0xf]
    %v3038 = vld [vmem:[#allocation7 + $0xb8] sm:$0xf]
    %v3039 = vld [vmem:[#allocation7 + $0xf8] sm:$0xf]
    %v3040 = vld [vmem:[#allocation7 + $0x138] sm:$0xf]
    %v3041 = vld [vmem:[#allocation7 + $0x178] sm:$0xf]
    %v3042 = vld [vmem:[#allocation7 + $0x1b8] sm:$0xf]
    %v3043 = vld [vmem:[#allocation7 + $0x1f8] sm:$0xf]
    %v3044 = vld [vmem:[#allocation7 + $0x238] sm:$0xf]
    %v3045 = vld [vmem:[#allocation7 + $0x278] sm:$0xf]
    %v3046 = vld [vmem:[#allocation7 + $0x2b8] sm:$0xf]
    %v3047 = vld [vmem:[#allocation7 + $0x2f8] sm:$0xf]
    %v3048 = vld [vmem:[#allocation7 + $0x338] sm:$0xf]
    %v3049 = vld [vmem:[#allocation7 + $0x378] sm:$0xf]
    %v3050 = vld [vmem:[#allocation7 + $0x3b8] sm:$0xf]
    %v3051 = vld [vmem:[#allocation7 + $0x3f8] sm:$0xf]
    %v3052 = vld [vmem:[#allocation9 + $0xe] sm:$0x1]
    %v3054 = vlaneseq
    %v3055 = vshrl.u32 %v3054, 7
    %v3056 = vsub.s32 0, %v3055
    %v3057 = vrot.slane %v3052, %v3056
    %v3075 = vunpack.c.l.b16 %v3036
    %v3076 = vunpack.c.l.b16 %v3037
    %v3077 = vunpack.c.l.b16 %v3038
    %v3078 = vunpack.c.l.b16 %v3039
    %v3079 = vunpack.c.l.b16 %v3040
    %v3080 = vunpack.c.l.b16 %v3041
    %v3081 = vunpack.c.l.b16 %v3042
    %v3082 = vunpack.c.l.b16 %v3043
    %v3083 = vunpack.c.l.b16 %v3044
    %v3084 = vunpack.c.l.b16 %v3045
    %v3085 = vunpack.c.l.b16 %v3046
    %v3086 = vunpack.c.l.b16 %v3047
    %v3087 = vunpack.c.l.b16 %v3048
    %v3088 = vunpack.c.l.b16 %v3049
    %v3089 = vunpack.c.l.b16 %v3050
    %v3090 = vunpack.c.l.b16 %v3051
    %v3091 = vpack.c.b16 %v3076, %v3075
    %v3092 = vpack.c.b16 %v3078, %v3077
    %v3093 = vpack.c.b16 %v3080, %v3079
    %v3094 = vpack.c.b16 %v3082, %v3081
    %v3095 = vpack.c.b16 %v3084, %v3083
    %v3096 = vpack.c.b16 %v3086, %v3085
    %v3097 = vpack.c.b16 %v3088, %v3087
    %v3098 = vpack.c.b16 %v3090, %v3089
    %3107 = vmatprep.subr.bf16.mxu0 0
    %3108 = vmatpush1.bf16.msra.mxu0 %v3091
    %3109 = vmatprep.subr.bf16.mxu0 0
    %3110 = vmatpush1.bf16.msra.mxu0 %v3092
    %3111 = vmatprep.subr.bf16.mxu0 0
    %3112 = vmatpush1.bf16.msra.mxu0 %v3093
    %3113 = vmatprep.subr.bf16.mxu0 0
    %3114 = vmatpush1.bf16.msra.mxu0 %v3094
    %3115 = vmatprep.subr.bf16.mxu0 0
    %3116 = vmatpush1.bf16.msra.mxu0 %v3095
    %3117 = vmatprep.subr.bf16.mxu0 0
    %3118 = vmatpush1.bf16.msra.mxu0 %v3096
    %3119 = vmatprep.subr.bf16.mxu0 0
    %3120 = vmatpush1.bf16.msra.mxu0 %v3097
    %3121 = vmatprep.subr.bf16.mxu0 0
    %3122 = vmatpush1.bf16.msra.mxu0 %v3098
    %3123 = vmatprep.subr.bf16.mxu0 0
    %3124 = vmatpush1.bf16.msra.mxu0 0
    %3125 = vmatprep.subr.bf16.mxu0 0
    %3126 = vmatpush1.bf16.msra.mxu0 0
    %3127 = vmatprep.subr.bf16.mxu0 0
    %3128 = vmatpush1.bf16.msra.mxu0 0
    %3129 = vmatprep.subr.bf16.mxu0 0
    %3130 = vmatpush1.bf16.msra.mxu0 0
    %3131 = vmatprep.subr.bf16.mxu0 0
    %3132 = vmatpush1.bf16.msra.mxu0 0
    %3133 = vmatprep.subr.bf16.mxu0 0
    %3134 = vmatpush1.bf16.msra.mxu0 0
    %3135 = vmatprep.subr.bf16.mxu0 0
    %3136 = vmatpush1.bf16.msra.mxu0 0
    %3137 = vmatprep.subr.bf16.mxu0 0
    %3138 = vmatpush1.bf16.msra.mxu0 0
    %3139 = vmatprep.mubr.bf16.mxu0 0
    %3140 = vmatmul.mubr.bf16.gmra.mrb[0].mxu0 %v3032
    %v3141 = vpop.f32.mrb[0].mxu0
    %v3142 = vadd.f32 %v3057, %v3141
    %v3143 = vpop.f32.mrb[0].mxu0
    %v3144 = vpop.f32.mrb[0].mxu0
    %v3145 = vadd.f32 %v3057, %v3144
    %v3146 = vpop.f32.mrb[0].mxu0
    %3147 = vmatprep.mubr.bf16.mxu0 0
    %3148 = vmatmul.mubr.bf16.gmra.mrb[0].mxu0 %v3033
    %v3149 = vpop.f32.mrb[0].mxu0
    %v3150 = vadd.f32 %v3057, %v3149
    %v3151 = vpop.f32.mrb[0].mxu0
    %v3152 = vpop.f32.mrb[0].mxu0
    %v3153 = vadd.f32 %v3057, %v3152
    %v3154 = vpop.f32.mrb[0].mxu0
    %3155 = vmatprep.mubr.bf16.mxu0 0
    %3156 = vmatmul.mubr.bf16.gmra.mrb[0].mxu0 %v3034
    %v3157 = vpop.f32.mrb[0].mxu0
    %v3158 = vadd.f32 %v3057, %v3157
    %v3159 = vpop.f32.mrb[0].mxu0
    %v3160 = vpop.f32.mrb[0].mxu0
    %v3161 = vadd.f32 %v3057, %v3160
    %v3162 = vpop.f32.mrb[0].mxu0
    %3163 = vmatprep.mubr.bf16.mxu0 0
    %3164 = vmatmul.mubr.bf16.gmra.mrb[0].mxu0 %v3035
    %v3165 = vpop.f32.mrb[0].mxu0
    %v3166 = vadd.f32 %v3057, %v3165
    %v3167 = vpop.f32.mrb[0].mxu0
    %v3168 = vpop.f32.mrb[0].mxu0
    %v3169 = vadd.f32 %v3057, %v3168
    %v3170 = vpop.f32.mrb[0].mxu0
    %3171 = vdwg.mxu0
    %3172 = vst [vmem:[#allocation12] sm:$0xff] %v3142
    %3173 = vst [vmem:[#allocation12 + $0x8] sm:$0xff] %v3145
    %3174 = vst [vmem:[#allocation12 + $0x10] sm:$0xff] %v3150
    %3175 = vst [vmem:[#allocation12 + $0x18] sm:$0xff] %v3153
    %3176 = vst [vmem:[#allocation12 + $0x20] sm:$0xff] %v3158
    %3177 = vst [vmem:[#allocation12 + $0x28] sm:$0xff] %v3161
    %3178 = vst [vmem:[#allocation12 + $0x30] sm:$0xff] %v3166
    %3179 = vst [vmem:[#allocation12 + $0x38] sm:$0xff] %v3169
    // Predicated region
    $region34: #{tpu_custom_call.1} parent=1 // pred_check
      _
    $region35: #{tpu_custom_call.1} parent=1 // pred_check_branch
      %3181 = sbr.rel (0) target = $region37
    $region36: #{tpu_custom_call.1} parent=1 // pred_region
      %s3183 = ssub.s32 1408, 1408
      %3184 = vsyncadd [#allocation6], %s3183
      %s3185 = sshll.u32 [#allocation12], 4
      %s3186 = int_to_ptr.vmem [resolvable:$true] %s3185
      %3191 = dma.vmem_to_hbm [thread:$0]  %s3186, 1408, %s4, [#allocation6], 128, 128, 8
    $region37: #{tpu_custom_call.1} parent=1 // pred_fallthru
      _
    // Predicated region
    $region38: #{tpu_custom_call.1} parent=1 // pred_check
      _
    $region39: #{tpu_custom_call.1} parent=1 // pred_check_branch
      %3193 = sbr.rel (0) target = $region41
    $region40: #{tpu_custom_call.1} parent=1 // pred_region
      %3194 = dma.done [#allocation6], 1408
    $region41: #{tpu_custom_call.1} parent=1 // pred_fallthru
      _
    %3195 = vsyncpa [#allocation5], 1
    %3196 = vsyncpa [#allocation8], 1
    %3197 = vsyncpa [#allocation11], 1
    %3198 = vsyncpa [#allocation6], 1

</llo_original>
